<compile_context>
chip_gen: v7x
topology: tpu7x:2x2x1
jax: 0.10.0
libtpu: 0.0.40
codegen_flags: <defaults>
</compile_context>

<pallas_src>
import functools

import jax
import jax.numpy as jnp
from jax.experimental import pallas as pl
from jax.experimental.pallas import tpu as pltpu


# ---------------------------------------------------------------------------
# Fused whole-decoder Pallas kernel
# ---------------------------------------------------------------------------
def _decoder_kernel(x_ref, w1_ref, b1_ref, w2_ref, b2_ref, u_ref,
                    r1_ref, m1_ref, cb1_ref, red1_ref, bc1_ref, g1_ref, be1_ref,
                    r2_ref, m2_ref, cb2_ref, red2_ref, bc2_ref, g2_ref, be2_ref,
                    r3_ref, m3_ref, cb3_ref,
                    o_ref, *, bn_counts, eps):
    f32 = jnp.float32

    def mm(a, b):
        return jnp.dot(a, b, preferred_element_type=f32)

    # --- decoder_lin: Linear(d, 128) + ReLU ---------------------------------
    hid = jnp.maximum(mm(x_ref[...], w1_ref[...]) + b1_ref[...], 0.0)        # (N, 128)

    # --- Linear(128, 288) + ReLU + Unflatten --------------------------------
    # w2/b2 are pre-split into the 3 spatial-row blocks (cols already permuted
    # to (w, c) order); U[h] places sample rows at row index n*3 + h.
    x2 = None
    for h in range(3):
        a_h = jnp.maximum(mm(hid, w2_ref[h]) + b2_ref[h], 0.0)               # (N, 96)
        placed = mm(u_ref[h], a_h)                                           # (N*3, 96)
        x2 = placed if x2 is None else x2 + placed                           # rows (n,h), cols (w,c)

    # --- ConvTranspose2d:  y = sum_kh R_kh @ (X @ M_kh) + bias --------------
    def conv_t(x, r_ref, m_ref, cb_ref):
        y = None
        for kh in range(3):
            part = mm(r_ref[kh], mm(x, m_ref[kh]))
            y = part if y is None else y + part
        return y + cb_ref[...]

    # --- BatchNorm2d (batch stats, biased var) + ReLU epilogue --------------
    def bn_relu(y, red_ref, bc_ref, g_ref, be_ref, count):
        inv_count = 1.0 / count
        row_sum = jnp.sum(y, axis=0, keepdims=True)                          # (1, W*C)
        ch_mean = mm(row_sum, red_ref[...]) * inv_count                      # (1, C)
        mean_full = mm(ch_mean, bc_ref[...])                                 # (1, W*C)
        cen = y - mean_full
        ch_var = mm(jnp.sum(cen * cen, axis=0, keepdims=True), red_ref[...]) * inv_count
        inv_full = mm(jax.lax.rsqrt(ch_var + eps), bc_ref[...])              # (1, W*C)
        return jnp.maximum(cen * inv_full * g_ref[...] + be_ref[...], 0.0)

    y1 = bn_relu(conv_t(x2, r1_ref, m1_ref, cb1_ref),
                 red1_ref, bc1_ref, g1_ref, be1_ref, bn_counts[0])           # (N*7, 7*16)
    y2 = bn_relu(conv_t(y1, r2_ref, m2_ref, cb2_ref),
                 red2_ref, bc2_ref, g2_ref, be2_ref, bn_counts[1])           # (N*14, 14*8)
    y3 = conv_t(y2, r3_ref, m3_ref, cb3_ref)                                 # (N*28, 28)
    o_ref[...] = jax.nn.sigmoid(y3).astype(o_ref.dtype)


# ---------------------------------------------------------------------------
# One-time parameter preparation (all layout plumbing hoisted out of the kernel)
# ---------------------------------------------------------------------------
def _sel(h_out, h_in, stride, pad, tap):
    """S[oh, h] = 1  iff  oh == stride*h - pad + tap  (conv-transpose row map)."""
    oh = jnp.arange(h_out)[:, None]
    h = jnp.arange(h_in)[None, :]
    return (oh == stride * h - pad + tap).astype(jnp.float32)


def _conv_prep(w, b, n, h_in, pad, out_pad, stride=2):
    """Build R (3, N*Hout, N*Hin), M (3, Win*Cin, Wout*Cout), bias row for one
    ConvTranspose2d so that  y = sum_kh R[kh] @ (X @ M[kh]) + bias  with the
    (N*H, W*C) channels-last matrix layout."""
    cin, cout, k, _ = w.shape
    h_out = (h_in - 1) * stride - 2 * pad + k + out_pad
    eye_n = jnp.eye(n, dtype=jnp.float32)
    r = jnp.stack([
        jnp.einsum("nm,oh->nomh", eye_n, _sel(h_out, h_in, stride, pad, kh))
           .reshape(n * h_out, n * h_in)
        for kh in range(k)])
    m = jnp.stack([
        sum(jnp.kron(_sel(h_out, h_in, stride, pad, kw).T, w[:, :, kh, kw])
            for kw in range(k))
        for kh in range(k)])
    cb = jnp.tile(b.reshape(1, cout), (1, h_out))                  # (1, Wout*Cout), (ow, co)
    return r, m, cb, h_out


def _bn_prep(gamma, beta, w_out):
    cout = gamma.shape[0]
    red = jnp.tile(jnp.eye(cout, dtype=jnp.float32), (w_out, 1))   # (Wout*Cout, Cout) reduce
    bc = red.T                                                     # (Cout, Wout*Cout) broadcast
    gf = jnp.tile(gamma.reshape(1, cout), (1, w_out))
    bf = jnp.tile(beta.reshape(1, cout), (1, w_out))
    return red, bc, gf, bf


def prepare_decoder(params, n):
    w1t = params["lin1_w"].T                                       # (D, 128)
    b1 = params["lin1_b"].reshape(1, -1)

    # lin2: permute output columns from torch's (c, h, w) flatten order to (h, w, c)
    hh, ww, cc = jnp.meshgrid(jnp.arange(3), jnp.arange(3), jnp.arange(32), indexing="ij")
    perm = (cc * 9 + hh * 3 + ww).reshape(-1)
    w2p = params["lin2_w"].T[:, perm]                              # (128, 288)
    b2p = params["lin2_b"][perm]
    w2s = jnp.stack([w2p[:, i * 96:(i + 1) * 96] for i in range(3)])            # (3, 128, 96)
    b2s = jnp.stack([b2p[i * 96:(i + 1) * 96].reshape(1, 96) for i in range(3)])  # (3, 1, 96)

    # unflatten row placement: U[h, n*3 + h, n] = 1
    rows = jnp.arange(3 * n)[:, None]
    cols = jnp.arange(n)[None, :]
    u = jnp.stack([(rows == cols * 3 + h).astype(jnp.float32) for h in range(3)])

    r1, m1, cb1, h1 = _conv_prep(params["ct1_w"], params["ct1_b"], n, 3, pad=0, out_pad=0)
    red1, bc1, g1, be1 = _bn_prep(params["bn1_g"], params["bn1_b"], h1)
    r2, m2, cb2, h2 = _conv_prep(params["ct2_w"], params["ct2_b"], n, h1, pad=1, out_pad=1)
    red2, bc2, g2, be2 = _bn_prep(params["bn2_g"], params["bn2_b"], h2)
    r3, m3, cb3, h3 = _conv_prep(params["ct3_w"], params["ct3_b"], n, h2, pad=1, out_pad=1)

    ops = (w1t, b1, w2s, b2s, u,
           r1, m1, cb1, red1, bc1, g1, be1,
           r2, m2, cb2, red2, bc2, g2, be2,
           r3, m3, cb3)
    meta = dict(n=n, h_final=h3,
                bn_counts=(float(n * h1 * h1), float(n * h2 * h2)))
    return ops, meta


def decoder_forward(ops, meta, x):
    """x: (N, encoded_space_dim) -> (N, 1, 28, 28), single fused pallas_call."""
    n, h_final = meta["n"], meta["h_final"]
    inputs = (x,) + ops
    out2d = pl.pallas_call(
        functools.partial(_decoder_kernel, bn_counts=meta["bn_counts"], eps=1e-5),
        out_shape=jax.ShapeDtypeStruct((n * h_final, h_final), jnp.float32),
        in_specs=[pl.BlockSpec(memory_space=pltpu.MemorySpace.VMEM)] * len(inputs),
        out_specs=pl.BlockSpec(memory_space=pltpu.MemorySpace.VMEM),
    )(*inputs)
    # rows are (n, oh), cols are ow (Cout == 1): reshape directly to NCHW.
    return out2d.reshape(n, 1, h_final, h_final)


# ---------------------------------------------------------------------------
# Deterministic parameter init (same shapes as the torch module)
# ---------------------------------------------------------------------------
def init_params(key, encoded_space_dim):
    ks = jax.random.split(key, 10)

    def rn(k, shape, scale=0.1):
        return scale * jax.random.normal(k, shape, jnp.float32)

    return {
        "lin1_w": rn(ks[0], (128, encoded_space_dim)),
        "lin1_b": rn(ks[1], (128,)),
        "lin2_w": rn(ks[2], (3 * 3 * 32, 128)),
        "lin2_b": rn(ks[3], (3 * 3 * 32,)),
        "ct1_w": rn(ks[4], (32, 16, 3, 3)),     # torch ConvTranspose2d: (Cin, Cout, k, k)
        "ct1_b": rn(ks[5], (16,)),
        "bn1_g": jnp.ones((16,), jnp.float32),
        "bn1_b": jnp.zeros((16,), jnp.float32),
        "ct2_w": rn(ks[6], (16, 8, 3, 3)),
        "ct2_b": rn(ks[7], (8,)),
        "bn2_g": jnp.ones((8,), jnp.float32),
        "bn2_b": jnp.zeros((8,), jnp.float32),
        "ct3_w": rn(ks[8], (8, 1, 3, 3)),
        "ct3_b": rn(ks[9], (1,)),
    }


# ---------------------------------------------------------------------------
# Pure-JAX reference (dilate + pad + im2col formulation) for correctness check
# ---------------------------------------------------------------------------
def _dilate_pad(x, stride, k, padding, output_padding):
    N, C, H, W = x.shape
    Hd, Wd = (H - 1) * stride + 1, (W - 1) * stride + 1
    xd = jnp.zeros((N, C, Hd, Wd), x.dtype).at[:, :, ::stride, ::stride].set(x)
    lo = k - 1 - padding
    hi = k - 1 - padding + output_padding
    return jnp.pad(xd, ((0, 0), (0, 0), (lo, hi), (lo, hi)))


def _im2col(x, k):
    N, C, Hp, Wp = x.shape
    Ho, Wo = Hp - k + 1, Wp - k + 1
    cols = jnp.stack(
        [x[:, :, i:i + Ho, j:j + Wo] for i in range(k) for j in range(k)], axis=2)
    cols = cols.transpose(0, 3, 4, 1, 2).reshape(N * Ho * Wo, C * k * k)
    return cols, Ho, Wo


def _ct_weight_matrix(w):
    Cin, Cout, k, _ = w.shape
    w_flip = w[:, :, ::-1, ::-1]
    return w_flip.transpose(0, 2, 3, 1).reshape(Cin * k * k, Cout)


def _ref_forward(params, x):
    def lin(x, w, b):
        return jnp.maximum(x @ w.T + b, 0.0)

    def ct(x, w, b, stride, padding, op):
        xp = _dilate_pad(x, stride, 3, padding, op)
        cols, Ho, Wo = _im2col(xp, 3)
        Cout = w.shape[1]
        y = cols @ _ct_weight_matrix(w) + b
        return y.reshape(x.shape[0], Ho, Wo, Cout).transpose(0, 3, 1, 2)

    def bn_relu(x, g, b):
        m = x.mean(axis=(0, 2, 3), keepdims=True)
        v = ((x - m) ** 2).mean(axis=(0, 2, 3), keepdims=True)
        y = (x - m) / jnp.sqrt(v + 1e-5) * g.reshape(1, -1, 1, 1) + b.reshape(1, -1, 1, 1)
        return jnp.maximum(y, 0.0)

    h = lin(x, params["lin1_w"], params["lin1_b"])
    h = lin(h, params["lin2_w"], params["lin2_b"])
    h = h.reshape(x.shape[0], 32, 3, 3)
    h = bn_relu(ct(h, params["ct1_w"], params["ct1_b"], 2, 0, 0), params["bn1_g"], params["bn1_b"])
    h = bn_relu(ct(h, params["ct2_w"], params["ct2_b"], 2, 1, 1), params["bn2_g"], params["bn2_b"])
    return jax.nn.sigmoid(ct(h, params["ct3_w"], params["ct3_b"], 2, 1, 1))


if __name__ == "__main__":
    key = jax.random.PRNGKey(0)
    encoded_space_dim = 4       # fc2_input_dim is unused by the torch Decoder
    batch = 2

    params = init_params(jax.random.fold_in(key, 1), encoded_space_dim)
    x = jax.random.normal(jax.random.fold_in(key, 2), (batch, encoded_space_dim), jnp.float32)

    ops, meta = prepare_decoder(params, batch)
    fwd = jax.jit(lambda xx: decoder_forward(ops, meta, xx))

    out = jax.block_until_ready(fwd(x))
    assert out.shape == (batch, 1, 28, 28), out.shape

    ref = _ref_forward(params, x)
    err = float(jnp.max(jnp.abs(out - ref)))
    assert jnp.allclose(out, ref, atol=1e-3, rtol=1e-3), err

    print("KERNEL_OK")
</pallas_src>

<mosaic_0001>
module attributes {stable_mosaic.version = 11 : i64} {
  func.func @_decoder_kernel(%arg0: memref<2x4xf32, #tpu.memory_space<vmem>>, %arg1: memref<4x128xf32, #tpu.memory_space<vmem>>, %arg2: memref<1x128xf32, #tpu.memory_space<vmem>>, %arg3: memref<3x128x96xf32, #tpu.memory_space<vmem>>, %arg4: memref<3x1x96xf32, #tpu.memory_space<vmem>>, %arg5: memref<3x6x2xf32, #tpu.memory_space<vmem>>, %arg6: memref<3x14x6xf32, #tpu.memory_space<vmem>>, %arg7: memref<3x96x112xf32, #tpu.memory_space<vmem>>, %arg8: memref<1x112xf32, #tpu.memory_space<vmem>>, %arg9: memref<112x16xf32, #tpu.memory_space<vmem>>, %arg10: memref<16x112xf32, #tpu.memory_space<vmem>>, %arg11: memref<1x112xf32, #tpu.memory_space<vmem>>, %arg12: memref<1x112xf32, #tpu.memory_space<vmem>>, %arg13: memref<3x28x14xf32, #tpu.memory_space<vmem>>, %arg14: memref<3x112x112xf32, #tpu.memory_space<vmem>>, %arg15: memref<1x112xf32, #tpu.memory_space<vmem>>, %arg16: memref<112x8xf32, #tpu.memory_space<vmem>>, %arg17: memref<8x112xf32, #tpu.memory_space<vmem>>, %arg18: memref<1x112xf32, #tpu.memory_space<vmem>>, %arg19: memref<1x112xf32, #tpu.memory_space<vmem>>, %arg20: memref<3x56x28xf32, #tpu.memory_space<vmem>>, %arg21: memref<3x112x28xf32, #tpu.memory_space<vmem>>, %arg22: memref<1x28xf32, #tpu.memory_space<vmem>>, %arg23: memref<56x28xf32, #tpu.memory_space<vmem>>) attributes {dimension_semantics = [], scalar_prefetch = 0 : i64, scratch_operands = 0 : i64, tpu.core_type = #tpu.core_type<tc>} {
    %c0 = arith.constant 0 : index
    %c0_0 = arith.constant 0 : index
    %0 = vector.load %arg0[%c0, %c0_0] : memref<2x4xf32, #tpu.memory_space<vmem>>, vector<2x4xf32>
    %c0_1 = arith.constant 0 : index
    %c0_2 = arith.constant 0 : index
    %1 = vector.load %arg1[%c0_1, %c0_2] : memref<4x128xf32, #tpu.memory_space<vmem>>, vector<4x128xf32>
    %cst = arith.constant dense<0.000000e+00> : vector<2x128xf32>
    %2 = tpu.matmul %0, %1, %cst {dimension_numbers = #tpu.dot_dimension_numbers<[1], [0], [0], [1], [0, 0, 1, 1], [], []>} : vector<2x4xf32>, vector<4x128xf32>, vector<2x128xf32> -> vector<2x128xf32>
    %c0_3 = arith.constant 0 : index
    %c0_4 = arith.constant 0 : index
    %3 = vector.load %arg2[%c0_3, %c0_4] : memref<1x128xf32, #tpu.memory_space<vmem>>, vector<1x128xf32>
    %4 = vector.broadcast %3 : vector<1x128xf32> to vector<2x128xf32>
    %5 = arith.addf %2, %4 : vector<2x128xf32>
    %cst_5 = arith.constant 0.000000e+00 : f32
    %6 = vector.broadcast %cst_5 : f32 to vector<2x128xf32>
    %7 = arith.maximumf %5, %6 : vector<2x128xf32>
    %c0_6 = arith.constant 0 : index
    %c0_7 = arith.constant 0 : index
    %c0_8 = arith.constant 0 : index
    %8 = vector.load %arg3[%c0_6, %c0_7, %c0_8] : memref<3x128x96xf32, #tpu.memory_space<vmem>>, vector<1x128x96xf32>
    %9 = vector.shape_cast %8 : vector<1x128x96xf32> to vector<128x96xf32>
    %cst_9 = arith.constant dense<0.000000e+00> : vector<2x96xf32>
    %10 = tpu.matmul %7, %9, %cst_9 {dimension_numbers = #tpu.dot_dimension_numbers<[1], [0], [0], [1], [0, 0, 1, 1], [], []>} : vector<2x128xf32>, vector<128x96xf32>, vector<2x96xf32> -> vector<2x96xf32>
    %c0_10 = arith.constant 0 : index
    %c0_11 = arith.constant 0 : index
    %c0_12 = arith.constant 0 : index
    %11 = vector.load %arg4[%c0_10, %c0_11, %c0_12] : memref<3x1x96xf32, #tpu.memory_space<vmem>>, vector<1x1x96xf32>
    %12 = vector.shape_cast %11 : vector<1x1x96xf32> to vector<1x96xf32>
    %13 = vector.broadcast %12 : vector<1x96xf32> to vector<2x96xf32>
    %14 = arith.addf %10, %13 : vector<2x96xf32>
    %cst_13 = arith.constant 0.000000e+00 : f32
    %15 = vector.broadcast %cst_13 : f32 to vector<2x96xf32>
    %16 = arith.maximumf %14, %15 : vector<2x96xf32>
    %c0_14 = arith.constant 0 : index
    %c0_15 = arith.constant 0 : index
    %c0_16 = arith.constant 0 : index
    %17 = vector.load %arg5[%c0_14, %c0_15, %c0_16] : memref<3x6x2xf32, #tpu.memory_space<vmem>>, vector<1x6x2xf32>
    %18 = vector.shape_cast %17 : vector<1x6x2xf32> to vector<6x2xf32>
    %cst_17 = arith.constant dense<0.000000e+00> : vector<6x96xf32>
    %19 = tpu.matmul %18, %16, %cst_17 {dimension_numbers = #tpu.dot_dimension_numbers<[1], [0], [0], [1], [0, 0, 1, 1], [], []>} : vector<6x2xf32>, vector<2x96xf32>, vector<6x96xf32> -> vector<6x96xf32>
    %c1 = arith.constant 1 : index
    %c0_18 = arith.constant 0 : index
    %c0_19 = arith.constant 0 : index
    %20 = vector.load %arg3[%c1, %c0_18, %c0_19] : memref<3x128x96xf32, #tpu.memory_space<vmem>>, vector<1x128x96xf32>
    %21 = vector.shape_cast %20 : vector<1x128x96xf32> to vector<128x96xf32>
    %cst_20 = arith.constant dense<0.000000e+00> : vector<2x96xf32>
    %22 = tpu.matmul %7, %21, %cst_20 {dimension_numbers = #tpu.dot_dimension_numbers<[1], [0], [0], [1], [0, 0, 1, 1], [], []>} : vector<2x128xf32>, vector<128x96xf32>, vector<2x96xf32> -> vector<2x96xf32>
    %c1_21 = arith.constant 1 : index
    %c0_22 = arith.constant 0 : index
    %c0_23 = arith.constant 0 : index
    %23 = vector.load %arg4[%c1_21, %c0_22, %c0_23] : memref<3x1x96xf32, #tpu.memory_space<vmem>>, vector<1x1x96xf32>
    %24 = vector.shape_cast %23 : vector<1x1x96xf32> to vector<1x96xf32>
    %25 = vector.broadcast %24 : vector<1x96xf32> to vector<2x96xf32>
    %26 = arith.addf %22, %25 : vector<2x96xf32>
    %cst_24 = arith.constant 0.000000e+00 : f32
    %27 = vector.broadcast %cst_24 : f32 to vector<2x96xf32>
    %28 = arith.maximumf %26, %27 : vector<2x96xf32>
    %c1_25 = arith.constant 1 : index
    %c0_26 = arith.constant 0 : index
    %c0_27 = arith.constant 0 : index
    %29 = vector.load %arg5[%c1_25, %c0_26, %c0_27] : memref<3x6x2xf32, #tpu.memory_space<vmem>>, vector<1x6x2xf32>
    %30 = vector.shape_cast %29 : vector<1x6x2xf32> to vector<6x2xf32>
    %cst_28 = arith.constant dense<0.000000e+00> : vector<6x96xf32>
    %31 = tpu.matmul %30, %28, %cst_28 {dimension_numbers = #tpu.dot_dimension_numbers<[1], [0], [0], [1], [0, 0, 1, 1], [], []>} : vector<6x2xf32>, vector<2x96xf32>, vector<6x96xf32> -> vector<6x96xf32>
    %32 = arith.addf %19, %31 : vector<6x96xf32>
    %c2 = arith.constant 2 : index
    %c0_29 = arith.constant 0 : index
    %c0_30 = arith.constant 0 : index
    %33 = vector.load %arg3[%c2, %c0_29, %c0_30] : memref<3x128x96xf32, #tpu.memory_space<vmem>>, vector<1x128x96xf32>
    %34 = vector.shape_cast %33 : vector<1x128x96xf32> to vector<128x96xf32>
    %cst_31 = arith.constant dense<0.000000e+00> : vector<2x96xf32>
    %35 = tpu.matmul %7, %34, %cst_31 {dimension_numbers = #tpu.dot_dimension_numbers<[1], [0], [0], [1], [0, 0, 1, 1], [], []>} : vector<2x128xf32>, vector<128x96xf32>, vector<2x96xf32> -> vector<2x96xf32>
    %c2_32 = arith.constant 2 : index
    %c0_33 = arith.constant 0 : index
    %c0_34 = arith.constant 0 : index
    %36 = vector.load %arg4[%c2_32, %c0_33, %c0_34] : memref<3x1x96xf32, #tpu.memory_space<vmem>>, vector<1x1x96xf32>
    %37 = vector.shape_cast %36 : vector<1x1x96xf32> to vector<1x96xf32>
    %38 = vector.broadcast %37 : vector<1x96xf32> to vector<2x96xf32>
    %39 = arith.addf %35, %38 : vector<2x96xf32>
    %cst_35 = arith.constant 0.000000e+00 : f32
    %40 = vector.broadcast %cst_35 : f32 to vector<2x96xf32>
    %41 = arith.maximumf %39, %40 : vector<2x96xf32>
    %c2_36 = arith.constant 2 : index
    %c0_37 = arith.constant 0 : index
    %c0_38 = arith.constant 0 : index
    %42 = vector.load %arg5[%c2_36, %c0_37, %c0_38] : memref<3x6x2xf32, #tpu.memory_space<vmem>>, vector<1x6x2xf32>
    %43 = vector.shape_cast %42 : vector<1x6x2xf32> to vector<6x2xf32>
    %cst_39 = arith.constant dense<0.000000e+00> : vector<6x96xf32>
    %44 = tpu.matmul %43, %41, %cst_39 {dimension_numbers = #tpu.dot_dimension_numbers<[1], [0], [0], [1], [0, 0, 1, 1], [], []>} : vector<6x2xf32>, vector<2x96xf32>, vector<6x96xf32> -> vector<6x96xf32>
    %45 = arith.addf %32, %44 : vector<6x96xf32>
    %c0_40 = arith.constant 0 : index
    %c0_41 = arith.constant 0 : index
    %c0_42 = arith.constant 0 : index
    %46 = vector.load %arg6[%c0_40, %c0_41, %c0_42] : memref<3x14x6xf32, #tpu.memory_space<vmem>>, vector<1x14x6xf32>
    %47 = vector.shape_cast %46 : vector<1x14x6xf32> to vector<14x6xf32>
    %c0_43 = arith.constant 0 : index
    %c0_44 = arith.constant 0 : index
    %c0_45 = arith.constant 0 : index
    %48 = vector.load %arg7[%c0_43, %c0_44, %c0_45] : memref<3x96x112xf32, #tpu.memory_space<vmem>>, vector<1x96x112xf32>
    %49 = vector.shape_cast %48 : vector<1x96x112xf32> to vector<96x112xf32>
    %cst_46 = arith.constant dense<0.000000e+00> : vector<6x112xf32>
    %50 = tpu.matmul %45, %49, %cst_46 {dimension_numbers = #tpu.dot_dimension_numbers<[1], [0], [0], [1], [0, 0, 1, 1], [], []>} : vector<6x96xf32>, vector<96x112xf32>, vector<6x112xf32> -> vector<6x112xf32>
    %cst_47 = arith.constant dense<0.000000e+00> : vector<14x112xf32>
    %51 = tpu.matmul %47, %50, %cst_47 {dimension_numbers = #tpu.dot_dimension_numbers<[1], [0], [0], [1], [0, 0, 1, 1], [], []>} : vector<14x6xf32>, vector<6x112xf32>, vector<14x112xf32> -> vector<14x112xf32>
    %c1_48 = arith.constant 1 : index
    %c0_49 = arith.constant 0 : index
    %c0_50 = arith.constant 0 : index
    %52 = vector.load %arg6[%c1_48, %c0_49, %c0_50] : memref<3x14x6xf32, #tpu.memory_space<vmem>>, vector<1x14x6xf32>
    %53 = vector.shape_cast %52 : vector<1x14x6xf32> to vector<14x6xf32>
    %c1_51 = arith.constant 1 : index
    %c0_52 = arith.constant 0 : index
    %c0_53 = arith.constant 0 : index
    %54 = vector.load %arg7[%c1_51, %c0_52, %c0_53] : memref<3x96x112xf32, #tpu.memory_space<vmem>>, vector<1x96x112xf32>
    %55 = vector.shape_cast %54 : vector<1x96x112xf32> to vector<96x112xf32>
    %cst_54 = arith.constant dense<0.000000e+00> : vector<6x112xf32>
    %56 = tpu.matmul %45, %55, %cst_54 {dimension_numbers = #tpu.dot_dimension_numbers<[1], [0], [0], [1], [0, 0, 1, 1], [], []>} : vector<6x96xf32>, vector<96x112xf32>, vector<6x112xf32> -> vector<6x112xf32>
    %cst_55 = arith.constant dense<0.000000e+00> : vector<14x112xf32>
    %57 = tpu.matmul %53, %56, %cst_55 {dimension_numbers = #tpu.dot_dimension_numbers<[1], [0], [0], [1], [0, 0, 1, 1], [], []>} : vector<14x6xf32>, vector<6x112xf32>, vector<14x112xf32> -> vector<14x112xf32>
    %58 = arith.addf %51, %57 : vector<14x112xf32>
    %c2_56 = arith.constant 2 : index
    %c0_57 = arith.constant 0 : index
    %c0_58 = arith.constant 0 : index
    %59 = vector.load %arg6[%c2_56, %c0_57, %c0_58] : memref<3x14x6xf32, #tpu.memory_space<vmem>>, vector<1x14x6xf32>
    %60 = vector.shape_cast %59 : vector<1x14x6xf32> to vector<14x6xf32>
    %c2_59 = arith.constant 2 : index
    %c0_60 = arith.constant 0 : index
    %c0_61 = arith.constant 0 : index
    %61 = vector.load %arg7[%c2_59, %c0_60, %c0_61] : memref<3x96x112xf32, #tpu.memory_space<vmem>>, vector<1x96x112xf32>
    %62 = vector.shape_cast %61 : vector<1x96x112xf32> to vector<96x112xf32>
    %cst_62 = arith.constant dense<0.000000e+00> : vector<6x112xf32>
    %63 = tpu.matmul %45, %62, %cst_62 {dimension_numbers = #tpu.dot_dimension_numbers<[1], [0], [0], [1], [0, 0, 1, 1], [], []>} : vector<6x96xf32>, vector<96x112xf32>, vector<6x112xf32> -> vector<6x112xf32>
    %cst_63 = arith.constant dense<0.000000e+00> : vector<14x112xf32>
    %64 = tpu.matmul %60, %63, %cst_63 {dimension_numbers = #tpu.dot_dimension_numbers<[1], [0], [0], [1], [0, 0, 1, 1], [], []>} : vector<14x6xf32>, vector<6x112xf32>, vector<14x112xf32> -> vector<14x112xf32>
    %65 = arith.addf %58, %64 : vector<14x112xf32>
    %c0_64 = arith.constant 0 : index
    %c0_65 = arith.constant 0 : index
    %66 = vector.load %arg8[%c0_64, %c0_65] : memref<1x112xf32, #tpu.memory_space<vmem>>, vector<1x112xf32>
    %67 = vector.broadcast %66 : vector<1x112xf32> to vector<14x112xf32>
    %68 = arith.addf %65, %67 : vector<14x112xf32>
    %cst_66 = arith.constant dense<0.000000e+00> : vector<112xf32>
    %69 = vector.multi_reduction <add>, %68, %cst_66 [0] : vector<14x112xf32> to vector<112xf32>
    %70 = vector.shape_cast %69 : vector<112xf32> to vector<1x112xf32>
    %c0_67 = arith.constant 0 : index
    %c0_68 = arith.constant 0 : index
    %71 = vector.load %arg9[%c0_67, %c0_68] : memref<112x16xf32, #tpu.memory_space<vmem>>, vector<112x16xf32>
    %cst_69 = arith.constant dense<0.000000e+00> : vector<1x16xf32>
    %72 = tpu.matmul %70, %71, %cst_69 {dimension_numbers = #tpu.dot_dimension_numbers<[1], [0], [0], [1], [0, 0, 1, 1], [], []>} : vector<1x112xf32>, vector<112x16xf32>, vector<1x16xf32> -> vector<1x16xf32>
    %cst_70 = arith.constant 0.0102040814 : f32
    %73 = vector.broadcast %cst_70 : f32 to vector<1x16xf32>
    %74 = arith.mulf %72, %73 : vector<1x16xf32>
    %c0_71 = arith.constant 0 : index
    %c0_72 = arith.constant 0 : index
    %75 = vector.load %arg10[%c0_71, %c0_72] : memref<16x112xf32, #tpu.memory_space<vmem>>, vector<16x112xf32>
    %cst_73 = arith.constant dense<0.000000e+00> : vector<1x112xf32>
    %76 = tpu.matmul %74, %75, %cst_73 {dimension_numbers = #tpu.dot_dimension_numbers<[1], [0], [0], [1], [0, 0, 1, 1], [], []>} : vector<1x16xf32>, vector<16x112xf32>, vector<1x112xf32> -> vector<1x112xf32>
    %77 = vector.broadcast %76 : vector<1x112xf32> to vector<14x112xf32>
    %78 = arith.subf %68, %77 : vector<14x112xf32>
    %79 = arith.mulf %78, %78 : vector<14x112xf32>
    %cst_74 = arith.constant dense<0.000000e+00> : vector<112xf32>
    %80 = vector.multi_reduction <add>, %79, %cst_74 [0] : vector<14x112xf32> to vector<112xf32>
    %81 = vector.shape_cast %80 : vector<112xf32> to vector<1x112xf32>
    %c0_75 = arith.constant 0 : index
    %c0_76 = arith.constant 0 : index
    %82 = vector.load %arg9[%c0_75, %c0_76] : memref<112x16xf32, #tpu.memory_space<vmem>>, vector<112x16xf32>
    %cst_77 = arith.constant dense<0.000000e+00> : vector<1x16xf32>
    %83 = tpu.matmul %81, %82, %cst_77 {dimension_numbers = #tpu.dot_dimension_numbers<[1], [0], [0], [1], [0, 0, 1, 1], [], []>} : vector<1x112xf32>, vector<112x16xf32>, vector<1x16xf32> -> vector<1x16xf32>
    %cst_78 = arith.constant 0.0102040814 : f32
    %84 = vector.broadcast %cst_78 : f32 to vector<1x16xf32>
    %85 = arith.mulf %83, %84 : vector<1x16xf32>
    %cst_79 = arith.constant 9.99999974E-6 : f32
    %86 = vector.broadcast %cst_79 : f32 to vector<1x16xf32>
    %87 = arith.addf %85, %86 : vector<1x16xf32>
    %88 = math.rsqrt %87 : vector<1x16xf32>
    %c0_80 = arith.constant 0 : index
    %c0_81 = arith.constant 0 : index
    %89 = vector.load %arg10[%c0_80, %c0_81] : memref<16x112xf32, #tpu.memory_space<vmem>>, vector<16x112xf32>
    %cst_82 = arith.constant dense<0.000000e+00> : vector<1x112xf32>
    %90 = tpu.matmul %88, %89, %cst_82 {dimension_numbers = #tpu.dot_dimension_numbers<[1], [0], [0], [1], [0, 0, 1, 1], [], []>} : vector<1x16xf32>, vector<16x112xf32>, vector<1x112xf32> -> vector<1x112xf32>
    %91 = vector.broadcast %90 : vector<1x112xf32> to vector<14x112xf32>
    %92 = arith.mulf %78, %91 : vector<14x112xf32>
    %c0_83 = arith.constant 0 : index
    %c0_84 = arith.constant 0 : index
    %93 = vector.load %arg11[%c0_83, %c0_84] : memref<1x112xf32, #tpu.memory_space<vmem>>, vector<1x112xf32>
    %94 = vector.broadcast %93 : vector<1x112xf32> to vector<14x112xf32>
    %95 = arith.mulf %92, %94 : vector<14x112xf32>
    %c0_85 = arith.constant 0 : index
    %c0_86 = arith.constant 0 : index
    %96 = vector.load %arg12[%c0_85, %c0_86] : memref<1x112xf32, #tpu.memory_space<vmem>>, vector<1x112xf32>
    %97 = vector.broadcast %96 : vector<1x112xf32> to vector<14x112xf32>
    %98 = arith.addf %95, %97 : vector<14x112xf32>
    %cst_87 = arith.constant 0.000000e+00 : f32
    %99 = vector.broadcast %cst_87 : f32 to vector<14x112xf32>
    %100 = arith.maximumf %98, %99 : vector<14x112xf32>
    %c0_88 = arith.constant 0 : index
    %c0_89 = arith.constant 0 : index
    %c0_90 = arith.constant 0 : index
    %101 = vector.load %arg13[%c0_88, %c0_89, %c0_90] : memref<3x28x14xf32, #tpu.memory_space<vmem>>, vector<1x28x14xf32>
    %102 = vector.shape_cast %101 : vector<1x28x14xf32> to vector<28x14xf32>
    %c0_91 = arith.constant 0 : index
    %c0_92 = arith.constant 0 : index
    %c0_93 = arith.constant 0 : index
    %103 = vector.load %arg14[%c0_91, %c0_92, %c0_93] : memref<3x112x112xf32, #tpu.memory_space<vmem>>, vector<1x112x112xf32>
    %104 = vector.shape_cast %103 : vector<1x112x112xf32> to vector<112x112xf32>
    %cst_94 = arith.constant dense<0.000000e+00> : vector<14x112xf32>
    %105 = tpu.matmul %100, %104, %cst_94 {dimension_numbers = #tpu.dot_dimension_numbers<[1], [0], [0], [1], [0, 0, 1, 1], [], []>} : vector<14x112xf32>, vector<112x112xf32>, vector<14x112xf32> -> vector<14x112xf32>
    %cst_95 = arith.constant dense<0.000000e+00> : vector<28x112xf32>
    %106 = tpu.matmul %102, %105, %cst_95 {dimension_numbers = #tpu.dot_dimension_numbers<[1], [0], [0], [1], [0, 0, 1, 1], [], []>} : vector<28x14xf32>, vector<14x112xf32>, vector<28x112xf32> -> vector<28x112xf32>
    %c1_96 = arith.constant 1 : index
    %c0_97 = arith.constant 0 : index
    %c0_98 = arith.constant 0 : index
    %107 = vector.load %arg13[%c1_96, %c0_97, %c0_98] : memref<3x28x14xf32, #tpu.memory_space<vmem>>, vector<1x28x14xf32>
    %108 = vector.shape_cast %107 : vector<1x28x14xf32> to vector<28x14xf32>
    %c1_99 = arith.constant 1 : index
    %c0_100 = arith.constant 0 : index
    %c0_101 = arith.constant 0 : index
    %109 = vector.load %arg14[%c1_99, %c0_100, %c0_101] : memref<3x112x112xf32, #tpu.memory_space<vmem>>, vector<1x112x112xf32>
    %110 = vector.shape_cast %109 : vector<1x112x112xf32> to vector<112x112xf32>
    %cst_102 = arith.constant dense<0.000000e+00> : vector<14x112xf32>
    %111 = tpu.matmul %100, %110, %cst_102 {dimension_numbers = #tpu.dot_dimension_numbers<[1], [0], [0], [1], [0, 0, 1, 1], [], []>} : vector<14x112xf32>, vector<112x112xf32>, vector<14x112xf32> -> vector<14x112xf32>
    %cst_103 = arith.constant dense<0.000000e+00> : vector<28x112xf32>
    %112 = tpu.matmul %108, %111, %cst_103 {dimension_numbers = #tpu.dot_dimension_numbers<[1], [0], [0], [1], [0, 0, 1, 1], [], []>} : vector<28x14xf32>, vector<14x112xf32>, vector<28x112xf32> -> vector<28x112xf32>
    %113 = arith.addf %106, %112 : vector<28x112xf32>
    %c2_104 = arith.constant 2 : index
    %c0_105 = arith.constant 0 : index
    %c0_106 = arith.constant 0 : index
    %114 = vector.load %arg13[%c2_104, %c0_105, %c0_106] : memref<3x28x14xf32, #tpu.memory_space<vmem>>, vector<1x28x14xf32>
    %115 = vector.shape_cast %114 : vector<1x28x14xf32> to vector<28x14xf32>
    %c2_107 = arith.constant 2 : index
    %c0_108 = arith.constant 0 : index
    %c0_109 = arith.constant 0 : index
    %116 = vector.load %arg14[%c2_107, %c0_108, %c0_109] : memref<3x112x112xf32, #tpu.memory_space<vmem>>, vector<1x112x112xf32>
    %117 = vector.shape_cast %116 : vector<1x112x112xf32> to vector<112x112xf32>
    %cst_110 = arith.constant dense<0.000000e+00> : vector<14x112xf32>
    %118 = tpu.matmul %100, %117, %cst_110 {dimension_numbers = #tpu.dot_dimension_numbers<[1], [0], [0], [1], [0, 0, 1, 1], [], []>} : vector<14x112xf32>, vector<112x112xf32>, vector<14x112xf32> -> vector<14x112xf32>
    %cst_111 = arith.constant dense<0.000000e+00> : vector<28x112xf32>
    %119 = tpu.matmul %115, %118, %cst_111 {dimension_numbers = #tpu.dot_dimension_numbers<[1], [0], [0], [1], [0, 0, 1, 1], [], []>} : vector<28x14xf32>, vector<14x112xf32>, vector<28x112xf32> -> vector<28x112xf32>
    %120 = arith.addf %113, %119 : vector<28x112xf32>
    %c0_112 = arith.constant 0 : index
    %c0_113 = arith.constant 0 : index
    %121 = vector.load %arg15[%c0_112, %c0_113] : memref<1x112xf32, #tpu.memory_space<vmem>>, vector<1x112xf32>
    %122 = vector.broadcast %121 : vector<1x112xf32> to vector<28x112xf32>
    %123 = arith.addf %120, %122 : vector<28x112xf32>
    %cst_114 = arith.constant dense<0.000000e+00> : vector<112xf32>
    %124 = vector.multi_reduction <add>, %123, %cst_114 [0] : vector<28x112xf32> to vector<112xf32>
    %125 = vector.shape_cast %124 : vector<112xf32> to vector<1x112xf32>
    %c0_115 = arith.constant 0 : index
    %c0_116 = arith.constant 0 : index
    %126 = vector.load %arg16[%c0_115, %c0_116] : memref<112x8xf32, #tpu.memory_space<vmem>>, vector<112x8xf32>
    %cst_117 = arith.constant dense<0.000000e+00> : vector<1x8xf32>
    %127 = tpu.matmul %125, %126, %cst_117 {dimension_numbers = #tpu.dot_dimension_numbers<[1], [0], [0], [1], [0, 0, 1, 1], [], []>} : vector<1x112xf32>, vector<112x8xf32>, vector<1x8xf32> -> vector<1x8xf32>
    %cst_118 = arith.constant 0.00255102036 : f32
    %128 = vector.broadcast %cst_118 : f32 to vector<1x8xf32>
    %129 = arith.mulf %127, %128 : vector<1x8xf32>
    %c0_119 = arith.constant 0 : index
    %c0_120 = arith.constant 0 : index
    %130 = vector.load %arg17[%c0_119, %c0_120] : memref<8x112xf32, #tpu.memory_space<vmem>>, vector<8x112xf32>
    %cst_121 = arith.constant dense<0.000000e+00> : vector<1x112xf32>
    %131 = tpu.matmul %129, %130, %cst_121 {dimension_numbers = #tpu.dot_dimension_numbers<[1], [0], [0], [1], [0, 0, 1, 1], [], []>} : vector<1x8xf32>, vector<8x112xf32>, vector<1x112xf32> -> vector<1x112xf32>
    %132 = vector.broadcast %131 : vector<1x112xf32> to vector<28x112xf32>
    %133 = arith.subf %123, %132 : vector<28x112xf32>
    %134 = arith.mulf %133, %133 : vector<28x112xf32>
    %cst_122 = arith.constant dense<0.000000e+00> : vector<112xf32>
    %135 = vector.multi_reduction <add>, %134, %cst_122 [0] : vector<28x112xf32> to vector<112xf32>
    %136 = vector.shape_cast %135 : vector<112xf32> to vector<1x112xf32>
    %c0_123 = arith.constant 0 : index
    %c0_124 = arith.constant 0 : index
    %137 = vector.load %arg16[%c0_123, %c0_124] : memref<112x8xf32, #tpu.memory_space<vmem>>, vector<112x8xf32>
    %cst_125 = arith.constant dense<0.000000e+00> : vector<1x8xf32>
    %138 = tpu.matmul %136, %137, %cst_125 {dimension_numbers = #tpu.dot_dimension_numbers<[1], [0], [0], [1], [0, 0, 1, 1], [], []>} : vector<1x112xf32>, vector<112x8xf32>, vector<1x8xf32> -> vector<1x8xf32>
    %cst_126 = arith.constant 0.00255102036 : f32
    %139 = vector.broadcast %cst_126 : f32 to vector<1x8xf32>
    %140 = arith.mulf %138, %139 : vector<1x8xf32>
    %cst_127 = arith.constant 9.99999974E-6 : f32
    %141 = vector.broadcast %cst_127 : f32 to vector<1x8xf32>
    %142 = arith.addf %140, %141 : vector<1x8xf32>
    %143 = math.rsqrt %142 : vector<1x8xf32>
    %c0_128 = arith.constant 0 : index
    %c0_129 = arith.constant 0 : index
    %144 = vector.load %arg17[%c0_128, %c0_129] : memref<8x112xf32, #tpu.memory_space<vmem>>, vector<8x112xf32>
    %cst_130 = arith.constant dense<0.000000e+00> : vector<1x112xf32>
    %145 = tpu.matmul %143, %144, %cst_130 {dimension_numbers = #tpu.dot_dimension_numbers<[1], [0], [0], [1], [0, 0, 1, 1], [], []>} : vector<1x8xf32>, vector<8x112xf32>, vector<1x112xf32> -> vector<1x112xf32>
    %146 = vector.broadcast %145 : vector<1x112xf32> to vector<28x112xf32>
    %147 = arith.mulf %133, %146 : vector<28x112xf32>
    %c0_131 = arith.constant 0 : index
    %c0_132 = arith.constant 0 : index
    %148 = vector.load %arg18[%c0_131, %c0_132] : memref<1x112xf32, #tpu.memory_space<vmem>>, vector<1x112xf32>
    %149 = vector.broadcast %148 : vector<1x112xf32> to vector<28x112xf32>
    %150 = arith.mulf %147, %149 : vector<28x112xf32>
    %c0_133 = arith.constant 0 : index
    %c0_134 = arith.constant 0 : index
    %151 = vector.load %arg19[%c0_133, %c0_134] : memref<1x112xf32, #tpu.memory_space<vmem>>, vector<1x112xf32>
    %152 = vector.broadcast %151 : vector<1x112xf32> to vector<28x112xf32>
    %153 = arith.addf %150, %152 : vector<28x112xf32>
    %cst_135 = arith.constant 0.000000e+00 : f32
    %154 = vector.broadcast %cst_135 : f32 to vector<28x112xf32>
    %155 = arith.maximumf %153, %154 : vector<28x112xf32>
    %c0_136 = arith.constant 0 : index
    %c0_137 = arith.constant 0 : index
    %c0_138 = arith.constant 0 : index
    %156 = vector.load %arg20[%c0_136, %c0_137, %c0_138] : memref<3x56x28xf32, #tpu.memory_space<vmem>>, vector<1x56x28xf32>
    %157 = vector.shape_cast %156 : vector<1x56x28xf32> to vector<56x28xf32>
    %c0_139 = arith.constant 0 : index
    %c0_140 = arith.constant 0 : index
    %c0_141 = arith.constant 0 : index
    %158 = vector.load %arg21[%c0_139, %c0_140, %c0_141] : memref<3x112x28xf32, #tpu.memory_space<vmem>>, vector<1x112x28xf32>
    %159 = vector.shape_cast %158 : vector<1x112x28xf32> to vector<112x28xf32>
    %cst_142 = arith.constant dense<0.000000e+00> : vector<28x28xf32>
    %160 = tpu.matmul %155, %159, %cst_142 {dimension_numbers = #tpu.dot_dimension_numbers<[1], [0], [0], [1], [0, 0, 1, 1], [], []>} : vector<28x112xf32>, vector<112x28xf32>, vector<28x28xf32> -> vector<28x28xf32>
    %cst_143 = arith.constant dense<0.000000e+00> : vector<56x28xf32>
    %161 = tpu.matmul %157, %160, %cst_143 {dimension_numbers = #tpu.dot_dimension_numbers<[1], [0], [0], [1], [0, 0, 1, 1], [], []>} : vector<56x28xf32>, vector<28x28xf32>, vector<56x28xf32> -> vector<56x28xf32>
    %c1_144 = arith.constant 1 : index
    %c0_145 = arith.constant 0 : index
    %c0_146 = arith.constant 0 : index
    %162 = vector.load %arg20[%c1_144, %c0_145, %c0_146] : memref<3x56x28xf32, #tpu.memory_space<vmem>>, vector<1x56x28xf32>
    %163 = vector.shape_cast %162 : vector<1x56x28xf32> to vector<56x28xf32>
    %c1_147 = arith.constant 1 : index
    %c0_148 = arith.constant 0 : index
    %c0_149 = arith.constant 0 : index
    %164 = vector.load %arg21[%c1_147, %c0_148, %c0_149] : memref<3x112x28xf32, #tpu.memory_space<vmem>>, vector<1x112x28xf32>
    %165 = vector.shape_cast %164 : vector<1x112x28xf32> to vector<112x28xf32>
    %cst_150 = arith.constant dense<0.000000e+00> : vector<28x28xf32>
    %166 = tpu.matmul %155, %165, %cst_150 {dimension_numbers = #tpu.dot_dimension_numbers<[1], [0], [0], [1], [0, 0, 1, 1], [], []>} : vector<28x112xf32>, vector<112x28xf32>, vector<28x28xf32> -> vector<28x28xf32>
    %cst_151 = arith.constant dense<0.000000e+00> : vector<56x28xf32>
    %167 = tpu.matmul %163, %166, %cst_151 {dimension_numbers = #tpu.dot_dimension_numbers<[1], [0], [0], [1], [0, 0, 1, 1], [], []>} : vector<56x28xf32>, vector<28x28xf32>, vector<56x28xf32> -> vector<56x28xf32>
    %168 = arith.addf %161, %167 : vector<56x28xf32>
    %c2_152 = arith.constant 2 : index
    %c0_153 = arith.constant 0 : index
    %c0_154 = arith.constant 0 : index
    %169 = vector.load %arg20[%c2_152, %c0_153, %c0_154] : memref<3x56x28xf32, #tpu.memory_space<vmem>>, vector<1x56x28xf32>
    %170 = vector.shape_cast %169 : vector<1x56x28xf32> to vector<56x28xf32>
    %c2_155 = arith.constant 2 : index
    %c0_156 = arith.constant 0 : index
    %c0_157 = arith.constant 0 : index
    %171 = vector.load %arg21[%c2_155, %c0_156, %c0_157] : memref<3x112x28xf32, #tpu.memory_space<vmem>>, vector<1x112x28xf32>
    %172 = vector.shape_cast %171 : vector<1x112x28xf32> to vector<112x28xf32>
    %cst_158 = arith.constant dense<0.000000e+00> : vector<28x28xf32>
    %173 = tpu.matmul %155, %172, %cst_158 {dimension_numbers = #tpu.dot_dimension_numbers<[1], [0], [0], [1], [0, 0, 1, 1], [], []>} : vector<28x112xf32>, vector<112x28xf32>, vector<28x28xf32> -> vector<28x28xf32>
    %cst_159 = arith.constant dense<0.000000e+00> : vector<56x28xf32>
    %174 = tpu.matmul %170, %173, %cst_159 {dimension_numbers = #tpu.dot_dimension_numbers<[1], [0], [0], [1], [0, 0, 1, 1], [], []>} : vector<56x28xf32>, vector<28x28xf32>, vector<56x28xf32> -> vector<56x28xf32>
    %175 = arith.addf %168, %174 : vector<56x28xf32>
    %c0_160 = arith.constant 0 : index
    %c0_161 = arith.constant 0 : index
    %176 = vector.load %arg22[%c0_160, %c0_161] : memref<1x28xf32, #tpu.memory_space<vmem>>, vector<1x28xf32>
    %177 = vector.broadcast %176 : vector<1x28xf32> to vector<56x28xf32>
    %178 = arith.addf %175, %177 : vector<56x28xf32>
    %179 = arith.negf %178 : vector<56x28xf32>
    %180 = math.exp %179 : vector<56x28xf32>
    %cst_162 = arith.constant 1.000000e+00 : f32
    %181 = vector.broadcast %cst_162 : f32 to vector<56x28xf32>
    %182 = arith.addf %181, %180 : vector<56x28xf32>
    %183 = arith.divf %181, %182 : vector<56x28xf32>
    %c0_163 = arith.constant 0 : index
    %c0_164 = arith.constant 0 : index
    %184 = vector.load %arg23[%c0_163, %c0_164] : memref<56x28xf32, #tpu.memory_space<vmem>>, vector<56x28xf32>
    tpu.vector_store %arg23[%c0_163, %c0_164], %183 {strides = array<i32>} : memref<56x28xf32, #tpu.memory_space<vmem>>, vector<56x28xf32>,
    return
  }
}

</mosaic_0001>

<llo_original>
// kernel: _lambda_.1
$region0: #{_lambda_.1}
  #allocation0 [shape = 'u32[]', space=smem, size = 0x4, offset = 0x4, fixed_abs, tag = 'smem constant byte address 0x4 - core index']
  #allocation1 [shape = 'u32[144,128]{1,0:T(1,128)}', space=vmem, size = 0x12000, scoped, tag = 'internal scratch']
  %s0 = inlined_call_operand.hbm [shape: f32[2,4], index: 0, kind: input, shape index: {}]
  %s1 = inlined_call_operand.hbm [shape: f32[4,128], index: 1, kind: input, shape index: {}]
  %s2 = inlined_call_operand.hbm [shape: f32[1,128], index: 2, kind: input, shape index: {}]
  %s3 = inlined_call_operand.hbm [shape: f32[3,128,96], index: 3, kind: input, shape index: {}]
  %s4 = inlined_call_operand.hbm [shape: f32[3,1,96], index: 4, kind: input, shape index: {}]
  %s5 = inlined_call_operand.vmem [shape: f32[3,6,2], index: 5, kind: input, shape index: {}]
  %s6 = inlined_call_operand.hbm [shape: f32[3,14,6], index: 6, kind: input, shape index: {}]
  %s7 = inlined_call_operand.hbm [shape: f32[3,96,112], index: 7, kind: input, shape index: {}]
  %s8 = inlined_call_operand.vmem [shape: f32[1,112], index: 8, kind: input, shape index: {}]
  %s9 = inlined_call_operand.hbm [shape: f32[112,16], index: 9, kind: input, shape index: {}]
  %s10 = inlined_call_operand.vmem [shape: f32[16,112], index: 10, kind: input, shape index: {}]
  %s11 = inlined_call_operand.vmem [shape: f32[1,112], index: 11, kind: input, shape index: {}, may-alias: {11,18}]
  %s12 = inlined_call_operand.vmem [shape: f32[1,112], index: 12, kind: input, shape index: {}, may-alias: {12,19}]
  %s13 = inlined_call_operand.hbm [shape: f32[3,28,14], index: 13, kind: input, shape index: {}]
  %s14 = inlined_call_operand.hbm [shape: f32[3,112,112], index: 14, kind: input, shape index: {}]
  %s15 = inlined_call_operand.vmem [shape: f32[1,112], index: 15, kind: input, shape index: {}]
  %s16 = inlined_call_operand.hbm [shape: f32[112,8], index: 16, kind: input, shape index: {}]
  %s17 = inlined_call_operand.vmem [shape: f32[8,112], index: 17, kind: input, shape index: {}]
  %s18 = inlined_call_operand.vmem [shape: f32[1,112], index: 18, kind: input, shape index: {}, may-alias: {11,18}]
  %s19 = inlined_call_operand.vmem [shape: f32[1,112], index: 19, kind: input, shape index: {}, may-alias: {12,19}]
  %s20 = inlined_call_operand.hbm [shape: f32[3,56,28], index: 20, kind: input, shape index: {}]
  %s21 = inlined_call_operand.hbm [shape: f32[3,112,28], index: 21, kind: input, shape index: {}]
  %s22 = inlined_call_operand.vmem [shape: f32[1,28], index: 22, kind: input, shape index: {}]
  %s23 = inlined_call_operand.hbm [shape: f32[56,28], index: 23, kind: output, shape index: {}]
  %s24 = sld [smem:[#allocation0]]
  $region154: #{_lambda_.1} parent=0
    _
  %s26 = ssub.s32 1, %s24
  %s27 = scalar_select 0, %s26, %s24
  $region1: #{_lambda_.1} parent=0
    #allocation2 [shape = 'u8[1024]{0}', space=vmem, size = 0x400, scoped, tag = 'input window, operand 0, single buffered']
    #allocation3 [shape = 's32[1]{0}', space=sflag, size = 0x4, scoped, tag = 'scoped memory for _lambda_.1']
    #allocation4 [shape = 's32[1]{0}', space=sflag, size = 0x4, scoped, tag = 'scoped memory for _lambda_.1']
    #allocation5 [shape = 'u8[2048]{0}', space=vmem, size = 0x800, scoped, tag = 'input window, operand 1, single buffered']
    #allocation6 [shape = 's32[1]{0}', space=sflag, size = 0x4, scoped, tag = 'scoped memory for _lambda_.1']
    #allocation7 [shape = 'u8[512]{0}', space=vmem, size = 0x400, scoped, tag = 'input window, operand 2, single buffered']
    #allocation8 [shape = 'u8[196608]{0}', space=vmem, size = 0x30000, scoped, tag = 'input window, operand 3, single buffered']
    #allocation9 [shape = 's32[1]{0}', space=sflag, size = 0x4, scoped, tag = 'scoped memory for _lambda_.1']
    #allocation10 [shape = 'u8[1536]{0}', space=vmem, size = 0x800, scoped, tag = 'input window, operand 4, single buffered']
    #allocation11 [shape = 'u8[24576]{0}', space=vmem, size = 0x6000, scoped, tag = 'input window, operand 6, single buffered']
    #allocation12 [shape = 's32[1]{0}', space=sflag, size = 0x4, scoped, tag = 'scoped memory for _lambda_.1']
    #allocation13 [shape = 'u8[147456]{0}', space=vmem, size = 0x24000, scoped, tag = 'input window, operand 7, single buffered']
    #allocation14 [shape = 'u8[57344]{0}', space=vmem, size = 0xe000, scoped, tag = 'input window, operand 9, single buffered']
    #allocation15 [shape = 's32[1]{0}', space=sflag, size = 0x4, scoped, tag = 'scoped memory for _lambda_.1']
    #allocation16 [shape = 'u8[49152]{0}', space=vmem, size = 0xc000, scoped, tag = 'input window, operand 13, single buffered']
    #allocation17 [shape = 'u8[172032]{0}', space=vmem, size = 0x2a000, scoped, tag = 'input window, operand 14, single buffered']
    #allocation18 [shape = 's32[1]{0}', space=sflag, size = 0x4, scoped, tag = 'scoped memory for _lambda_.1']
    #allocation19 [shape = 'u8[57344]{0}', space=vmem, size = 0xe000, scoped, tag = 'input window, operand 16, single buffered']
    #allocation20 [shape = 'u8[86016]{0}', space=vmem, size = 0x15000, scoped, tag = 'input window, operand 20, single buffered']
    #allocation21 [shape = 's32[1]{0}', space=sflag, size = 0x4, scoped, tag = 'scoped memory for _lambda_.1']
    #allocation22 [shape = 'u8[172032]{0}', space=vmem, size = 0x2a000, scoped, tag = 'input window, operand 21, single buffered']
    #allocation23 [shape = 'u8[28672]{0}', space=vmem, size = 0x7000, scoped, tag = 'output window, operand 0, single buffered']
    %28 = vsyncpa [#allocation3], 0
    %29 = vsyncpa [#allocation6], 0
    %30 = vsyncpa [#allocation9], 0
    %31 = vsyncpa [#allocation12], 0
    %32 = vsyncpa [#allocation15], 0
    %33 = vsyncpa [#allocation18], 0
    %34 = vsyncpa [#allocation21], 0
    %35 = vsyncpa [#allocation4], 0
    // Predicated region
    $region2: #{_lambda_.1} parent=1 // pred_check
      _
    $region3: #{_lambda_.1} parent=1 // pred_check_branch
      %37 = sbr.rel (0) target = $region5
    $region4: #{_lambda_.1} parent=1 // pred_region
      %s39 = ssub.s32 32, 32
      %40 = vsyncadd [#allocation3], %s39
      %s42 = sshll.u32 [#allocation2], 4
      %s43 = int_to_ptr.vmem [resolvable:$true] %s42
      %45 = dma.hbm_to_vmem [thread:$0]  %s0, 32, %s43, [#allocation3]
    $region5: #{_lambda_.1} parent=1 // pred_fallthru
      _
    // Predicated region
    $region6: #{_lambda_.1} parent=1 // pred_check
      _
    $region7: #{_lambda_.1} parent=1 // pred_check_branch
      %47 = sbr.rel (0) target = $region9
    $region8: #{_lambda_.1} parent=1 // pred_region
      %s49 = ssub.s32 64, 64
      %50 = vsyncadd [#allocation6], %s49
      %s52 = sshll.u32 [#allocation5], 4
      %s53 = int_to_ptr.vmem [resolvable:$true] %s52
      %55 = dma.hbm_to_vmem [thread:$0]  %s1, 64, %s53, [#allocation6]
    $region9: #{_lambda_.1} parent=1 // pred_fallthru
      _
    // Predicated region
    $region10: #{_lambda_.1} parent=1 // pred_check
      _
    $region11: #{_lambda_.1} parent=1 // pred_check_branch
      %57 = sbr.rel (0) target = $region13
    $region12: #{_lambda_.1} parent=1 // pred_region
      %s59 = ssub.s32 16, 16
      %60 = vsyncadd [#allocation6], %s59
      %s62 = sshll.u32 [#allocation7], 4
      %s63 = int_to_ptr.vmem [resolvable:$true] %s62
      %65 = dma.hbm_to_vmem [thread:$0]  %s2, 16, %s63, [#allocation6]
    $region13: #{_lambda_.1} parent=1 // pred_fallthru
      _
    // Predicated region
    $region14: #{_lambda_.1} parent=1 // pred_check
      _
    $region15: #{_lambda_.1} parent=1 // pred_check_branch
      %67 = sbr.rel (0) target = $region17
    $region16: #{_lambda_.1} parent=1 // pred_region
      %s69 = ssub.s32 6144, 6144
      %70 = vsyncadd [#allocation9], %s69
      %s71 = sshll.u32 [#allocation8], 4
      %s72 = int_to_ptr.vmem [resolvable:$true] %s71
      %77 = dma.hbm_to_vmem [thread:$0]  %s3, 6144, %s72, [#allocation9], 128, 128, 8
    $region17: #{_lambda_.1} parent=1 // pred_fallthru
      _
    // Predicated region
    $region18: #{_lambda_.1} parent=1 // pred_check
      _
    $region19: #{_lambda_.1} parent=1 // pred_check_branch
      %79 = sbr.rel (0) target = $region21
    $region20: #{_lambda_.1} parent=1 // pred_region
      %s81 = ssub.s32 48, 48
      %82 = vsyncadd [#allocation9], %s81
      %s83 = sshll.u32 [#allocation10], 4
      %s84 = int_to_ptr.vmem [resolvable:$true] %s83
      %89 = dma.hbm_to_vmem [thread:$0]  %s4, 48, %s84, [#allocation9], 16, 16, 1
    $region21: #{_lambda_.1} parent=1 // pred_fallthru
      _
    // Predicated region
    $region22: #{_lambda_.1} parent=1 // pred_check
      _
    $region23: #{_lambda_.1} parent=1 // pred_check_branch
      %91 = sbr.rel (0) target = $region25
    $region24: #{_lambda_.1} parent=1 // pred_region
      _
    $region25: #{_lambda_.1} parent=1 // pred_fallthru
      _
    // Predicated region
    $region26: #{_lambda_.1} parent=1 // pred_check
      _
    $region27: #{_lambda_.1} parent=1 // pred_check_branch
      %93 = sbr.rel (0) target = $region29
    $region28: #{_lambda_.1} parent=1 // pred_region
      %s95 = ssub.s32 768, 768
      %96 = vsyncadd [#allocation12], %s95
      %s97 = sshll.u32 [#allocation11], 4
      %s98 = int_to_ptr.vmem [resolvable:$true] %s97
      %103 = dma.hbm_to_vmem [thread:$0]  %s6, 768, %s98, [#allocation12], 128, 128, 8
    $region29: #{_lambda_.1} parent=1 // pred_fallthru
      _
    // Predicated region
    $region30: #{_lambda_.1} parent=1 // pred_check
      _
    $region31: #{_lambda_.1} parent=1 // pred_check_branch
      %105 = sbr.rel (0) target = $region33
    $region32: #{_lambda_.1} parent=1 // pred_region
      %s107 = ssub.s32 4608, 4608
      %108 = vsyncadd [#allocation12], %s107
      %s109 = sshll.u32 [#allocation13], 4
      %s110 = int_to_ptr.vmem [resolvable:$true] %s109
      %115 = dma.hbm_to_vmem [thread:$0]  %s7, 4608, %s110, [#allocation12], 128, 128, 8
    $region33: #{_lambda_.1} parent=1 // pred_fallthru
      _
    // Predicated region
    $region34: #{_lambda_.1} parent=1 // pred_check
      _
    $region35: #{_lambda_.1} parent=1 // pred_check_branch
      %117 = sbr.rel (0) target = $region37
    $region36: #{_lambda_.1} parent=1 // pred_region
      _
    $region37: #{_lambda_.1} parent=1 // pred_fallthru
      _
    // Predicated region
    $region38: #{_lambda_.1} parent=1 // pred_check
      _
    $region39: #{_lambda_.1} parent=1 // pred_check_branch
      %119 = sbr.rel (0) target = $region41
    $region40: #{_lambda_.1} parent=1 // pred_region
      %s121 = ssub.s32 1792, 1792
      %122 = vsyncadd [#allocation15], %s121
      %s123 = sshll.u32 [#allocation14], 4
      %s124 = int_to_ptr.vmem [resolvable:$true] %s123
      %129 = dma.hbm_to_vmem [thread:$0]  %s9, 1792, %s124, [#allocation15], 128, 128, 8
    $region41: #{_lambda_.1} parent=1 // pred_fallthru
      _
    // Predicated region
    $region42: #{_lambda_.1} parent=1 // pred_check
      _
    $region43: #{_lambda_.1} parent=1 // pred_check_branch
      %131 = sbr.rel (0) target = $region45
    $region44: #{_lambda_.1} parent=1 // pred_region
      _
    $region45: #{_lambda_.1} parent=1 // pred_fallthru
      _
    // Predicated region
    $region46: #{_lambda_.1} parent=1 // pred_check
      _
    $region47: #{_lambda_.1} parent=1 // pred_check_branch
      %133 = sbr.rel (0) target = $region49
    $region48: #{_lambda_.1} parent=1 // pred_region
      _
    $region49: #{_lambda_.1} parent=1 // pred_fallthru
      _
    // Predicated region
    $region50: #{_lambda_.1} parent=1 // pred_check
      _
    $region51: #{_lambda_.1} parent=1 // pred_check_branch
      %135 = sbr.rel (0) target = $region53
    $region52: #{_lambda_.1} parent=1 // pred_region
      _
    $region53: #{_lambda_.1} parent=1 // pred_fallthru
      _
    // Predicated region
    $region54: #{_lambda_.1} parent=1 // pred_check
      _
    $region55: #{_lambda_.1} parent=1 // pred_check_branch
      %137 = sbr.rel (0) target = $region57
    $region56: #{_lambda_.1} parent=1 // pred_region
      %s139 = ssub.s32 1536, 1536
      %140 = vsyncadd [#allocation15], %s139
      %s141 = sshll.u32 [#allocation16], 4
      %s142 = int_to_ptr.vmem [resolvable:$true] %s141
      %147 = dma.hbm_to_vmem [thread:$0]  %s13, 1536, %s142, [#allocation15], 128, 128, 8
    $region57: #{_lambda_.1} parent=1 // pred_fallthru
      _
    // Predicated region
    $region58: #{_lambda_.1} parent=1 // pred_check
      _
    $region59: #{_lambda_.1} parent=1 // pred_check_branch
      %149 = sbr.rel (0) target = $region61
    $region60: #{_lambda_.1} parent=1 // pred_region
      %s151 = ssub.s32 5376, 5376
      %152 = vsyncadd [#allocation18], %s151
      %s153 = sshll.u32 [#allocation17], 4
      %s154 = int_to_ptr.vmem [resolvable:$true] %s153
      %159 = dma.hbm_to_vmem [thread:$0]  %s14, 5376, %s154, [#allocation18], 128, 128, 8
    $region61: #{_lambda_.1} parent=1 // pred_fallthru
      _
    // Predicated region
    $region62: #{_lambda_.1} parent=1 // pred_check
      _
    $region63: #{_lambda_.1} parent=1 // pred_check_branch
      %161 = sbr.rel (0) target = $region65
    $region64: #{_lambda_.1} parent=1 // pred_region
      _
    $region65: #{_lambda_.1} parent=1 // pred_fallthru
      _
    // Predicated region
    $region66: #{_lambda_.1} parent=1 // pred_check
      _
    $region67: #{_lambda_.1} parent=1 // pred_check_branch
      %163 = sbr.rel (0) target = $region69
    $region68: #{_lambda_.1} parent=1 // pred_region
      %s165 = ssub.s32 1792, 1792
      %166 = vsyncadd [#allocation18], %s165
      %s167 = sshll.u32 [#allocation19], 4
      %s168 = int_to_ptr.vmem [resolvable:$true] %s167
      %173 = dma.hbm_to_vmem [thread:$0]  %s16, 1792, %s168, [#allocation18], 128, 128, 8
    $region69: #{_lambda_.1} parent=1 // pred_fallthru
      _
    // Predicated region
    $region70: #{_lambda_.1} parent=1 // pred_check
      _
    $region71: #{_lambda_.1} parent=1 // pred_check_branch
      %175 = sbr.rel (0) target = $region73
    $region72: #{_lambda_.1} parent=1 // pred_region
      _
    $region73: #{_lambda_.1} parent=1 // pred_fallthru
      _
    // Predicated region
    $region74: #{_lambda_.1} parent=1 // pred_check
      _
    $region75: #{_lambda_.1} parent=1 // pred_check_branch
      %177 = sbr.rel (0) target = $region77
    $region76: #{_lambda_.1} parent=1 // pred_region
      _
    $region77: #{_lambda_.1} parent=1 // pred_fallthru
      _
    // Predicated region
    $region78: #{_lambda_.1} parent=1 // pred_check
      _
    $region79: #{_lambda_.1} parent=1 // pred_check_branch
      %179 = sbr.rel (0) target = $region81
    $region80: #{_lambda_.1} parent=1 // pred_region
      _
    $region81: #{_lambda_.1} parent=1 // pred_fallthru
      _
    // Predicated region
    $region82: #{_lambda_.1} parent=1 // pred_check
      _
    $region83: #{_lambda_.1} parent=1 // pred_check_branch
      %181 = sbr.rel (0) target = $region85
    $region84: #{_lambda_.1} parent=1 // pred_region
      %s183 = ssub.s32 2688, 2688
      %184 = vsyncadd [#allocation21], %s183
      %s185 = sshll.u32 [#allocation20], 4
      %s186 = int_to_ptr.vmem [resolvable:$true] %s185
      %191 = dma.hbm_to_vmem [thread:$0]  %s20, 2688, %s186, [#allocation21], 128, 128, 8
    $region85: #{_lambda_.1} parent=1 // pred_fallthru
      _
    // Predicated region
    $region86: #{_lambda_.1} parent=1 // pred_check
      _
    $region87: #{_lambda_.1} parent=1 // pred_check_branch
      %193 = sbr.rel (0) target = $region89
    $region88: #{_lambda_.1} parent=1 // pred_region
      %s195 = ssub.s32 5376, 5376
      %196 = vsyncadd [#allocation21], %s195
      %s197 = sshll.u32 [#allocation22], 4
      %s198 = int_to_ptr.vmem [resolvable:$true] %s197
      %203 = dma.hbm_to_vmem [thread:$0]  %s21, 5376, %s198, [#allocation21], 128, 128, 8
    $region89: #{_lambda_.1} parent=1 // pred_fallthru
      _
    // Predicated region
    $region90: #{_lambda_.1} parent=1 // pred_check
      _
    $region91: #{_lambda_.1} parent=1 // pred_check_branch
      %205 = sbr.rel (0) target = $region93
    $region92: #{_lambda_.1} parent=1 // pred_region
      _
    $region93: #{_lambda_.1} parent=1 // pred_fallthru
      _
    // Predicated region
    $region94: #{_lambda_.1} parent=1 // pred_check
      _
    $region95: #{_lambda_.1} parent=1 // pred_check_branch
      %207 = sbr.rel (0) target = $region97
    $region96: #{_lambda_.1} parent=1 // pred_region
      %208 = dma.done [#allocation3], 32
    $region97: #{_lambda_.1} parent=1 // pred_fallthru
      _
    // Predicated region
    $region98: #{_lambda_.1} parent=1 // pred_check
      _
    $region99: #{_lambda_.1} parent=1 // pred_check_branch
      %210 = sbr.rel (0) target = $region101
    $region100: #{_lambda_.1} parent=1 // pred_region
      %211 = dma.done [#allocation6], 64
    $region101: #{_lambda_.1} parent=1 // pred_fallthru
      _
    // Predicated region
    $region102: #{_lambda_.1} parent=1 // pred_check
      _
    $region103: #{_lambda_.1} parent=1 // pred_check_branch
      %213 = sbr.rel (0) target = $region105
    $region104: #{_lambda_.1} parent=1 // pred_region
      %214 = dma.done [#allocation6], 16
    $region105: #{_lambda_.1} parent=1 // pred_fallthru
      _
    // Predicated region
    $region106: #{_lambda_.1} parent=1 // pred_check
      _
    $region107: #{_lambda_.1} parent=1 // pred_check_branch
      %216 = sbr.rel (0) target = $region109
    $region108: #{_lambda_.1} parent=1 // pred_region
      %217 = dma.done [#allocation9], 6144
    $region109: #{_lambda_.1} parent=1 // pred_fallthru
      _
    // Predicated region
    $region110: #{_lambda_.1} parent=1 // pred_check
      _
    $region111: #{_lambda_.1} parent=1 // pred_check_branch
      %219 = sbr.rel (0) target = $region113
    $region112: #{_lambda_.1} parent=1 // pred_region
      %220 = dma.done [#allocation9], 48
    $region113: #{_lambda_.1} parent=1 // pred_fallthru
      _
    // Predicated region
    $region114: #{_lambda_.1} parent=1 // pred_check
      _
    $region115: #{_lambda_.1} parent=1 // pred_check_branch
      %222 = sbr.rel (0) target = $region117
    $region116: #{_lambda_.1} parent=1 // pred_region
      %223 = dma.done [#allocation12], 768
    $region117: #{_lambda_.1} parent=1 // pred_fallthru
      _
    // Predicated region
    $region118: #{_lambda_.1} parent=1 // pred_check
      _
    $region119: #{_lambda_.1} parent=1 // pred_check_branch
      %225 = sbr.rel (0) target = $region121
    $region120: #{_lambda_.1} parent=1 // pred_region
      %226 = dma.done [#allocation12], 4608
    $region121: #{_lambda_.1} parent=1 // pred_fallthru
      _
    // Predicated region
    $region122: #{_lambda_.1} parent=1 // pred_check
      _
    $region123: #{_lambda_.1} parent=1 // pred_check_branch
      %228 = sbr.rel (0) target = $region125
    $region124: #{_lambda_.1} parent=1 // pred_region
      %229 = dma.done [#allocation15], 1792
    $region125: #{_lambda_.1} parent=1 // pred_fallthru
      _
    // Predicated region
    $region126: #{_lambda_.1} parent=1 // pred_check
      _
    $region127: #{_lambda_.1} parent=1 // pred_check_branch
      %231 = sbr.rel (0) target = $region129
    $region128: #{_lambda_.1} parent=1 // pred_region
      %232 = dma.done [#allocation15], 1536
    $region129: #{_lambda_.1} parent=1 // pred_fallthru
      _
    // Predicated region
    $region130: #{_lambda_.1} parent=1 // pred_check
      _
    $region131: #{_lambda_.1} parent=1 // pred_check_branch
      %234 = sbr.rel (0) target = $region133
    $region132: #{_lambda_.1} parent=1 // pred_region
      %235 = dma.done [#allocation18], 5376
    $region133: #{_lambda_.1} parent=1 // pred_fallthru
      _
    // Predicated region
    $region134: #{_lambda_.1} parent=1 // pred_check
      _
    $region135: #{_lambda_.1} parent=1 // pred_check_branch
      %237 = sbr.rel (0) target = $region137
    $region136: #{_lambda_.1} parent=1 // pred_region
      %238 = dma.done [#allocation18], 1792
    $region137: #{_lambda_.1} parent=1 // pred_fallthru
      _
    // Predicated region
    $region138: #{_lambda_.1} parent=1 // pred_check
      _
    $region139: #{_lambda_.1} parent=1 // pred_check_branch
      %240 = sbr.rel (0) target = $region141
    $region140: #{_lambda_.1} parent=1 // pred_region
      %241 = dma.done [#allocation21], 2688
    $region141: #{_lambda_.1} parent=1 // pred_fallthru
      _
    // Predicated region
    $region142: #{_lambda_.1} parent=1 // pred_check
      _
    $region143: #{_lambda_.1} parent=1 // pred_check_branch
      %243 = sbr.rel (0) target = $region145
    $region144: #{_lambda_.1} parent=1 // pred_region
      %244 = dma.done [#allocation21], 5376
    $region145: #{_lambda_.1} parent=1 // pred_fallthru
      _
    %v245 = vld [vmem:[#allocation2] sm:$0x3]
    %v246 = vld [vmem:[#allocation5] sm:$0xf]
    %v247 = vld [vmem:[#allocation7] sm:$0x1]
    %v249 = vlaneseq
    %v250 = vshrl.u32 %v249, 7
    %v251 = vsub.s32 0, %v250
    %v252 = vrot.slane %v247, %v251
    %vm254 = vcmask 31744
    %v256 = vsel %vm254, %v245, 0
    %vm258 = vcmask 1043456
    %v260 = vsel %vm258, %v246, 0
    %262 = vmatprep.subr.mxu0 0.0
    %263 = vmatpush1.msra.mxu0 %v260
    %264 = vmatprep.subr.mxu0 0.0
    %265 = vmatpush1.msra.mxu0 0.0
    %266 = vmatprep.subr.mxu0 0.0
    %267 = vmatpush1.msra.mxu0 0.0
    %268 = vmatprep.subr.mxu0 0.0
    %269 = vmatpush1.msra.mxu0 0.0
    %270 = vmatprep.subr.mxu0 0.0
    %271 = vmatpush1.msra.mxu0 0.0
    %272 = vmatprep.subr.mxu0 0.0
    %273 = vmatpush1.msra.mxu0 0.0
    %274 = vmatprep.subr.mxu0 0.0
    %275 = vmatpush1.msra.mxu0 0.0
    %276 = vmatprep.subr.mxu0 0.0
    %277 = vmatpush1.msra.mxu0 0.0
    %278 = vmatprep.subr.mxu0 0.0
    %279 = vmatpush1.msra.mxu0 0.0
    %280 = vmatprep.subr.mxu0 0.0
    %281 = vmatpush1.msra.mxu0 0.0
    %282 = vmatprep.subr.mxu0 0.0
    %283 = vmatpush1.msra.mxu0 0.0
    %284 = vmatprep.subr.mxu0 0.0
    %285 = vmatpush1.msra.mxu0 0.0
    %286 = vmatprep.subr.mxu0 0.0
    %287 = vmatpush1.msra.mxu0 0.0
    %288 = vmatprep.subr.mxu0 0.0
    %289 = vmatpush1.msra.mxu0 0.0
    %290 = vmatprep.subr.mxu0 0.0
    %291 = vmatpush1.msra.mxu0 0.0
    %292 = vmatprep.subr.mxu0 0.0
    %293 = vmatpush1.msra.mxu0 0.0
    %294 = vmatprep.subr.mxu0 0.0
    %295 = vmatpush1.msra.mxu0 0.0
    %296 = vmatprep.subr.mxu0 0.0
    %297 = vmatpush1.msra.mxu0 0.0
    %298 = vmatprep.subr.mxu0 0.0
    %299 = vmatpush1.msra.mxu0 0.0
    %300 = vmatprep.subr.mxu0 0.0
    %301 = vmatpush1.msra.mxu0 0.0
    %302 = vmatprep.subr.mxu0 0.0
    %303 = vmatpush1.msra.mxu0 0.0
    %304 = vmatprep.subr.mxu0 0.0
    %305 = vmatpush1.msra.mxu0 0.0
    %306 = vmatprep.subr.mxu0 0.0
    %307 = vmatpush1.msra.mxu0 0.0
    %308 = vmatprep.subr.mxu0 0.0
    %309 = vmatpush1.msra.mxu0 0.0
    %310 = vmatprep.subr.mxu0 0.0
    %311 = vmatpush1.msra.mxu0 0.0
    %312 = vmatprep.subr.mxu0 0.0
    %313 = vmatpush1.msra.mxu0 0.0
    %314 = vmatprep.subr.mxu0 0.0
    %315 = vmatpush1.msra.mxu0 0.0
    %316 = vmatprep.subr.mxu0 0.0
    %317 = vmatpush1.msra.mxu0 0.0
    %318 = vmatprep.subr.mxu0 0.0
    %319 = vmatpush1.msra.mxu0 0.0
    %320 = vmatprep.subr.mxu0 0.0
    %321 = vmatpush1.msra.mxu0 0.0
    %322 = vmatprep.subr.mxu0 0.0
    %323 = vmatpush1.msra.mxu0 0.0
    %324 = vmatprep.subr.mxu0 0.0
    %325 = vmatpush1.msra.mxu0 0.0
    %326 = vmatprep.mubr.f32.mxu0 0.0
    %327 = vmatmul.mubr.f32.gmra.mrb[0].mxu0 %v256
    %v328 = vpop.f32.mrb[0].mxu0
    %v329 = vadd.f32 %v252, %v328
    %v330 = vpop.f32.mrb[0].mxu0
    %331 = vdwg.mxu0
    %v332 = vmax.f32 %v329, 0.0
    %v333 = vld [vmem:[#allocation8] sm:$0xff]
    %v334 = vld [vmem:[#allocation8 + $0x8] sm:$0xff]
    %v335 = vld [vmem:[#allocation8 + $0x10] sm:$0xff]
    %v336 = vld [vmem:[#allocation8 + $0x18] sm:$0xff]
    %v337 = vld [vmem:[#allocation8 + $0x20] sm:$0xff]
    %v338 = vld [vmem:[#allocation8 + $0x28] sm:$0xff]
    %v339 = vld [vmem:[#allocation8 + $0x30] sm:$0xff]
    %v340 = vld [vmem:[#allocation8 + $0x38] sm:$0xff]
    %v341 = vld [vmem:[#allocation8 + $0x40] sm:$0xff]
    %v342 = vld [vmem:[#allocation8 + $0x48] sm:$0xff]
    %v343 = vld [vmem:[#allocation8 + $0x50] sm:$0xff]
    %v344 = vld [vmem:[#allocation8 + $0x58] sm:$0xff]
    %v345 = vld [vmem:[#allocation8 + $0x60] sm:$0xff]
    %v346 = vld [vmem:[#allocation8 + $0x68] sm:$0xff]
    %v347 = vld [vmem:[#allocation8 + $0x70] sm:$0xff]
    %v348 = vld [vmem:[#allocation8 + $0x78] sm:$0xff]
    %v349 = vld [vmem:[#allocation10] sm:$0x1]
    %v351 = vlaneseq
    %v352 = vshrl.u32 %v351, 7
    %v353 = vsub.s32 0, %v352
    %v354 = vrot.slane %v349, %v353
    %356 = vmatprep.subr.mxu0 0.0
    %357 = vmatpush1.msra.mxu0 %v333
    %358 = vmatprep.subr.mxu0 0.0
    %359 = vmatpush1.msra.mxu0 %v334
    %360 = vmatprep.subr.mxu0 0.0
    %361 = vmatpush1.msra.mxu0 %v335
    %362 = vmatprep.subr.mxu0 0.0
    %363 = vmatpush1.msra.mxu0 %v336
    %364 = vmatprep.subr.mxu0 0.0
    %365 = vmatpush1.msra.mxu0 %v337
    %366 = vmatprep.subr.mxu0 0.0
    %367 = vmatpush1.msra.mxu0 %v338
    %368 = vmatprep.subr.mxu0 0.0
    %369 = vmatpush1.msra.mxu0 %v339
    %370 = vmatprep.subr.mxu0 0.0
    %371 = vmatpush1.msra.mxu0 %v340
    %372 = vmatprep.subr.mxu0 0.0
    %373 = vmatpush1.msra.mxu0 %v341
    %374 = vmatprep.subr.mxu0 0.0
    %375 = vmatpush1.msra.mxu0 %v342
    %376 = vmatprep.subr.mxu0 0.0
    %377 = vmatpush1.msra.mxu0 %v343
    %378 = vmatprep.subr.mxu0 0.0
    %379 = vmatpush1.msra.mxu0 %v344
    %380 = vmatprep.subr.mxu0 0.0
    %381 = vmatpush1.msra.mxu0 %v345
    %382 = vmatprep.subr.mxu0 0.0
    %383 = vmatpush1.msra.mxu0 %v346
    %384 = vmatprep.subr.mxu0 0.0
    %385 = vmatpush1.msra.mxu0 %v347
    %386 = vmatprep.subr.mxu0 0.0
    %387 = vmatpush1.msra.mxu0 %v348
    %388 = vmatprep.subr.mxu0 0.0
    %389 = vmatpush1.msra.mxu0 0.0
    %390 = vmatprep.subr.mxu0 0.0
    %391 = vmatpush1.msra.mxu0 0.0
    %392 = vmatprep.subr.mxu0 0.0
    %393 = vmatpush1.msra.mxu0 0.0
    %394 = vmatprep.subr.mxu0 0.0
    %395 = vmatpush1.msra.mxu0 0.0
    %396 = vmatprep.subr.mxu0 0.0
    %397 = vmatpush1.msra.mxu0 0.0
    %398 = vmatprep.subr.mxu0 0.0
    %399 = vmatpush1.msra.mxu0 0.0
    %400 = vmatprep.subr.mxu0 0.0
    %401 = vmatpush1.msra.mxu0 0.0
    %402 = vmatprep.subr.mxu0 0.0
    %403 = vmatpush1.msra.mxu0 0.0
    %404 = vmatprep.subr.mxu0 0.0
    %405 = vmatpush1.msra.mxu0 0.0
    %406 = vmatprep.subr.mxu0 0.0
    %407 = vmatpush1.msra.mxu0 0.0
    %408 = vmatprep.subr.mxu0 0.0
    %409 = vmatpush1.msra.mxu0 0.0
    %410 = vmatprep.subr.mxu0 0.0
    %411 = vmatpush1.msra.mxu0 0.0
    %412 = vmatprep.subr.mxu0 0.0
    %413 = vmatpush1.msra.mxu0 0.0
    %414 = vmatprep.subr.mxu0 0.0
    %415 = vmatpush1.msra.mxu0 0.0
    %416 = vmatprep.subr.mxu0 0.0
    %417 = vmatpush1.msra.mxu0 0.0
    %418 = vmatprep.subr.mxu0 0.0
    %419 = vmatpush1.msra.mxu0 0.0
    %420 = vmatprep.mubr.f32.mxu0 0.0
    %421 = vmatmul.mubr.f32.gmra.mrb[0].mxu0 %v332
    %v422 = vpop.f32.mrb[0].mxu0
    %v423 = vadd.f32 %v354, %v422
    %v424 = vpop.f32.mrb[0].mxu0
    %425 = vdwg.mxu0
    %v426 = vmax.f32 %v423, 0.0
    %v427 = vld [vmem:[%s5] sm:$0x3f]
    %s428 = scalar_lea.vmem [#allocation8], 128
    %v429 = vld [vmem:[%s428] sm:$0xff]
    %v430 = vld [vmem:[%s428 + $0x8] sm:$0xff]
    %v431 = vld [vmem:[%s428 + $0x10] sm:$0xff]
    %v432 = vld [vmem:[%s428 + $0x18] sm:$0xff]
    %v433 = vld [vmem:[%s428 + $0x20] sm:$0xff]
    %v434 = vld [vmem:[%s428 + $0x28] sm:$0xff]
    %v435 = vld [vmem:[%s428 + $0x30] sm:$0xff]
    %v436 = vld [vmem:[%s428 + $0x38] sm:$0xff]
    %v437 = vld [vmem:[%s428 + $0x40] sm:$0xff]
    %v438 = vld [vmem:[%s428 + $0x48] sm:$0xff]
    %v439 = vld [vmem:[%s428 + $0x50] sm:$0xff]
    %v440 = vld [vmem:[%s428 + $0x58] sm:$0xff]
    %v441 = vld [vmem:[%s428 + $0x60] sm:$0xff]
    %v442 = vld [vmem:[%s428 + $0x68] sm:$0xff]
    %v443 = vld [vmem:[%s428 + $0x70] sm:$0xff]
    %v444 = vld [vmem:[%s428 + $0x78] sm:$0xff]
    %s445 = scalar_lea.vmem [#allocation10], 1
    %v446 = vld [vmem:[%s445] sm:$0x1]
    %v448 = vlaneseq
    %v449 = vshrl.u32 %v448, 7
    %v450 = vsub.s32 0, %v449
    %v451 = vrot.slane %v446, %v450
    %453 = vmatprep.subr.mxu0 0.0
    %454 = vmatpush1.msra.mxu0 %v429
    %455 = vmatprep.subr.mxu0 0.0
    %456 = vmatpush1.msra.mxu0 %v430
    %457 = vmatprep.subr.mxu0 0.0
    %458 = vmatpush1.msra.mxu0 %v431
    %459 = vmatprep.subr.mxu0 0.0
    %460 = vmatpush1.msra.mxu0 %v432
    %461 = vmatprep.subr.mxu0 0.0
    %462 = vmatpush1.msra.mxu0 %v433
    %463 = vmatprep.subr.mxu0 0.0
    %464 = vmatpush1.msra.mxu0 %v434
    %465 = vmatprep.subr.mxu0 0.0
    %466 = vmatpush1.msra.mxu0 %v435
    %467 = vmatprep.subr.mxu0 0.0
    %468 = vmatpush1.msra.mxu0 %v436
    %469 = vmatprep.subr.mxu0 0.0
    %470 = vmatpush1.msra.mxu0 %v437
    %471 = vmatprep.subr.mxu0 0.0
    %472 = vmatpush1.msra.mxu0 %v438
    %473 = vmatprep.subr.mxu0 0.0
    %474 = vmatpush1.msra.mxu0 %v439
    %475 = vmatprep.subr.mxu0 0.0
    %476 = vmatpush1.msra.mxu0 %v440
    %477 = vmatprep.subr.mxu0 0.0
    %478 = vmatpush1.msra.mxu0 %v441
    %479 = vmatprep.subr.mxu0 0.0
    %480 = vmatpush1.msra.mxu0 %v442
    %481 = vmatprep.subr.mxu0 0.0
    %482 = vmatpush1.msra.mxu0 %v443
    %483 = vmatprep.subr.mxu0 0.0
    %484 = vmatpush1.msra.mxu0 %v444
    %485 = vmatprep.subr.mxu0 0.0
    %486 = vmatpush1.msra.mxu0 0.0
    %487 = vmatprep.subr.mxu0 0.0
    %488 = vmatpush1.msra.mxu0 0.0
    %489 = vmatprep.subr.mxu0 0.0
    %490 = vmatpush1.msra.mxu0 0.0
    %491 = vmatprep.subr.mxu0 0.0
    %492 = vmatpush1.msra.mxu0 0.0
    %493 = vmatprep.subr.mxu0 0.0
    %494 = vmatpush1.msra.mxu0 0.0
    %495 = vmatprep.subr.mxu0 0.0
    %496 = vmatpush1.msra.mxu0 0.0
    %497 = vmatprep.subr.mxu0 0.0
    %498 = vmatpush1.msra.mxu0 0.0
    %499 = vmatprep.subr.mxu0 0.0
    %500 = vmatpush1.msra.mxu0 0.0
    %501 = vmatprep.subr.mxu0 0.0
    %502 = vmatpush1.msra.mxu0 0.0
    %503 = vmatprep.subr.mxu0 0.0
    %504 = vmatpush1.msra.mxu0 0.0
    %505 = vmatprep.subr.mxu0 0.0
    %506 = vmatpush1.msra.mxu0 0.0
    %507 = vmatprep.subr.mxu0 0.0
    %508 = vmatpush1.msra.mxu0 0.0
    %509 = vmatprep.subr.mxu0 0.0
    %510 = vmatpush1.msra.mxu0 0.0
    %511 = vmatprep.subr.mxu0 0.0
    %512 = vmatpush1.msra.mxu0 0.0
    %513 = vmatprep.subr.mxu0 0.0
    %514 = vmatpush1.msra.mxu0 0.0
    %515 = vmatprep.subr.mxu0 0.0
    %516 = vmatpush1.msra.mxu0 0.0
    %517 = vmatprep.mubr.f32.mxu0 0.0
    %518 = vmatmul.mubr.f32.gmra.mrb[0].mxu0 %v332
    %v519 = vpop.f32.mrb[0].mxu0
    %v520 = vadd.f32 %v451, %v519
    %v521 = vpop.f32.mrb[0].mxu0
    %522 = vdwg.mxu0
    %v523 = vmax.f32 %v520, 0.0
    %s524 = scalar_lea.vmem %s5, 8
    %v525 = vld [vmem:[%s524] sm:$0x3f]
    %vm526 = vcmask 15360
    %v528 = vsel %vm526, %v525, 0
    %vm530 = vcmask 1041408
    %v532 = vsel %vm530, %v523, 0
    %534 = vmatprep.subr.mxu0 0.0
    %535 = vmatpush1.msra.mxu0 %v532
    %536 = vmatprep.subr.mxu0 0.0
    %537 = vmatpush1.msra.mxu0 0.0
    %538 = vmatprep.subr.mxu0 0.0
    %539 = vmatpush1.msra.mxu0 0.0
    %540 = vmatprep.subr.mxu0 0.0
    %541 = vmatpush1.msra.mxu0 0.0
    %542 = vmatprep.subr.mxu0 0.0
    %543 = vmatpush1.msra.mxu0 0.0
    %544 = vmatprep.subr.mxu0 0.0
    %545 = vmatpush1.msra.mxu0 0.0
    %546 = vmatprep.subr.mxu0 0.0
    %547 = vmatpush1.msra.mxu0 0.0
    %548 = vmatprep.subr.mxu0 0.0
    %549 = vmatpush1.msra.mxu0 0.0
    %550 = vmatprep.subr.mxu0 0.0
    %551 = vmatpush1.msra.mxu0 0.0
    %552 = vmatprep.subr.mxu0 0.0
    %553 = vmatpush1.msra.mxu0 0.0
    %554 = vmatprep.subr.mxu0 0.0
    %555 = vmatpush1.msra.mxu0 0.0
    %556 = vmatprep.subr.mxu0 0.0
    %557 = vmatpush1.msra.mxu0 0.0
    %558 = vmatprep.subr.mxu0 0.0
    %559 = vmatpush1.msra.mxu0 0.0
    %560 = vmatprep.subr.mxu0 0.0
    %561 = vmatpush1.msra.mxu0 0.0
    %562 = vmatprep.subr.mxu0 0.0
    %563 = vmatpush1.msra.mxu0 0.0
    %564 = vmatprep.subr.mxu0 0.0
    %565 = vmatpush1.msra.mxu0 0.0
    %566 = vmatprep.subr.mxu0 0.0
    %567 = vmatpush1.msra.mxu0 0.0
    %568 = vmatprep.subr.mxu0 0.0
    %569 = vmatpush1.msra.mxu0 0.0
    %570 = vmatprep.subr.mxu0 0.0
    %571 = vmatpush1.msra.mxu0 0.0
    %572 = vmatprep.subr.mxu0 0.0
    %573 = vmatpush1.msra.mxu0 0.0
    %574 = vmatprep.subr.mxu0 0.0
    %575 = vmatpush1.msra.mxu0 0.0
    %576 = vmatprep.subr.mxu0 0.0
    %577 = vmatpush1.msra.mxu0 0.0
    %578 = vmatprep.subr.mxu0 0.0
    %579 = vmatpush1.msra.mxu0 0.0
    %580 = vmatprep.subr.mxu0 0.0
    %581 = vmatpush1.msra.mxu0 0.0
    %582 = vmatprep.subr.mxu0 0.0
    %583 = vmatpush1.msra.mxu0 0.0
    %584 = vmatprep.subr.mxu0 0.0
    %585 = vmatpush1.msra.mxu0 0.0
    %586 = vmatprep.subr.mxu0 0.0
    %587 = vmatpush1.msra.mxu0 0.0
    %588 = vmatprep.subr.mxu0 0.0
    %589 = vmatpush1.msra.mxu0 0.0
    %590 = vmatprep.subr.mxu0 0.0
    %591 = vmatpush1.msra.mxu0 0.0
    %592 = vmatprep.subr.mxu0 0.0
    %593 = vmatpush1.msra.mxu0 0.0
    %594 = vmatprep.subr.mxu0 0.0
    %595 = vmatpush1.msra.mxu0 0.0
    %596 = vmatprep.subr.mxu0 0.0
    %597 = vmatpush1.msra.mxu0 0.0
    %598 = vmatprep.mubr.f32.mxu0 0.0
    %599 = vmatmul.mubr.f32.gmra.mrb[0].mxu0 %v528
    %v600 = vpop.f32.mrb[0].mxu0
    %v601 = vadd.f32 0.0, %v600
    %v602 = vpop.f32.mrb[0].mxu0
    %603 = vdwg.mxu0
    %v605 = vsel %vm526, %v427, 0
    %v608 = vsel %vm530, %v426, 0
    %610 = vmatprep.subr.mxu0 0.0
    %611 = vmatpush1.msra.mxu0 %v608
    %612 = vmatprep.subr.mxu0 0.0
    %613 = vmatpush1.msra.mxu0 0.0
    %614 = vmatprep.subr.mxu0 0.0
    %615 = vmatpush1.msra.mxu0 0.0
    %616 = vmatprep.subr.mxu0 0.0
    %617 = vmatpush1.msra.mxu0 0.0
    %618 = vmatprep.subr.mxu0 0.0
    %619 = vmatpush1.msra.mxu0 0.0
    %620 = vmatprep.subr.mxu0 0.0
    %621 = vmatpush1.msra.mxu0 0.0
    %622 = vmatprep.subr.mxu0 0.0
    %623 = vmatpush1.msra.mxu0 0.0
    %624 = vmatprep.subr.mxu0 0.0
    %625 = vmatpush1.msra.mxu0 0.0
    %626 = vmatprep.subr.mxu0 0.0
    %627 = vmatpush1.msra.mxu0 0.0
    %628 = vmatprep.subr.mxu0 0.0
    %629 = vmatpush1.msra.mxu0 0.0
    %630 = vmatprep.subr.mxu0 0.0
    %631 = vmatpush1.msra.mxu0 0.0
    %632 = vmatprep.subr.mxu0 0.0
    %633 = vmatpush1.msra.mxu0 0.0
    %634 = vmatprep.subr.mxu0 0.0
    %635 = vmatpush1.msra.mxu0 0.0
    %636 = vmatprep.subr.mxu0 0.0
    %637 = vmatpush1.msra.mxu0 0.0
    %638 = vmatprep.subr.mxu0 0.0
    %639 = vmatpush1.msra.mxu0 0.0
    %640 = vmatprep.subr.mxu0 0.0
    %641 = vmatpush1.msra.mxu0 0.0
    %642 = vmatprep.subr.mxu0 0.0
    %643 = vmatpush1.msra.mxu0 0.0
    %644 = vmatprep.subr.mxu0 0.0
    %645 = vmatpush1.msra.mxu0 0.0
    %646 = vmatprep.subr.mxu0 0.0
    %647 = vmatpush1.msra.mxu0 0.0
    %648 = vmatprep.subr.mxu0 0.0
    %649 = vmatpush1.msra.mxu0 0.0
    %650 = vmatprep.subr.mxu0 0.0
    %651 = vmatpush1.msra.mxu0 0.0
    %652 = vmatprep.subr.mxu0 0.0
    %653 = vmatpush1.msra.mxu0 0.0
    %654 = vmatprep.subr.mxu0 0.0
    %655 = vmatpush1.msra.mxu0 0.0
    %656 = vmatprep.subr.mxu0 0.0
    %657 = vmatpush1.msra.mxu0 0.0
    %658 = vmatprep.subr.mxu0 0.0
    %659 = vmatpush1.msra.mxu0 0.0
    %660 = vmatprep.subr.mxu0 0.0
    %661 = vmatpush1.msra.mxu0 0.0
    %662 = vmatprep.subr.mxu0 0.0
    %663 = vmatpush1.msra.mxu0 0.0
    %664 = vmatprep.subr.mxu0 0.0
    %665 = vmatpush1.msra.mxu0 0.0
    %666 = vmatprep.subr.mxu0 0.0
    %667 = vmatpush1.msra.mxu0 0.0
    %668 = vmatprep.subr.mxu0 0.0
    %669 = vmatpush1.msra.mxu0 0.0
    %670 = vmatprep.subr.mxu0 0.0
    %671 = vmatpush1.msra.mxu0 0.0
    %672 = vmatprep.subr.mxu0 0.0
    %673 = vmatpush1.msra.mxu0 0.0
    %674 = vmatprep.mubr.f32.mxu0 0.0
    %675 = vmatmul.mubr.f32.gmra.mrb[0].mxu0 %v605
    %v676 = vpop.f32.mrb[0].mxu0
    %v677 = vadd.f32 %v601, %v676
    %v678 = vpop.f32.mrb[0].mxu0
    %679 = vdwg.mxu0
    %s680 = scalar_lea.vmem [#allocation8], 256
    %v681 = vld [vmem:[%s680] sm:$0xff]
    %v682 = vld [vmem:[%s680 + $0x8] sm:$0xff]
    %v683 = vld [vmem:[%s680 + $0x10] sm:$0xff]
    %v684 = vld [vmem:[%s680 + $0x18] sm:$0xff]
    %v685 = vld [vmem:[%s680 + $0x20] sm:$0xff]
    %v686 = vld [vmem:[%s680 + $0x28] sm:$0xff]
    %v687 = vld [vmem:[%s680 + $0x30] sm:$0xff]
    %v688 = vld [vmem:[%s680 + $0x38] sm:$0xff]
    %v689 = vld [vmem:[%s680 + $0x40] sm:$0xff]
    %v690 = vld [vmem:[%s680 + $0x48] sm:$0xff]
    %v691 = vld [vmem:[%s680 + $0x50] sm:$0xff]
    %v692 = vld [vmem:[%s680 + $0x58] sm:$0xff]
    %v693 = vld [vmem:[%s680 + $0x60] sm:$0xff]
    %v694 = vld [vmem:[%s680 + $0x68] sm:$0xff]
    %v695 = vld [vmem:[%s680 + $0x70] sm:$0xff]
    %v696 = vld [vmem:[%s680 + $0x78] sm:$0xff]
    %s697 = scalar_lea.vmem [#allocation10], 2
    %v698 = vld [vmem:[%s697] sm:$0x1]
    %v700 = vlaneseq
    %v701 = vshrl.u32 %v700, 7
    %v702 = vsub.s32 0, %v701
    %v703 = vrot.slane %v698, %v702
    %705 = vmatprep.subr.mxu0 0.0
    %706 = vmatpush1.msra.mxu0 %v681
    %707 = vmatprep.subr.mxu0 0.0
    %708 = vmatpush1.msra.mxu0 %v682
    %709 = vmatprep.subr.mxu0 0.0
    %710 = vmatpush1.msra.mxu0 %v683
    %711 = vmatprep.subr.mxu0 0.0
    %712 = vmatpush1.msra.mxu0 %v684
    %713 = vmatprep.subr.mxu0 0.0
    %714 = vmatpush1.msra.mxu0 %v685
    %715 = vmatprep.subr.mxu0 0.0
    %716 = vmatpush1.msra.mxu0 %v686
    %717 = vmatprep.subr.mxu0 0.0
    %718 = vmatpush1.msra.mxu0 %v687
    %719 = vmatprep.subr.mxu0 0.0
    %720 = vmatpush1.msra.mxu0 %v688
    %721 = vmatprep.subr.mxu0 0.0
    %722 = vmatpush1.msra.mxu0 %v689
    %723 = vmatprep.subr.mxu0 0.0
    %724 = vmatpush1.msra.mxu0 %v690
    %725 = vmatprep.subr.mxu0 0.0
    %726 = vmatpush1.msra.mxu0 %v691
    %727 = vmatprep.subr.mxu0 0.0
    %728 = vmatpush1.msra.mxu0 %v692
    %729 = vmatprep.subr.mxu0 0.0
    %730 = vmatpush1.msra.mxu0 %v693
    %731 = vmatprep.subr.mxu0 0.0
    %732 = vmatpush1.msra.mxu0 %v694
    %733 = vmatprep.subr.mxu0 0.0
    %734 = vmatpush1.msra.mxu0 %v695
    %735 = vmatprep.subr.mxu0 0.0
    %736 = vmatpush1.msra.mxu0 %v696
    %737 = vmatprep.subr.mxu0 0.0
    %738 = vmatpush1.msra.mxu0 0.0
    %739 = vmatprep.subr.mxu0 0.0
    %740 = vmatpush1.msra.mxu0 0.0
    %741 = vmatprep.subr.mxu0 0.0
    %742 = vmatpush1.msra.mxu0 0.0
    %743 = vmatprep.subr.mxu0 0.0
    %744 = vmatpush1.msra.mxu0 0.0
    %745 = vmatprep.subr.mxu0 0.0
    %746 = vmatpush1.msra.mxu0 0.0
    %747 = vmatprep.subr.mxu0 0.0
    %748 = vmatpush1.msra.mxu0 0.0
    %749 = vmatprep.subr.mxu0 0.0
    %750 = vmatpush1.msra.mxu0 0.0
    %751 = vmatprep.subr.mxu0 0.0
    %752 = vmatpush1.msra.mxu0 0.0
    %753 = vmatprep.subr.mxu0 0.0
    %754 = vmatpush1.msra.mxu0 0.0
    %755 = vmatprep.subr.mxu0 0.0
    %756 = vmatpush1.msra.mxu0 0.0
    %757 = vmatprep.subr.mxu0 0.0
    %758 = vmatpush1.msra.mxu0 0.0
    %759 = vmatprep.subr.mxu0 0.0
    %760 = vmatpush1.msra.mxu0 0.0
    %761 = vmatprep.subr.mxu0 0.0
    %762 = vmatpush1.msra.mxu0 0.0
    %763 = vmatprep.subr.mxu0 0.0
    %764 = vmatpush1.msra.mxu0 0.0
    %765 = vmatprep.subr.mxu0 0.0
    %766 = vmatpush1.msra.mxu0 0.0
    %767 = vmatprep.subr.mxu0 0.0
    %768 = vmatpush1.msra.mxu0 0.0
    %769 = vmatprep.mubr.f32.mxu0 0.0
    %770 = vmatmul.mubr.f32.gmra.mrb[0].mxu0 %v332
    %v771 = vpop.f32.mrb[0].mxu0
    %v772 = vadd.f32 %v703, %v771
    %v773 = vpop.f32.mrb[0].mxu0
    %774 = vdwg.mxu0
    %v775 = vmax.f32 %v772, 0.0
    %s776 = scalar_lea.vmem %s5, 16
    %v777 = vld [vmem:[%s776] sm:$0x3f]
    %v779 = vsel %vm526, %v777, 0
    %v782 = vsel %vm530, %v775, 0
    %784 = vmatprep.subr.mxu0 0.0
    %785 = vmatpush1.msra.mxu0 %v782
    %786 = vmatprep.subr.mxu0 0.0
    %787 = vmatpush1.msra.mxu0 0.0
    %788 = vmatprep.subr.mxu0 0.0
    %789 = vmatpush1.msra.mxu0 0.0
    %790 = vmatprep.subr.mxu0 0.0
    %791 = vmatpush1.msra.mxu0 0.0
    %792 = vmatprep.subr.mxu0 0.0
    %793 = vmatpush1.msra.mxu0 0.0
    %794 = vmatprep.subr.mxu0 0.0
    %795 = vmatpush1.msra.mxu0 0.0
    %796 = vmatprep.subr.mxu0 0.0
    %797 = vmatpush1.msra.mxu0 0.0
    %798 = vmatprep.subr.mxu0 0.0
    %799 = vmatpush1.msra.mxu0 0.0
    %800 = vmatprep.subr.mxu0 0.0
    %801 = vmatpush1.msra.mxu0 0.0
    %802 = vmatprep.subr.mxu0 0.0
    %803 = vmatpush1.msra.mxu0 0.0
    %804 = vmatprep.subr.mxu0 0.0
    %805 = vmatpush1.msra.mxu0 0.0
    %806 = vmatprep.subr.mxu0 0.0
    %807 = vmatpush1.msra.mxu0 0.0
    %808 = vmatprep.subr.mxu0 0.0
    %809 = vmatpush1.msra.mxu0 0.0
    %810 = vmatprep.subr.mxu0 0.0
    %811 = vmatpush1.msra.mxu0 0.0
    %812 = vmatprep.subr.mxu0 0.0
    %813 = vmatpush1.msra.mxu0 0.0
    %814 = vmatprep.subr.mxu0 0.0
    %815 = vmatpush1.msra.mxu0 0.0
    %816 = vmatprep.subr.mxu0 0.0
    %817 = vmatpush1.msra.mxu0 0.0
    %818 = vmatprep.subr.mxu0 0.0
    %819 = vmatpush1.msra.mxu0 0.0
    %820 = vmatprep.subr.mxu0 0.0
    %821 = vmatpush1.msra.mxu0 0.0
    %822 = vmatprep.subr.mxu0 0.0
    %823 = vmatpush1.msra.mxu0 0.0
    %824 = vmatprep.subr.mxu0 0.0
    %825 = vmatpush1.msra.mxu0 0.0
    %826 = vmatprep.subr.mxu0 0.0
    %827 = vmatpush1.msra.mxu0 0.0
    %828 = vmatprep.subr.mxu0 0.0
    %829 = vmatpush1.msra.mxu0 0.0
    %830 = vmatprep.subr.mxu0 0.0
    %831 = vmatpush1.msra.mxu0 0.0
    %832 = vmatprep.subr.mxu0 0.0
    %833 = vmatpush1.msra.mxu0 0.0
    %834 = vmatprep.subr.mxu0 0.0
    %835 = vmatpush1.msra.mxu0 0.0
    %836 = vmatprep.subr.mxu0 0.0
    %837 = vmatpush1.msra.mxu0 0.0
    %838 = vmatprep.subr.mxu0 0.0
    %839 = vmatpush1.msra.mxu0 0.0
    %840 = vmatprep.subr.mxu0 0.0
    %841 = vmatpush1.msra.mxu0 0.0
    %842 = vmatprep.subr.mxu0 0.0
    %843 = vmatpush1.msra.mxu0 0.0
    %844 = vmatprep.subr.mxu0 0.0
    %845 = vmatpush1.msra.mxu0 0.0
    %846 = vmatprep.subr.mxu0 0.0
    %847 = vmatpush1.msra.mxu0 0.0
    %848 = vmatprep.mubr.f32.mxu0 0.0
    %849 = vmatmul.mubr.f32.gmra.mrb[0].mxu0 %v779
    %v850 = vpop.f32.mrb[0].mxu0
    %v851 = vadd.f32 0.0, %v850
    %v852 = vpop.f32.mrb[0].mxu0
    %853 = vdwg.mxu0
    %v854 = vadd.f32 %v677, %v851
    %v855 = vld [vmem:[#allocation11] sm:$0xff]
    %v856 = vld [vmem:[#allocation11 + $0x8] sm:$0x3f]
    %v857 = vld [vmem:[#allocation13] sm:$0xff]
    %v858 = vld [vmem:[#allocation13 + $0x8] sm:$0xff]
    %v859 = vld [vmem:[#allocation13 + $0x10] sm:$0xff]
    %v860 = vld [vmem:[#allocation13 + $0x18] sm:$0xff]
    %v861 = vld [vmem:[#allocation13 + $0x20] sm:$0xff]
    %v862 = vld [vmem:[#allocation13 + $0x28] sm:$0xff]
    %v863 = vld [vmem:[#allocation13 + $0x30] sm:$0xff]
    %v864 = vld [vmem:[#allocation13 + $0x38] sm:$0xff]
    %v865 = vld [vmem:[#allocation13 + $0x40] sm:$0xff]
    %v866 = vld [vmem:[#allocation13 + $0x48] sm:$0xff]
    %v867 = vld [vmem:[#allocation13 + $0x50] sm:$0xff]
    %v868 = vld [vmem:[#allocation13 + $0x58] sm:$0xff]
    %vm869 = vcmask 785408
    %v871 = vsel %vm869, %v854, 0
    %873 = vmatprep.subr.mxu0 0.0
    %874 = vmatpush1.msra.mxu0 %v857
    %875 = vmatprep.subr.mxu0 0.0
    %876 = vmatpush1.msra.mxu0 %v858
    %877 = vmatprep.subr.mxu0 0.0
    %878 = vmatpush1.msra.mxu0 %v859
    %879 = vmatprep.subr.mxu0 0.0
    %880 = vmatpush1.msra.mxu0 %v860
    %881 = vmatprep.subr.mxu0 0.0
    %882 = vmatpush1.msra.mxu0 %v861
    %883 = vmatprep.subr.mxu0 0.0
    %884 = vmatpush1.msra.mxu0 %v862
    %885 = vmatprep.subr.mxu0 0.0
    %886 = vmatpush1.msra.mxu0 %v863
    %887 = vmatprep.subr.mxu0 0.0
    %888 = vmatpush1.msra.mxu0 %v864
    %889 = vmatprep.subr.mxu0 0.0
    %890 = vmatpush1.msra.mxu0 %v865
    %891 = vmatprep.subr.mxu0 0.0
    %892 = vmatpush1.msra.mxu0 %v866
    %893 = vmatprep.subr.mxu0 0.0
    %894 = vmatpush1.msra.mxu0 %v867
    %895 = vmatprep.subr.mxu0 0.0
    %896 = vmatpush1.msra.mxu0 %v868
    %897 = vmatprep.subr.mxu0 0.0
    %898 = vmatpush1.msra.mxu0 0.0
    %899 = vmatprep.subr.mxu0 0.0
    %900 = vmatpush1.msra.mxu0 0.0
    %901 = vmatprep.subr.mxu0 0.0
    %902 = vmatpush1.msra.mxu0 0.0
    %903 = vmatprep.subr.mxu0 0.0
    %904 = vmatpush1.msra.mxu0 0.0
    %905 = vmatprep.subr.mxu0 0.0
    %906 = vmatpush1.msra.mxu0 0.0
    %907 = vmatprep.subr.mxu0 0.0
    %908 = vmatpush1.msra.mxu0 0.0
    %909 = vmatprep.subr.mxu0 0.0
    %910 = vmatpush1.msra.mxu0 0.0
    %911 = vmatprep.subr.mxu0 0.0
    %912 = vmatpush1.msra.mxu0 0.0
    %913 = vmatprep.subr.mxu0 0.0
    %914 = vmatpush1.msra.mxu0 0.0
    %915 = vmatprep.subr.mxu0 0.0
    %916 = vmatpush1.msra.mxu0 0.0
    %917 = vmatprep.subr.mxu0 0.0
    %918 = vmatpush1.msra.mxu0 0.0
    %919 = vmatprep.subr.mxu0 0.0
    %920 = vmatpush1.msra.mxu0 0.0
    %921 = vmatprep.subr.mxu0 0.0
    %922 = vmatpush1.msra.mxu0 0.0
    %923 = vmatprep.subr.mxu0 0.0
    %924 = vmatpush1.msra.mxu0 0.0
    %925 = vmatprep.subr.mxu0 0.0
    %926 = vmatpush1.msra.mxu0 0.0
    %927 = vmatprep.subr.mxu0 0.0
    %928 = vmatpush1.msra.mxu0 0.0
    %929 = vmatprep.subr.mxu0 0.0
    %930 = vmatpush1.msra.mxu0 0.0
    %931 = vmatprep.subr.mxu0 0.0
    %932 = vmatpush1.msra.mxu0 0.0
    %933 = vmatprep.subr.mxu0 0.0
    %934 = vmatpush1.msra.mxu0 0.0
    %935 = vmatprep.subr.mxu0 0.0
    %936 = vmatpush1.msra.mxu0 0.0
    %937 = vmatprep.mubr.f32.mxu0 0.0
    %938 = vmatmul.mubr.f32.gmra.mrb[0].mxu0 %v871
    %v939 = vpop.f32.mrb[0].mxu0
    %v940 = vadd.f32 0.0, %v939
    %v941 = vpop.f32.mrb[0].mxu0
    %942 = vdwg.mxu0
    %s943 = scalar_lea.vmem [#allocation11], 16
    %v944 = vld [vmem:[%s943] sm:$0xff]
    %v945 = vld [vmem:[%s943 + $0x8] sm:$0x3f]
    %s946 = scalar_lea.vmem [#allocation13], 96
    %v947 = vld [vmem:[%s946] sm:$0xff]
    %v948 = vld [vmem:[%s946 + $0x8] sm:$0xff]
    %v949 = vld [vmem:[%s946 + $0x10] sm:$0xff]
    %v950 = vld [vmem:[%s946 + $0x18] sm:$0xff]
    %v951 = vld [vmem:[%s946 + $0x20] sm:$0xff]
    %v952 = vld [vmem:[%s946 + $0x28] sm:$0xff]
    %v953 = vld [vmem:[%s946 + $0x30] sm:$0xff]
    %v954 = vld [vmem:[%s946 + $0x38] sm:$0xff]
    %v955 = vld [vmem:[%s946 + $0x40] sm:$0xff]
    %v956 = vld [vmem:[%s946 + $0x48] sm:$0xff]
    %v957 = vld [vmem:[%s946 + $0x50] sm:$0xff]
    %v958 = vld [vmem:[%s946 + $0x58] sm:$0xff]
    %959 = vmatprep.subr.mxu0 0.0
    %960 = vmatpush1.msra.mxu0 %v947
    %961 = vmatprep.subr.mxu0 0.0
    %962 = vmatpush1.msra.mxu0 %v948
    %963 = vmatprep.subr.mxu0 0.0
    %964 = vmatpush1.msra.mxu0 %v949
    %965 = vmatprep.subr.mxu0 0.0
    %966 = vmatpush1.msra.mxu0 %v950
    %967 = vmatprep.subr.mxu0 0.0
    %968 = vmatpush1.msra.mxu0 %v951
    %969 = vmatprep.subr.mxu0 0.0
    %970 = vmatpush1.msra.mxu0 %v952
    %971 = vmatprep.subr.mxu0 0.0
    %972 = vmatpush1.msra.mxu0 %v953
    %973 = vmatprep.subr.mxu0 0.0
    %974 = vmatpush1.msra.mxu0 %v954
    %975 = vmatprep.subr.mxu0 0.0
    %976 = vmatpush1.msra.mxu0 %v955
    %977 = vmatprep.subr.mxu0 0.0
    %978 = vmatpush1.msra.mxu0 %v956
    %979 = vmatprep.subr.mxu0 0.0
    %980 = vmatpush1.msra.mxu0 %v957
    %981 = vmatprep.subr.mxu0 0.0
    %982 = vmatpush1.msra.mxu0 %v958
    %983 = vmatprep.subr.mxu0 0.0
    %984 = vmatpush1.msra.mxu0 0.0
    %985 = vmatprep.subr.mxu0 0.0
    %986 = vmatpush1.msra.mxu0 0.0
    %987 = vmatprep.subr.mxu0 0.0
    %988 = vmatpush1.msra.mxu0 0.0
    %989 = vmatprep.subr.mxu0 0.0
    %990 = vmatpush1.msra.mxu0 0.0
    %991 = vmatprep.subr.mxu0 0.0
    %992 = vmatpush1.msra.mxu0 0.0
    %993 = vmatprep.subr.mxu0 0.0
    %994 = vmatpush1.msra.mxu0 0.0
    %995 = vmatprep.subr.mxu0 0.0
    %996 = vmatpush1.msra.mxu0 0.0
    %997 = vmatprep.subr.mxu0 0.0
    %998 = vmatpush1.msra.mxu0 0.0
    %999 = vmatprep.subr.mxu0 0.0
    %1000 = vmatpush1.msra.mxu0 0.0
    %1001 = vmatprep.subr.mxu0 0.0
    %1002 = vmatpush1.msra.mxu0 0.0
    %1003 = vmatprep.subr.mxu0 0.0
    %1004 = vmatpush1.msra.mxu0 0.0
    %1005 = vmatprep.subr.mxu0 0.0
    %1006 = vmatpush1.msra.mxu0 0.0
    %1007 = vmatprep.subr.mxu0 0.0
    %1008 = vmatpush1.msra.mxu0 0.0
    %1009 = vmatprep.subr.mxu0 0.0
    %1010 = vmatpush1.msra.mxu0 0.0
    %1011 = vmatprep.subr.mxu0 0.0
    %1012 = vmatpush1.msra.mxu0 0.0
    %1013 = vmatprep.subr.mxu0 0.0
    %1014 = vmatpush1.msra.mxu0 0.0
    %1015 = vmatprep.subr.mxu0 0.0
    %1016 = vmatpush1.msra.mxu0 0.0
    %1017 = vmatprep.subr.mxu0 0.0
    %1018 = vmatpush1.msra.mxu0 0.0
    %1019 = vmatprep.subr.mxu0 0.0
    %1020 = vmatpush1.msra.mxu0 0.0
    %1021 = vmatprep.subr.mxu0 0.0
    %1022 = vmatpush1.msra.mxu0 0.0
    %1023 = vmatprep.mubr.f32.mxu0 0.0
    %1024 = vmatmul.mubr.f32.gmra.mrb[0].mxu0 %v871
    %v1025 = vpop.f32.mrb[0].mxu0
    %v1026 = vadd.f32 0.0, %v1025
    %v1027 = vpop.f32.mrb[0].mxu0
    %1028 = vdwg.mxu0
    %vm1029 = vcmask 48128
    %v1031 = vsel %vm1029, %v944, 0
    %v1034 = vsel %vm1029, %v945, 0
    %vm1036 = vcmask 1045504
    %v1038 = vsel %vm1036, %v1026, 0
    %1040 = vmatprep.subr.mxu0 0.0
    %1041 = vmatpush1.msra.mxu0 %v1038
    %1042 = vmatprep.subr.mxu0 0.0
    %1043 = vmatpush1.msra.mxu0 0.0
    %1044 = vmatprep.subr.mxu0 0.0
    %1045 = vmatpush1.msra.mxu0 0.0
    %1046 = vmatprep.subr.mxu0 0.0
    %1047 = vmatpush1.msra.mxu0 0.0
    %1048 = vmatprep.subr.mxu0 0.0
    %1049 = vmatpush1.msra.mxu0 0.0
    %1050 = vmatprep.subr.mxu0 0.0
    %1051 = vmatpush1.msra.mxu0 0.0
    %1052 = vmatprep.subr.mxu0 0.0
    %1053 = vmatpush1.msra.mxu0 0.0
    %1054 = vmatprep.subr.mxu0 0.0
    %1055 = vmatpush1.msra.mxu0 0.0
    %1056 = vmatprep.subr.mxu0 0.0
    %1057 = vmatpush1.msra.mxu0 0.0
    %1058 = vmatprep.subr.mxu0 0.0
    %1059 = vmatpush1.msra.mxu0 0.0
    %1060 = vmatprep.subr.mxu0 0.0
    %1061 = vmatpush1.msra.mxu0 0.0
    %1062 = vmatprep.subr.mxu0 0.0
    %1063 = vmatpush1.msra.mxu0 0.0
    %1064 = vmatprep.subr.mxu0 0.0
    %1065 = vmatpush1.msra.mxu0 0.0
    %1066 = vmatprep.subr.mxu0 0.0
    %1067 = vmatpush1.msra.mxu0 0.0
    %1068 = vmatprep.subr.mxu0 0.0
    %1069 = vmatpush1.msra.mxu0 0.0
    %1070 = vmatprep.subr.mxu0 0.0
    %1071 = vmatpush1.msra.mxu0 0.0
    %1072 = vmatprep.subr.mxu0 0.0
    %1073 = vmatpush1.msra.mxu0 0.0
    %1074 = vmatprep.subr.mxu0 0.0
    %1075 = vmatpush1.msra.mxu0 0.0
    %1076 = vmatprep.subr.mxu0 0.0
    %1077 = vmatpush1.msra.mxu0 0.0
    %1078 = vmatprep.subr.mxu0 0.0
    %1079 = vmatpush1.msra.mxu0 0.0
    %1080 = vmatprep.subr.mxu0 0.0
    %1081 = vmatpush1.msra.mxu0 0.0
    %1082 = vmatprep.subr.mxu0 0.0
    %1083 = vmatpush1.msra.mxu0 0.0
    %1084 = vmatprep.subr.mxu0 0.0
    %1085 = vmatpush1.msra.mxu0 0.0
    %1086 = vmatprep.subr.mxu0 0.0
    %1087 = vmatpush1.msra.mxu0 0.0
    %1088 = vmatprep.subr.mxu0 0.0
    %1089 = vmatpush1.msra.mxu0 0.0
    %1090 = vmatprep.subr.mxu0 0.0
    %1091 = vmatpush1.msra.mxu0 0.0
    %1092 = vmatprep.subr.mxu0 0.0
    %1093 = vmatpush1.msra.mxu0 0.0
    %1094 = vmatprep.subr.mxu0 0.0
    %1095 = vmatpush1.msra.mxu0 0.0
    %1096 = vmatprep.subr.mxu0 0.0
    %1097 = vmatpush1.msra.mxu0 0.0
    %1098 = vmatprep.subr.mxu0 0.0
    %1099 = vmatpush1.msra.mxu0 0.0
    %1100 = vmatprep.subr.mxu0 0.0
    %1101 = vmatpush1.msra.mxu0 0.0
    %1102 = vmatprep.subr.mxu0 0.0
    %1103 = vmatpush1.msra.mxu0 0.0
    %1104 = vmatprep.mubr.f32.mxu0 0.0
    %1105 = vmatmul.mubr.f32.gmra.mrb[0].mxu0 %v1031
    %v1106 = vpop.f32.mrb[0].mxu0
    %v1107 = vadd.f32 0.0, %v1106
    %v1108 = vpop.f32.mrb[0].mxu0
    %1109 = vmatprep.mubr.f32.mxu0 0.0
    %1110 = vmatmul.mubr.f32.gmra.mrb[0].mxu0 %v1034
    %v1111 = vpop.f32.mrb[0].mxu0
    %v1112 = vadd.f32 0.0, %v1111
    %v1113 = vpop.f32.mrb[0].mxu0
    %1114 = vdwg.mxu0
    %v1116 = vsel %vm1029, %v855, 0
    %v1119 = vsel %vm1029, %v856, 0
    %v1122 = vsel %vm1036, %v940, 0
    %1124 = vmatprep.subr.mxu0 0.0
    %1125 = vmatpush1.msra.mxu0 %v1122
    %1126 = vmatprep.subr.mxu0 0.0
    %1127 = vmatpush1.msra.mxu0 0.0
    %1128 = vmatprep.subr.mxu0 0.0
    %1129 = vmatpush1.msra.mxu0 0.0
    %1130 = vmatprep.subr.mxu0 0.0
    %1131 = vmatpush1.msra.mxu0 0.0
    %1132 = vmatprep.subr.mxu0 0.0
    %1133 = vmatpush1.msra.mxu0 0.0
    %1134 = vmatprep.subr.mxu0 0.0
    %1135 = vmatpush1.msra.mxu0 0.0
    %1136 = vmatprep.subr.mxu0 0.0
    %1137 = vmatpush1.msra.mxu0 0.0
    %1138 = vmatprep.subr.mxu0 0.0
    %1139 = vmatpush1.msra.mxu0 0.0
    %1140 = vmatprep.subr.mxu0 0.0
    %1141 = vmatpush1.msra.mxu0 0.0
    %1142 = vmatprep.subr.mxu0 0.0
    %1143 = vmatpush1.msra.mxu0 0.0
    %1144 = vmatprep.subr.mxu0 0.0
    %1145 = vmatpush1.msra.mxu0 0.0
    %1146 = vmatprep.subr.mxu0 0.0
    %1147 = vmatpush1.msra.mxu0 0.0
    %1148 = vmatprep.subr.mxu0 0.0
    %1149 = vmatpush1.msra.mxu0 0.0
    %1150 = vmatprep.subr.mxu0 0.0
    %1151 = vmatpush1.msra.mxu0 0.0
    %1152 = vmatprep.subr.mxu0 0.0
    %1153 = vmatpush1.msra.mxu0 0.0
    %1154 = vmatprep.subr.mxu0 0.0
    %1155 = vmatpush1.msra.mxu0 0.0
    %1156 = vmatprep.subr.mxu0 0.0
    %1157 = vmatpush1.msra.mxu0 0.0
    %1158 = vmatprep.subr.mxu0 0.0
    %1159 = vmatpush1.msra.mxu0 0.0
    %1160 = vmatprep.subr.mxu0 0.0
    %1161 = vmatpush1.msra.mxu0 0.0
    %1162 = vmatprep.subr.mxu0 0.0
    %1163 = vmatpush1.msra.mxu0 0.0
    %1164 = vmatprep.subr.mxu0 0.0
    %1165 = vmatpush1.msra.mxu0 0.0
    %1166 = vmatprep.subr.mxu0 0.0
    %1167 = vmatpush1.msra.mxu0 0.0
    %1168 = vmatprep.subr.mxu0 0.0
    %1169 = vmatpush1.msra.mxu0 0.0
    %1170 = vmatprep.subr.mxu0 0.0
    %1171 = vmatpush1.msra.mxu0 0.0
    %1172 = vmatprep.subr.mxu0 0.0
    %1173 = vmatpush1.msra.mxu0 0.0
    %1174 = vmatprep.subr.mxu0 0.0
    %1175 = vmatpush1.msra.mxu0 0.0
    %1176 = vmatprep.subr.mxu0 0.0
    %1177 = vmatpush1.msra.mxu0 0.0
    %1178 = vmatprep.subr.mxu0 0.0
    %1179 = vmatpush1.msra.mxu0 0.0
    %1180 = vmatprep.subr.mxu0 0.0
    %1181 = vmatpush1.msra.mxu0 0.0
    %1182 = vmatprep.subr.mxu0 0.0
    %1183 = vmatpush1.msra.mxu0 0.0
    %1184 = vmatprep.subr.mxu0 0.0
    %1185 = vmatpush1.msra.mxu0 0.0
    %1186 = vmatprep.subr.mxu0 0.0
    %1187 = vmatpush1.msra.mxu0 0.0
    %1188 = vmatprep.mubr.f32.mxu0 0.0
    %1189 = vmatmul.mubr.f32.gmra.mrb[0].mxu0 %v1116
    %v1190 = vpop.f32.mrb[0].mxu0
    %v1191 = vadd.f32 %v1107, %v1190
    %v1192 = vpop.f32.mrb[0].mxu0
    %1193 = vmatprep.mubr.f32.mxu0 0.0
    %1194 = vmatmul.mubr.f32.gmra.mrb[0].mxu0 %v1119
    %v1195 = vpop.f32.mrb[0].mxu0
    %v1196 = vadd.f32 %v1112, %v1195
    %v1197 = vpop.f32.mrb[0].mxu0
    %1198 = vdwg.mxu0
    %s1199 = scalar_lea.vmem [#allocation11], 32
    %v1200 = vld [vmem:[%s1199] sm:$0xff]
    %v1201 = vld [vmem:[%s1199 + $0x8] sm:$0x3f]
    %s1202 = scalar_lea.vmem [#allocation13], 192
    %v1203 = vld [vmem:[%s1202] sm:$0xff]
    %v1204 = vld [vmem:[%s1202 + $0x8] sm:$0xff]
    %v1205 = vld [vmem:[%s1202 + $0x10] sm:$0xff]
    %v1206 = vld [vmem:[%s1202 + $0x18] sm:$0xff]
    %v1207 = vld [vmem:[%s1202 + $0x20] sm:$0xff]
    %v1208 = vld [vmem:[%s1202 + $0x28] sm:$0xff]
    %v1209 = vld [vmem:[%s1202 + $0x30] sm:$0xff]
    %v1210 = vld [vmem:[%s1202 + $0x38] sm:$0xff]
    %v1211 = vld [vmem:[%s1202 + $0x40] sm:$0xff]
    %v1212 = vld [vmem:[%s1202 + $0x48] sm:$0xff]
    %v1213 = vld [vmem:[%s1202 + $0x50] sm:$0xff]
    %v1214 = vld [vmem:[%s1202 + $0x58] sm:$0xff]
    %1215 = vmatprep.subr.mxu0 0.0
    %1216 = vmatpush1.msra.mxu0 %v1203
    %1217 = vmatprep.subr.mxu0 0.0
    %1218 = vmatpush1.msra.mxu0 %v1204
    %1219 = vmatprep.subr.mxu0 0.0
    %1220 = vmatpush1.msra.mxu0 %v1205
    %1221 = vmatprep.subr.mxu0 0.0
    %1222 = vmatpush1.msra.mxu0 %v1206
    %1223 = vmatprep.subr.mxu0 0.0
    %1224 = vmatpush1.msra.mxu0 %v1207
    %1225 = vmatprep.subr.mxu0 0.0
    %1226 = vmatpush1.msra.mxu0 %v1208
    %1227 = vmatprep.subr.mxu0 0.0
    %1228 = vmatpush1.msra.mxu0 %v1209
    %1229 = vmatprep.subr.mxu0 0.0
    %1230 = vmatpush1.msra.mxu0 %v1210
    %1231 = vmatprep.subr.mxu0 0.0
    %1232 = vmatpush1.msra.mxu0 %v1211
    %1233 = vmatprep.subr.mxu0 0.0
    %1234 = vmatpush1.msra.mxu0 %v1212
    %1235 = vmatprep.subr.mxu0 0.0
    %1236 = vmatpush1.msra.mxu0 %v1213
    %1237 = vmatprep.subr.mxu0 0.0
    %1238 = vmatpush1.msra.mxu0 %v1214
    %1239 = vmatprep.subr.mxu0 0.0
    %1240 = vmatpush1.msra.mxu0 0.0
    %1241 = vmatprep.subr.mxu0 0.0
    %1242 = vmatpush1.msra.mxu0 0.0
    %1243 = vmatprep.subr.mxu0 0.0
    %1244 = vmatpush1.msra.mxu0 0.0
    %1245 = vmatprep.subr.mxu0 0.0
    %1246 = vmatpush1.msra.mxu0 0.0
    %1247 = vmatprep.subr.mxu0 0.0
    %1248 = vmatpush1.msra.mxu0 0.0
    %1249 = vmatprep.subr.mxu0 0.0
    %1250 = vmatpush1.msra.mxu0 0.0
    %1251 = vmatprep.subr.mxu0 0.0
    %1252 = vmatpush1.msra.mxu0 0.0
    %1253 = vmatprep.subr.mxu0 0.0
    %1254 = vmatpush1.msra.mxu0 0.0
    %1255 = vmatprep.subr.mxu0 0.0
    %1256 = vmatpush1.msra.mxu0 0.0
    %1257 = vmatprep.subr.mxu0 0.0
    %1258 = vmatpush1.msra.mxu0 0.0
    %1259 = vmatprep.subr.mxu0 0.0
    %1260 = vmatpush1.msra.mxu0 0.0
    %1261 = vmatprep.subr.mxu0 0.0
    %1262 = vmatpush1.msra.mxu0 0.0
    %1263 = vmatprep.subr.mxu0 0.0
    %1264 = vmatpush1.msra.mxu0 0.0
    %1265 = vmatprep.subr.mxu0 0.0
    %1266 = vmatpush1.msra.mxu0 0.0
    %1267 = vmatprep.subr.mxu0 0.0
    %1268 = vmatpush1.msra.mxu0 0.0
    %1269 = vmatprep.subr.mxu0 0.0
    %1270 = vmatpush1.msra.mxu0 0.0
    %1271 = vmatprep.subr.mxu0 0.0
    %1272 = vmatpush1.msra.mxu0 0.0
    %1273 = vmatprep.subr.mxu0 0.0
    %1274 = vmatpush1.msra.mxu0 0.0
    %1275 = vmatprep.subr.mxu0 0.0
    %1276 = vmatpush1.msra.mxu0 0.0
    %1277 = vmatprep.subr.mxu0 0.0
    %1278 = vmatpush1.msra.mxu0 0.0
    %1279 = vmatprep.mubr.f32.mxu0 0.0
    %1280 = vmatmul.mubr.f32.gmra.mrb[0].mxu0 %v871
    %v1281 = vpop.f32.mrb[0].mxu0
    %v1282 = vadd.f32 0.0, %v1281
    %v1283 = vpop.f32.mrb[0].mxu0
    %1284 = vdwg.mxu0
    %v1286 = vsel %vm1029, %v1200, 0
    %v1289 = vsel %vm1029, %v1201, 0
    %v1292 = vsel %vm1036, %v1282, 0
    %1294 = vmatprep.subr.mxu0 0.0
    %1295 = vmatpush1.msra.mxu0 %v1292
    %1296 = vmatprep.subr.mxu0 0.0
    %1297 = vmatpush1.msra.mxu0 0.0
    %1298 = vmatprep.subr.mxu0 0.0
    %1299 = vmatpush1.msra.mxu0 0.0
    %1300 = vmatprep.subr.mxu0 0.0
    %1301 = vmatpush1.msra.mxu0 0.0
    %1302 = vmatprep.subr.mxu0 0.0
    %1303 = vmatpush1.msra.mxu0 0.0
    %1304 = vmatprep.subr.mxu0 0.0
    %1305 = vmatpush1.msra.mxu0 0.0
    %1306 = vmatprep.subr.mxu0 0.0
    %1307 = vmatpush1.msra.mxu0 0.0
    %1308 = vmatprep.subr.mxu0 0.0
    %1309 = vmatpush1.msra.mxu0 0.0
    %1310 = vmatprep.subr.mxu0 0.0
    %1311 = vmatpush1.msra.mxu0 0.0
    %1312 = vmatprep.subr.mxu0 0.0
    %1313 = vmatpush1.msra.mxu0 0.0
    %1314 = vmatprep.subr.mxu0 0.0
    %1315 = vmatpush1.msra.mxu0 0.0
    %1316 = vmatprep.subr.mxu0 0.0
    %1317 = vmatpush1.msra.mxu0 0.0
    %1318 = vmatprep.subr.mxu0 0.0
    %1319 = vmatpush1.msra.mxu0 0.0
    %1320 = vmatprep.subr.mxu0 0.0
    %1321 = vmatpush1.msra.mxu0 0.0
    %1322 = vmatprep.subr.mxu0 0.0
    %1323 = vmatpush1.msra.mxu0 0.0
    %1324 = vmatprep.subr.mxu0 0.0
    %1325 = vmatpush1.msra.mxu0 0.0
    %1326 = vmatprep.subr.mxu0 0.0
    %1327 = vmatpush1.msra.mxu0 0.0
    %1328 = vmatprep.subr.mxu0 0.0
    %1329 = vmatpush1.msra.mxu0 0.0
    %1330 = vmatprep.subr.mxu0 0.0
    %1331 = vmatpush1.msra.mxu0 0.0
    %1332 = vmatprep.subr.mxu0 0.0
    %1333 = vmatpush1.msra.mxu0 0.0
    %1334 = vmatprep.subr.mxu0 0.0
    %1335 = vmatpush1.msra.mxu0 0.0
    %1336 = vmatprep.subr.mxu0 0.0
    %1337 = vmatpush1.msra.mxu0 0.0
    %1338 = vmatprep.subr.mxu0 0.0
    %1339 = vmatpush1.msra.mxu0 0.0
    %1340 = vmatprep.subr.mxu0 0.0
    %1341 = vmatpush1.msra.mxu0 0.0
    %1342 = vmatprep.subr.mxu0 0.0
    %1343 = vmatpush1.msra.mxu0 0.0
    %1344 = vmatprep.subr.mxu0 0.0
    %1345 = vmatpush1.msra.mxu0 0.0
    %1346 = vmatprep.subr.mxu0 0.0
    %1347 = vmatpush1.msra.mxu0 0.0
    %1348 = vmatprep.subr.mxu0 0.0
    %1349 = vmatpush1.msra.mxu0 0.0
    %1350 = vmatprep.subr.mxu0 0.0
    %1351 = vmatpush1.msra.mxu0 0.0
    %1352 = vmatprep.subr.mxu0 0.0
    %1353 = vmatpush1.msra.mxu0 0.0
    %1354 = vmatprep.subr.mxu0 0.0
    %1355 = vmatpush1.msra.mxu0 0.0
    %1356 = vmatprep.subr.mxu0 0.0
    %1357 = vmatpush1.msra.mxu0 0.0
    %1358 = vmatprep.mubr.f32.mxu0 0.0
    %1359 = vmatmul.mubr.f32.gmra.mrb[0].mxu0 %v1286
    %v1360 = vpop.f32.mrb[0].mxu0
    %v1361 = vadd.f32 0.0, %v1360
    %v1362 = vpop.f32.mrb[0].mxu0
    %1363 = vmatprep.mubr.f32.mxu0 0.0
    %1364 = vmatmul.mubr.f32.gmra.mrb[0].mxu0 %v1289
    %v1365 = vpop.f32.mrb[0].mxu0
    %v1366 = vadd.f32 0.0, %v1365
    %v1367 = vpop.f32.mrb[0].mxu0
    %1368 = vdwg.mxu0
    %v1369 = vadd.f32 %v1191, %v1361
    %v1370 = vadd.f32 %v1196, %v1366
    %v1371 = vld [vmem:[%s8] sm:$0x1]
    %v1373 = vlaneseq
    %v1374 = vshrl.u32 %v1373, 7
    %v1375 = vsub.s32 0, %v1374
    %v1376 = vrot.slane %v1371, %v1375
    %v1378 = vadd.f32 %v1369, %v1376
    %v1379 = vadd.f32 %v1370, %v1376
    %vm1380 = vcmask 916480
    %v1381 = vsel %vm1380, %v1378, 0.0
    %vm1382 = vcmask 914432
    %v1383 = vsel %vm1382, %v1379, 0.0
    %v1384 = vadd.f32 %v1381, %v1383
    %v1385 = vrot.slane %v1384, 4
    %v1386 = vadd.f32 %v1384, %v1385
    %v1387 = vrot.slane %v1386, 2
    %v1388 = vadd.f32 %v1386, %v1387
    %v1389 = vrot.slane %v1388, 1
    %v1390 = vadd.f32 %v1388, %v1389
    %v1391 = vld [vmem:[#allocation14] sm:$0xff]
    %v1392 = vld [vmem:[#allocation14 + $0x8] sm:$0xff]
    %v1393 = vld [vmem:[#allocation14 + $0x10] sm:$0xff]
    %v1394 = vld [vmem:[#allocation14 + $0x18] sm:$0xff]
    %v1395 = vld [vmem:[#allocation14 + $0x20] sm:$0xff]
    %v1396 = vld [vmem:[#allocation14 + $0x28] sm:$0xff]
    %v1397 = vld [vmem:[#allocation14 + $0x30] sm:$0xff]
    %v1398 = vld [vmem:[#allocation14 + $0x38] sm:$0xff]
    %v1399 = vld [vmem:[#allocation14 + $0x40] sm:$0xff]
    %v1400 = vld [vmem:[#allocation14 + $0x48] sm:$0xff]
    %v1401 = vld [vmem:[#allocation14 + $0x50] sm:$0xff]
    %v1402 = vld [vmem:[#allocation14 + $0x58] sm:$0xff]
    %v1403 = vld [vmem:[#allocation14 + $0x60] sm:$0xff]
    %v1404 = vld [vmem:[#allocation14 + $0x68] sm:$0xff]
    %v1406 = vsel %vm1380, %v1390, 0
    %1408 = vmatprep.subr.mxu0 0.0
    %1409 = vmatpush1.msra.mxu0 %v1391
    %1410 = vmatprep.subr.mxu0 0.0
    %1411 = vmatpush1.msra.mxu0 %v1392
    %1412 = vmatprep.subr.mxu0 0.0
    %1413 = vmatpush1.msra.mxu0 %v1393
    %1414 = vmatprep.subr.mxu0 0.0
    %1415 = vmatpush1.msra.mxu0 %v1394
    %1416 = vmatprep.subr.mxu0 0.0
    %1417 = vmatpush1.msra.mxu0 %v1395
    %1418 = vmatprep.subr.mxu0 0.0
    %1419 = vmatpush1.msra.mxu0 %v1396
    %1420 = vmatprep.subr.mxu0 0.0
    %1421 = vmatpush1.msra.mxu0 %v1397
    %1422 = vmatprep.subr.mxu0 0.0
    %1423 = vmatpush1.msra.mxu0 %v1398
    %1424 = vmatprep.subr.mxu0 0.0
    %1425 = vmatpush1.msra.mxu0 %v1399
    %1426 = vmatprep.subr.mxu0 0.0
    %1427 = vmatpush1.msra.mxu0 %v1400
    %1428 = vmatprep.subr.mxu0 0.0
    %1429 = vmatpush1.msra.mxu0 %v1401
    %1430 = vmatprep.subr.mxu0 0.0
    %1431 = vmatpush1.msra.mxu0 %v1402
    %1432 = vmatprep.subr.mxu0 0.0
    %1433 = vmatpush1.msra.mxu0 %v1403
    %1434 = vmatprep.subr.mxu0 0.0
    %1435 = vmatpush1.msra.mxu0 %v1404
    %1436 = vmatprep.subr.mxu0 0.0
    %1437 = vmatpush1.msra.mxu0 0.0
    %1438 = vmatprep.subr.mxu0 0.0
    %1439 = vmatpush1.msra.mxu0 0.0
    %1440 = vmatprep.subr.mxu0 0.0
    %1441 = vmatpush1.msra.mxu0 0.0
    %1442 = vmatprep.subr.mxu0 0.0
    %1443 = vmatpush1.msra.mxu0 0.0
    %1444 = vmatprep.subr.mxu0 0.0
    %1445 = vmatpush1.msra.mxu0 0.0
    %1446 = vmatprep.subr.mxu0 0.0
    %1447 = vmatpush1.msra.mxu0 0.0
    %1448 = vmatprep.subr.mxu0 0.0
    %1449 = vmatpush1.msra.mxu0 0.0
    %1450 = vmatprep.subr.mxu0 0.0
    %1451 = vmatpush1.msra.mxu0 0.0
    %1452 = vmatprep.subr.mxu0 0.0
    %1453 = vmatpush1.msra.mxu0 0.0
    %1454 = vmatprep.subr.mxu0 0.0
    %1455 = vmatpush1.msra.mxu0 0.0
    %1456 = vmatprep.subr.mxu0 0.0
    %1457 = vmatpush1.msra.mxu0 0.0
    %1458 = vmatprep.subr.mxu0 0.0
    %1459 = vmatpush1.msra.mxu0 0.0
    %1460 = vmatprep.subr.mxu0 0.0
    %1461 = vmatpush1.msra.mxu0 0.0
    %1462 = vmatprep.subr.mxu0 0.0
    %1463 = vmatpush1.msra.mxu0 0.0
    %1464 = vmatprep.subr.mxu0 0.0
    %1465 = vmatpush1.msra.mxu0 0.0
    %1466 = vmatprep.subr.mxu0 0.0
    %1467 = vmatpush1.msra.mxu0 0.0
    %1468 = vmatprep.subr.mxu0 0.0
    %1469 = vmatpush1.msra.mxu0 0.0
    %1470 = vmatprep.subr.mxu0 0.0
    %1471 = vmatpush1.msra.mxu0 0.0
    %1472 = vmatprep.mubr.f32.mxu0 0.0
    %1473 = vmatmul.mubr.f32.gmra.mrb[0].mxu0 %v1406
    %v1474 = vpop.f32.mrb[0].mxu0
    %v1475 = vadd.f32 0.0, %v1474
    %v1476 = vpop.f32.mrb[0].mxu0
    %1477 = vdwg.mxu0
    %v1478 = vmul.f32 %v1475, 0.010204081
    %v1479 = vld [vmem:[%s10] sm:$0xff]
    %v1480 = vld [vmem:[%s10 + $0x8] sm:$0xff]
    %vm1481 = vcmask 130048
    %v1483 = vsel %vm1481, %v1478, 0
    %1485 = vmatprep.subr.mxu0 0.0
    %1486 = vmatpush1.msra.mxu0 %v1479
    %1487 = vmatprep.subr.mxu0 0.0
    %1488 = vmatpush1.msra.mxu0 %v1480
    %1489 = vmatprep.subr.mxu0 0.0
    %1490 = vmatpush1.msra.mxu0 0.0
    %1491 = vmatprep.subr.mxu0 0.0
    %1492 = vmatpush1.msra.mxu0 0.0
    %1493 = vmatprep.subr.mxu0 0.0
    %1494 = vmatpush1.msra.mxu0 0.0
    %1495 = vmatprep.subr.mxu0 0.0
    %1496 = vmatpush1.msra.mxu0 0.0
    %1497 = vmatprep.subr.mxu0 0.0
    %1498 = vmatpush1.msra.mxu0 0.0
    %1499 = vmatprep.subr.mxu0 0.0
    %1500 = vmatpush1.msra.mxu0 0.0
    %1501 = vmatprep.subr.mxu0 0.0
    %1502 = vmatpush1.msra.mxu0 0.0
    %1503 = vmatprep.subr.mxu0 0.0
    %1504 = vmatpush1.msra.mxu0 0.0
    %1505 = vmatprep.subr.mxu0 0.0
    %1506 = vmatpush1.msra.mxu0 0.0
    %1507 = vmatprep.subr.mxu0 0.0
    %1508 = vmatpush1.msra.mxu0 0.0
    %1509 = vmatprep.subr.mxu0 0.0
    %1510 = vmatpush1.msra.mxu0 0.0
    %1511 = vmatprep.subr.mxu0 0.0
    %1512 = vmatpush1.msra.mxu0 0.0
    %1513 = vmatprep.subr.mxu0 0.0
    %1514 = vmatpush1.msra.mxu0 0.0
    %1515 = vmatprep.subr.mxu0 0.0
    %1516 = vmatpush1.msra.mxu0 0.0
    %1517 = vmatprep.subr.mxu0 0.0
    %1518 = vmatpush1.msra.mxu0 0.0
    %1519 = vmatprep.subr.mxu0 0.0
    %1520 = vmatpush1.msra.mxu0 0.0
    %1521 = vmatprep.subr.mxu0 0.0
    %1522 = vmatpush1.msra.mxu0 0.0
    %1523 = vmatprep.subr.mxu0 0.0
    %1524 = vmatpush1.msra.mxu0 0.0
    %1525 = vmatprep.subr.mxu0 0.0
    %1526 = vmatpush1.msra.mxu0 0.0
    %1527 = vmatprep.subr.mxu0 0.0
    %1528 = vmatpush1.msra.mxu0 0.0
    %1529 = vmatprep.subr.mxu0 0.0
    %1530 = vmatpush1.msra.mxu0 0.0
    %1531 = vmatprep.subr.mxu0 0.0
    %1532 = vmatpush1.msra.mxu0 0.0
    %1533 = vmatprep.subr.mxu0 0.0
    %1534 = vmatpush1.msra.mxu0 0.0
    %1535 = vmatprep.subr.mxu0 0.0
    %1536 = vmatpush1.msra.mxu0 0.0
    %1537 = vmatprep.subr.mxu0 0.0
    %1538 = vmatpush1.msra.mxu0 0.0
    %1539 = vmatprep.subr.mxu0 0.0
    %1540 = vmatpush1.msra.mxu0 0.0
    %1541 = vmatprep.subr.mxu0 0.0
    %1542 = vmatpush1.msra.mxu0 0.0
    %1543 = vmatprep.subr.mxu0 0.0
    %1544 = vmatpush1.msra.mxu0 0.0
    %1545 = vmatprep.subr.mxu0 0.0
    %1546 = vmatpush1.msra.mxu0 0.0
    %1547 = vmatprep.subr.mxu0 0.0
    %1548 = vmatpush1.msra.mxu0 0.0
    %1549 = vmatprep.mubr.f32.mxu0 0.0
    %1550 = vmatmul.mubr.f32.gmra.mrb[0].mxu0 %v1483
    %v1551 = vpop.f32.mrb[0].mxu0
    %v1552 = vadd.f32 0.0, %v1551
    %v1553 = vpop.f32.mrb[0].mxu0
    %1554 = vdwg.mxu0
    %v1555 = vlaneseq
    %v1556 = vshrl.u32 %v1555, 7
    %v1557 = vsub.s32 0, %v1556
    %v1558 = vrot.slane %v1552, %v1557
    %v1559 = vsub.f32 %v1378, %v1558
    %v1560 = vsub.f32 %v1379, %v1558
    %v1561 = vmul.f32 %v1559, %v1559
    %v1562 = vmul.f32 %v1560, %v1560
    %v1563 = vsel %vm1380, %v1561, 0.0
    %v1564 = vsel %vm1382, %v1562, 0.0
    %v1565 = vadd.f32 %v1563, %v1564
    %v1566 = vrot.slane %v1565, 4
    %v1567 = vadd.f32 %v1565, %v1566
    %v1568 = vrot.slane %v1567, 2
    %v1569 = vadd.f32 %v1567, %v1568
    %v1570 = vrot.slane %v1569, 1
    %v1571 = vadd.f32 %v1569, %v1570
    %v1573 = vsel %vm1380, %v1571, 0
    %1575 = vmatprep.subr.mxu0 0.0
    %1576 = vmatpush1.msra.mxu0 %v1391
    %1577 = vmatprep.subr.mxu0 0.0
    %1578 = vmatpush1.msra.mxu0 %v1392
    %1579 = vmatprep.subr.mxu0 0.0
    %1580 = vmatpush1.msra.mxu0 %v1393
    %1581 = vmatprep.subr.mxu0 0.0
    %1582 = vmatpush1.msra.mxu0 %v1394
    %1583 = vmatprep.subr.mxu0 0.0
    %1584 = vmatpush1.msra.mxu0 %v1395
    %1585 = vmatprep.subr.mxu0 0.0
    %1586 = vmatpush1.msra.mxu0 %v1396
    %1587 = vmatprep.subr.mxu0 0.0
    %1588 = vmatpush1.msra.mxu0 %v1397
    %1589 = vmatprep.subr.mxu0 0.0
    %1590 = vmatpush1.msra.mxu0 %v1398
    %1591 = vmatprep.subr.mxu0 0.0
    %1592 = vmatpush1.msra.mxu0 %v1399
    %1593 = vmatprep.subr.mxu0 0.0
    %1594 = vmatpush1.msra.mxu0 %v1400
    %1595 = vmatprep.subr.mxu0 0.0
    %1596 = vmatpush1.msra.mxu0 %v1401
    %1597 = vmatprep.subr.mxu0 0.0
    %1598 = vmatpush1.msra.mxu0 %v1402
    %1599 = vmatprep.subr.mxu0 0.0
    %1600 = vmatpush1.msra.mxu0 %v1403
    %1601 = vmatprep.subr.mxu0 0.0
    %1602 = vmatpush1.msra.mxu0 %v1404
    %1603 = vmatprep.subr.mxu0 0.0
    %1604 = vmatpush1.msra.mxu0 0.0
    %1605 = vmatprep.subr.mxu0 0.0
    %1606 = vmatpush1.msra.mxu0 0.0
    %1607 = vmatprep.subr.mxu0 0.0
    %1608 = vmatpush1.msra.mxu0 0.0
    %1609 = vmatprep.subr.mxu0 0.0
    %1610 = vmatpush1.msra.mxu0 0.0
    %1611 = vmatprep.subr.mxu0 0.0
    %1612 = vmatpush1.msra.mxu0 0.0
    %1613 = vmatprep.subr.mxu0 0.0
    %1614 = vmatpush1.msra.mxu0 0.0
    %1615 = vmatprep.subr.mxu0 0.0
    %1616 = vmatpush1.msra.mxu0 0.0
    %1617 = vmatprep.subr.mxu0 0.0
    %1618 = vmatpush1.msra.mxu0 0.0
    %1619 = vmatprep.subr.mxu0 0.0
    %1620 = vmatpush1.msra.mxu0 0.0
    %1621 = vmatprep.subr.mxu0 0.0
    %1622 = vmatpush1.msra.mxu0 0.0
    %1623 = vmatprep.subr.mxu0 0.0
    %1624 = vmatpush1.msra.mxu0 0.0
    %1625 = vmatprep.subr.mxu0 0.0
    %1626 = vmatpush1.msra.mxu0 0.0
    %1627 = vmatprep.subr.mxu0 0.0
    %1628 = vmatpush1.msra.mxu0 0.0
    %1629 = vmatprep.subr.mxu0 0.0
    %1630 = vmatpush1.msra.mxu0 0.0
    %1631 = vmatprep.subr.mxu0 0.0
    %1632 = vmatpush1.msra.mxu0 0.0
    %1633 = vmatprep.subr.mxu0 0.0
    %1634 = vmatpush1.msra.mxu0 0.0
    %1635 = vmatprep.subr.mxu0 0.0
    %1636 = vmatpush1.msra.mxu0 0.0
    %1637 = vmatprep.subr.mxu0 0.0
    %1638 = vmatpush1.msra.mxu0 0.0
    %1639 = vmatprep.mubr.f32.mxu0 0.0
    %1640 = vmatmul.mubr.f32.gmra.mrb[0].mxu0 %v1573
    %v1641 = vpop.f32.mrb[0].mxu0
    %v1642 = vadd.f32 0.0, %v1641
    %v1643 = vpop.f32.mrb[0].mxu0
    %1644 = vdwg.mxu0
    %v1645 = vmul.f32 %v1642, 0.010204081
    %v1646 = vadd.f32 %v1645, 1e-05
    %v1647 = vrsqrt.pop %v1646
    %v1649 = vsel %vm1481, %v1647, 0
    %1651 = vmatprep.subr.mxu0 0.0
    %1652 = vmatpush1.msra.mxu0 %v1479
    %1653 = vmatprep.subr.mxu0 0.0
    %1654 = vmatpush1.msra.mxu0 %v1480
    %1655 = vmatprep.subr.mxu0 0.0
    %1656 = vmatpush1.msra.mxu0 0.0
    %1657 = vmatprep.subr.mxu0 0.0
    %1658 = vmatpush1.msra.mxu0 0.0
    %1659 = vmatprep.subr.mxu0 0.0
    %1660 = vmatpush1.msra.mxu0 0.0
    %1661 = vmatprep.subr.mxu0 0.0
    %1662 = vmatpush1.msra.mxu0 0.0
    %1663 = vmatprep.subr.mxu0 0.0
    %1664 = vmatpush1.msra.mxu0 0.0
    %1665 = vmatprep.subr.mxu0 0.0
    %1666 = vmatpush1.msra.mxu0 0.0
    %1667 = vmatprep.subr.mxu0 0.0
    %1668 = vmatpush1.msra.mxu0 0.0
    %1669 = vmatprep.subr.mxu0 0.0
    %1670 = vmatpush1.msra.mxu0 0.0
    %1671 = vmatprep.subr.mxu0 0.0
    %1672 = vmatpush1.msra.mxu0 0.0
    %1673 = vmatprep.subr.mxu0 0.0
    %1674 = vmatpush1.msra.mxu0 0.0
    %1675 = vmatprep.subr.mxu0 0.0
    %1676 = vmatpush1.msra.mxu0 0.0
    %1677 = vmatprep.subr.mxu0 0.0
    %1678 = vmatpush1.msra.mxu0 0.0
    %1679 = vmatprep.subr.mxu0 0.0
    %1680 = vmatpush1.msra.mxu0 0.0
    %1681 = vmatprep.subr.mxu0 0.0
    %1682 = vmatpush1.msra.mxu0 0.0
    %1683 = vmatprep.subr.mxu0 0.0
    %1684 = vmatpush1.msra.mxu0 0.0
    %1685 = vmatprep.subr.mxu0 0.0
    %1686 = vmatpush1.msra.mxu0 0.0
    %1687 = vmatprep.subr.mxu0 0.0
    %1688 = vmatpush1.msra.mxu0 0.0
    %1689 = vmatprep.subr.mxu0 0.0
    %1690 = vmatpush1.msra.mxu0 0.0
    %1691 = vmatprep.subr.mxu0 0.0
    %1692 = vmatpush1.msra.mxu0 0.0
    %1693 = vmatprep.subr.mxu0 0.0
    %1694 = vmatpush1.msra.mxu0 0.0
    %1695 = vmatprep.subr.mxu0 0.0
    %1696 = vmatpush1.msra.mxu0 0.0
    %1697 = vmatprep.subr.mxu0 0.0
    %1698 = vmatpush1.msra.mxu0 0.0
    %1699 = vmatprep.subr.mxu0 0.0
    %1700 = vmatpush1.msra.mxu0 0.0
    %1701 = vmatprep.subr.mxu0 0.0
    %1702 = vmatpush1.msra.mxu0 0.0
    %1703 = vmatprep.subr.mxu0 0.0
    %1704 = vmatpush1.msra.mxu0 0.0
    %1705 = vmatprep.subr.mxu0 0.0
    %1706 = vmatpush1.msra.mxu0 0.0
    %1707 = vmatprep.subr.mxu0 0.0
    %1708 = vmatpush1.msra.mxu0 0.0
    %1709 = vmatprep.subr.mxu0 0.0
    %1710 = vmatpush1.msra.mxu0 0.0
    %1711 = vmatprep.subr.mxu0 0.0
    %1712 = vmatpush1.msra.mxu0 0.0
    %1713 = vmatprep.subr.mxu0 0.0
    %1714 = vmatpush1.msra.mxu0 0.0
    %1715 = vmatprep.mubr.f32.mxu0 0.0
    %1716 = vmatmul.mubr.f32.gmra.mrb[0].mxu0 %v1649
    %v1717 = vpop.f32.mrb[0].mxu0
    %v1718 = vadd.f32 0.0, %v1717
    %v1719 = vpop.f32.mrb[0].mxu0
    %1720 = vdwg.mxu0
    %v1721 = vlaneseq
    %v1722 = vshrl.u32 %v1721, 7
    %v1723 = vsub.s32 0, %v1722
    %v1724 = vrot.slane %v1718, %v1723
    %v1725 = vmul.f32 %v1559, %v1724
    %v1726 = vmul.f32 %v1560, %v1724
    %v1727 = vld [vmem:[%s11] sm:$0x1]
    %v1729 = vlaneseq
    %v1730 = vshrl.u32 %v1729, 7
    %v1731 = vsub.s32 0, %v1730
    %v1732 = vrot.slane %v1727, %v1731
    %v1734 = vmul.f32 %v1725, %v1732
    %v1735 = vmul.f32 %v1726, %v1732
    %v1736 = vld [vmem:[%s12] sm:$0x1]
    %v1738 = vlaneseq
    %v1739 = vshrl.u32 %v1738, 7
    %v1740 = vsub.s32 0, %v1739
    %v1741 = vrot.slane %v1736, %v1740
    %v1743 = vadd.f32 %v1734, %v1741
    %v1744 = vadd.f32 %v1735, %v1741
    %v1745 = vmax.f32 %v1743, 0.0
    %v1746 = vmax.f32 %v1744, 0.0
    %v1747 = vld [vmem:[#allocation16] sm:$0xff]
    %v1748 = vld [vmem:[#allocation16 + $0x8] sm:$0xff]
    %v1749 = vld [vmem:[#allocation16 + $0x10] sm:$0xff]
    %v1750 = vld [vmem:[#allocation16 + $0x18] sm:$0xf]
    %v1751 = vld [vmem:[#allocation17] sm:$0xff]
    %v1752 = vld [vmem:[#allocation17 + $0x8] sm:$0xff]
    %v1753 = vld [vmem:[#allocation17 + $0x10] sm:$0xff]
    %v1754 = vld [vmem:[#allocation17 + $0x18] sm:$0xff]
    %v1755 = vld [vmem:[#allocation17 + $0x20] sm:$0xff]
    %v1756 = vld [vmem:[#allocation17 + $0x28] sm:$0xff]
    %v1757 = vld [vmem:[#allocation17 + $0x30] sm:$0xff]
    %v1758 = vld [vmem:[#allocation17 + $0x38] sm:$0xff]
    %v1759 = vld [vmem:[#allocation17 + $0x40] sm:$0xff]
    %v1760 = vld [vmem:[#allocation17 + $0x48] sm:$0xff]
    %v1761 = vld [vmem:[#allocation17 + $0x50] sm:$0xff]
    %v1762 = vld [vmem:[#allocation17 + $0x58] sm:$0xff]
    %v1763 = vld [vmem:[#allocation17 + $0x60] sm:$0xff]
    %v1764 = vld [vmem:[#allocation17 + $0x68] sm:$0xff]
    %v1766 = vsel %vm1380, %v1745, 0
    %v1769 = vsel %vm1380, %v1746, 0
    %1771 = vmatprep.subr.mxu0 0.0
    %1772 = vmatpush1.msra.mxu0 %v1751
    %1773 = vmatprep.subr.mxu0 0.0
    %1774 = vmatpush1.msra.mxu0 %v1752
    %1775 = vmatprep.subr.mxu0 0.0
    %1776 = vmatpush1.msra.mxu0 %v1753
    %1777 = vmatprep.subr.mxu0 0.0
    %1778 = vmatpush1.msra.mxu0 %v1754
    %1779 = vmatprep.subr.mxu0 0.0
    %1780 = vmatpush1.msra.mxu0 %v1755
    %1781 = vmatprep.subr.mxu0 0.0
    %1782 = vmatpush1.msra.mxu0 %v1756
    %1783 = vmatprep.subr.mxu0 0.0
    %1784 = vmatpush1.msra.mxu0 %v1757
    %1785 = vmatprep.subr.mxu0 0.0
    %1786 = vmatpush1.msra.mxu0 %v1758
    %1787 = vmatprep.subr.mxu0 0.0
    %1788 = vmatpush1.msra.mxu0 %v1759
    %1789 = vmatprep.subr.mxu0 0.0
    %1790 = vmatpush1.msra.mxu0 %v1760
    %1791 = vmatprep.subr.mxu0 0.0
    %1792 = vmatpush1.msra.mxu0 %v1761
    %1793 = vmatprep.subr.mxu0 0.0
    %1794 = vmatpush1.msra.mxu0 %v1762
    %1795 = vmatprep.subr.mxu0 0.0
    %1796 = vmatpush1.msra.mxu0 %v1763
    %1797 = vmatprep.subr.mxu0 0.0
    %1798 = vmatpush1.msra.mxu0 %v1764
    %1799 = vmatprep.subr.mxu0 0.0
    %1800 = vmatpush1.msra.mxu0 0.0
    %1801 = vmatprep.subr.mxu0 0.0
    %1802 = vmatpush1.msra.mxu0 0.0
    %1803 = vmatprep.subr.mxu0 0.0
    %1804 = vmatpush1.msra.mxu0 0.0
    %1805 = vmatprep.subr.mxu0 0.0
    %1806 = vmatpush1.msra.mxu0 0.0
    %1807 = vmatprep.subr.mxu0 0.0
    %1808 = vmatpush1.msra.mxu0 0.0
    %1809 = vmatprep.subr.mxu0 0.0
    %1810 = vmatpush1.msra.mxu0 0.0
    %1811 = vmatprep.subr.mxu0 0.0
    %1812 = vmatpush1.msra.mxu0 0.0
    %1813 = vmatprep.subr.mxu0 0.0
    %1814 = vmatpush1.msra.mxu0 0.0
    %1815 = vmatprep.subr.mxu0 0.0
    %1816 = vmatpush1.msra.mxu0 0.0
    %1817 = vmatprep.subr.mxu0 0.0
    %1818 = vmatpush1.msra.mxu0 0.0
    %1819 = vmatprep.subr.mxu0 0.0
    %1820 = vmatpush1.msra.mxu0 0.0
    %1821 = vmatprep.subr.mxu0 0.0
    %1822 = vmatpush1.msra.mxu0 0.0
    %1823 = vmatprep.subr.mxu0 0.0
    %1824 = vmatpush1.msra.mxu0 0.0
    %1825 = vmatprep.subr.mxu0 0.0
    %1826 = vmatpush1.msra.mxu0 0.0
    %1827 = vmatprep.subr.mxu0 0.0
    %1828 = vmatpush1.msra.mxu0 0.0
    %1829 = vmatprep.subr.mxu0 0.0
    %1830 = vmatpush1.msra.mxu0 0.0
    %1831 = vmatprep.subr.mxu0 0.0
    %1832 = vmatpush1.msra.mxu0 0.0
    %1833 = vmatprep.subr.mxu0 0.0
    %1834 = vmatpush1.msra.mxu0 0.0
    %1835 = vmatprep.mubr.f32.mxu0 0.0
    %1836 = vmatmul.mubr.f32.gmra.mrb[0].mxu0 %v1766
    %v1837 = vpop.f32.mrb[0].mxu0
    %v1838 = vadd.f32 0.0, %v1837
    %v1839 = vpop.f32.mrb[0].mxu0
    %1840 = vmatprep.mubr.f32.mxu0 0.0
    %1841 = vmatmul.mubr.f32.gmra.mrb[0].mxu0 %v1769
    %v1842 = vpop.f32.mrb[0].mxu0
    %v1843 = vadd.f32 0.0, %v1842
    %v1844 = vpop.f32.mrb[0].mxu0
    %1845 = vdwg.mxu0
    %s1846 = scalar_lea.vmem [#allocation16], 32
    %v1847 = vld [vmem:[%s1846] sm:$0xff]
    %v1848 = vld [vmem:[%s1846 + $0x8] sm:$0xff]
    %v1849 = vld [vmem:[%s1846 + $0x10] sm:$0xff]
    %v1850 = vld [vmem:[%s1846 + $0x18] sm:$0xf]
    %s1851 = scalar_lea.vmem [#allocation17], 112
    %v1852 = vld [vmem:[%s1851] sm:$0xff]
    %v1853 = vld [vmem:[%s1851 + $0x8] sm:$0xff]
    %v1854 = vld [vmem:[%s1851 + $0x10] sm:$0xff]
    %v1855 = vld [vmem:[%s1851 + $0x18] sm:$0xff]
    %v1856 = vld [vmem:[%s1851 + $0x20] sm:$0xff]
    %v1857 = vld [vmem:[%s1851 + $0x28] sm:$0xff]
    %v1858 = vld [vmem:[%s1851 + $0x30] sm:$0xff]
    %v1859 = vld [vmem:[%s1851 + $0x38] sm:$0xff]
    %v1860 = vld [vmem:[%s1851 + $0x40] sm:$0xff]
    %v1861 = vld [vmem:[%s1851 + $0x48] sm:$0xff]
    %v1862 = vld [vmem:[%s1851 + $0x50] sm:$0xff]
    %v1863 = vld [vmem:[%s1851 + $0x58] sm:$0xff]
    %v1864 = vld [vmem:[%s1851 + $0x60] sm:$0xff]
    %v1865 = vld [vmem:[%s1851 + $0x68] sm:$0xff]
    %1866 = vmatprep.subr.mxu0 0.0
    %1867 = vmatpush1.msra.mxu0 %v1852
    %1868 = vmatprep.subr.mxu0 0.0
    %1869 = vmatpush1.msra.mxu0 %v1853
    %1870 = vmatprep.subr.mxu0 0.0
    %1871 = vmatpush1.msra.mxu0 %v1854
    %1872 = vmatprep.subr.mxu0 0.0
    %1873 = vmatpush1.msra.mxu0 %v1855
    %1874 = vmatprep.subr.mxu0 0.0
    %1875 = vmatpush1.msra.mxu0 %v1856
    %1876 = vmatprep.subr.mxu0 0.0
    %1877 = vmatpush1.msra.mxu0 %v1857
    %1878 = vmatprep.subr.mxu0 0.0
    %1879 = vmatpush1.msra.mxu0 %v1858
    %1880 = vmatprep.subr.mxu0 0.0
    %1881 = vmatpush1.msra.mxu0 %v1859
    %1882 = vmatprep.subr.mxu0 0.0
    %1883 = vmatpush1.msra.mxu0 %v1860
    %1884 = vmatprep.subr.mxu0 0.0
    %1885 = vmatpush1.msra.mxu0 %v1861
    %1886 = vmatprep.subr.mxu0 0.0
    %1887 = vmatpush1.msra.mxu0 %v1862
    %1888 = vmatprep.subr.mxu0 0.0
    %1889 = vmatpush1.msra.mxu0 %v1863
    %1890 = vmatprep.subr.mxu0 0.0
    %1891 = vmatpush1.msra.mxu0 %v1864
    %1892 = vmatprep.subr.mxu0 0.0
    %1893 = vmatpush1.msra.mxu0 %v1865
    %1894 = vmatprep.subr.mxu0 0.0
    %1895 = vmatpush1.msra.mxu0 0.0
    %1896 = vmatprep.subr.mxu0 0.0
    %1897 = vmatpush1.msra.mxu0 0.0
    %1898 = vmatprep.subr.mxu0 0.0
    %1899 = vmatpush1.msra.mxu0 0.0
    %1900 = vmatprep.subr.mxu0 0.0
    %1901 = vmatpush1.msra.mxu0 0.0
    %1902 = vmatprep.subr.mxu0 0.0
    %1903 = vmatpush1.msra.mxu0 0.0
    %1904 = vmatprep.subr.mxu0 0.0
    %1905 = vmatpush1.msra.mxu0 0.0
    %1906 = vmatprep.subr.mxu0 0.0
    %1907 = vmatpush1.msra.mxu0 0.0
    %1908 = vmatprep.subr.mxu0 0.0
    %1909 = vmatpush1.msra.mxu0 0.0
    %1910 = vmatprep.subr.mxu0 0.0
    %1911 = vmatpush1.msra.mxu0 0.0
    %1912 = vmatprep.subr.mxu0 0.0
    %1913 = vmatpush1.msra.mxu0 0.0
    %1914 = vmatprep.subr.mxu0 0.0
    %1915 = vmatpush1.msra.mxu0 0.0
    %1916 = vmatprep.subr.mxu0 0.0
    %1917 = vmatpush1.msra.mxu0 0.0
    %1918 = vmatprep.subr.mxu0 0.0
    %1919 = vmatpush1.msra.mxu0 0.0
    %1920 = vmatprep.subr.mxu0 0.0
    %1921 = vmatpush1.msra.mxu0 0.0
    %1922 = vmatprep.subr.mxu0 0.0
    %1923 = vmatpush1.msra.mxu0 0.0
    %1924 = vmatprep.subr.mxu0 0.0
    %1925 = vmatpush1.msra.mxu0 0.0
    %1926 = vmatprep.subr.mxu0 0.0
    %1927 = vmatpush1.msra.mxu0 0.0
    %1928 = vmatprep.subr.mxu0 0.0
    %1929 = vmatpush1.msra.mxu0 0.0
    %1930 = vmatprep.mubr.f32.mxu0 0.0
    %1931 = vmatmul.mubr.f32.gmra.mrb[0].mxu0 %v1766
    %v1932 = vpop.f32.mrb[0].mxu0
    %v1933 = vadd.f32 0.0, %v1932
    %v1934 = vpop.f32.mrb[0].mxu0
    %1935 = vmatprep.mubr.f32.mxu0 0.0
    %1936 = vmatmul.mubr.f32.gmra.mrb[0].mxu0 %v1769
    %v1937 = vpop.f32.mrb[0].mxu0
    %v1938 = vadd.f32 0.0, %v1937
    %v1939 = vpop.f32.mrb[0].mxu0
    %1940 = vdwg.mxu0
    %vm1941 = vcmask 113664
    %v1943 = vsel %vm1941, %v1847, 0
    %v1946 = vsel %vm1941, %v1848, 0
    %v1949 = vsel %vm1941, %v1849, 0
    %v1952 = vsel %vm1941, %v1850, 0
    %v1955 = vsel %vm1036, %v1938, 0
    %1957 = vmatprep.subr.mxu0 0.0
    %1958 = vmatpush1.msra.mxu0 %v1933
    %1959 = vmatprep.subr.mxu0 0.0
    %1960 = vmatpush1.msra.mxu0 %v1955
    %1961 = vmatprep.subr.mxu0 0.0
    %1962 = vmatpush1.msra.mxu0 0.0
    %1963 = vmatprep.subr.mxu0 0.0
    %1964 = vmatpush1.msra.mxu0 0.0
    %1965 = vmatprep.subr.mxu0 0.0
    %1966 = vmatpush1.msra.mxu0 0.0
    %1967 = vmatprep.subr.mxu0 0.0
    %1968 = vmatpush1.msra.mxu0 0.0
    %1969 = vmatprep.subr.mxu0 0.0
    %1970 = vmatpush1.msra.mxu0 0.0
    %1971 = vmatprep.subr.mxu0 0.0
    %1972 = vmatpush1.msra.mxu0 0.0
    %1973 = vmatprep.subr.mxu0 0.0
    %1974 = vmatpush1.msra.mxu0 0.0
    %1975 = vmatprep.subr.mxu0 0.0
    %1976 = vmatpush1.msra.mxu0 0.0
    %1977 = vmatprep.subr.mxu0 0.0
    %1978 = vmatpush1.msra.mxu0 0.0
    %1979 = vmatprep.subr.mxu0 0.0
    %1980 = vmatpush1.msra.mxu0 0.0
    %1981 = vmatprep.subr.mxu0 0.0
    %1982 = vmatpush1.msra.mxu0 0.0
    %1983 = vmatprep.subr.mxu0 0.0
    %1984 = vmatpush1.msra.mxu0 0.0
    %1985 = vmatprep.subr.mxu0 0.0
    %1986 = vmatpush1.msra.mxu0 0.0
    %1987 = vmatprep.subr.mxu0 0.0
    %1988 = vmatpush1.msra.mxu0 0.0
    %1989 = vmatprep.subr.mxu0 0.0
    %1990 = vmatpush1.msra.mxu0 0.0
    %1991 = vmatprep.subr.mxu0 0.0
    %1992 = vmatpush1.msra.mxu0 0.0
    %1993 = vmatprep.subr.mxu0 0.0
    %1994 = vmatpush1.msra.mxu0 0.0
    %1995 = vmatprep.subr.mxu0 0.0
    %1996 = vmatpush1.msra.mxu0 0.0
    %1997 = vmatprep.subr.mxu0 0.0
    %1998 = vmatpush1.msra.mxu0 0.0
    %1999 = vmatprep.subr.mxu0 0.0
    %2000 = vmatpush1.msra.mxu0 0.0
    %2001 = vmatprep.subr.mxu0 0.0
    %2002 = vmatpush1.msra.mxu0 0.0
    %2003 = vmatprep.subr.mxu0 0.0
    %2004 = vmatpush1.msra.mxu0 0.0
    %2005 = vmatprep.subr.mxu0 0.0
    %2006 = vmatpush1.msra.mxu0 0.0
    %2007 = vmatprep.subr.mxu0 0.0
    %2008 = vmatpush1.msra.mxu0 0.0
    %2009 = vmatprep.subr.mxu0 0.0
    %2010 = vmatpush1.msra.mxu0 0.0
    %2011 = vmatprep.subr.mxu0 0.0
    %2012 = vmatpush1.msra.mxu0 0.0
    %2013 = vmatprep.subr.mxu0 0.0
    %2014 = vmatpush1.msra.mxu0 0.0
    %2015 = vmatprep.subr.mxu0 0.0
    %2016 = vmatpush1.msra.mxu0 0.0
    %2017 = vmatprep.subr.mxu0 0.0
    %2018 = vmatpush1.msra.mxu0 0.0
    %2019 = vmatprep.subr.mxu0 0.0
    %2020 = vmatpush1.msra.mxu0 0.0
    %2021 = vmatprep.mubr.f32.mxu0 0.0
    %2022 = vmatmul.mubr.f32.gmra.mrb[0].mxu0 %v1943
    %v2023 = vpop.f32.mrb[0].mxu0
    %v2024 = vadd.f32 0.0, %v2023
    %v2025 = vpop.f32.mrb[0].mxu0
    %2026 = vmatprep.mubr.f32.mxu0 0.0
    %2027 = vmatmul.mubr.f32.gmra.mrb[0].mxu0 %v1946
    %v2028 = vpop.f32.mrb[0].mxu0
    %v2029 = vadd.f32 0.0, %v2028
    %v2030 = vpop.f32.mrb[0].mxu0
    %2031 = vmatprep.mubr.f32.mxu0 0.0
    %2032 = vmatmul.mubr.f32.gmra.mrb[0].mxu0 %v1949
    %v2033 = vpop.f32.mrb[0].mxu0
    %v2034 = vadd.f32 0.0, %v2033
    %v2035 = vpop.f32.mrb[0].mxu0
    %2036 = vmatprep.mubr.f32.mxu0 0.0
    %2037 = vmatmul.mubr.f32.gmra.mrb[0].mxu0 %v1952
    %v2038 = vpop.f32.mrb[0].mxu0
    %v2039 = vadd.f32 0.0, %v2038
    %v2040 = vpop.f32.mrb[0].mxu0
    %2041 = vdwg.mxu0
    %v2043 = vsel %vm1941, %v1747, 0
    %v2046 = vsel %vm1941, %v1748, 0
    %v2049 = vsel %vm1941, %v1749, 0
    %v2052 = vsel %vm1941, %v1750, 0
    %v2055 = vsel %vm1036, %v1843, 0
    %2057 = vmatprep.subr.mxu0 0.0
    %2058 = vmatpush1.msra.mxu0 %v1838
    %2059 = vmatprep.subr.mxu0 0.0
    %2060 = vmatpush1.msra.mxu0 %v2055
    %2061 = vmatprep.subr.mxu0 0.0
    %2062 = vmatpush1.msra.mxu0 0.0
    %2063 = vmatprep.subr.mxu0 0.0
    %2064 = vmatpush1.msra.mxu0 0.0
    %2065 = vmatprep.subr.mxu0 0.0
    %2066 = vmatpush1.msra.mxu0 0.0
    %2067 = vmatprep.subr.mxu0 0.0
    %2068 = vmatpush1.msra.mxu0 0.0
    %2069 = vmatprep.subr.mxu0 0.0
    %2070 = vmatpush1.msra.mxu0 0.0
    %2071 = vmatprep.subr.mxu0 0.0
    %2072 = vmatpush1.msra.mxu0 0.0
    %2073 = vmatprep.subr.mxu0 0.0
    %2074 = vmatpush1.msra.mxu0 0.0
    %2075 = vmatprep.subr.mxu0 0.0
    %2076 = vmatpush1.msra.mxu0 0.0
    %2077 = vmatprep.subr.mxu0 0.0
    %2078 = vmatpush1.msra.mxu0 0.0
    %2079 = vmatprep.subr.mxu0 0.0
    %2080 = vmatpush1.msra.mxu0 0.0
    %2081 = vmatprep.subr.mxu0 0.0
    %2082 = vmatpush1.msra.mxu0 0.0
    %2083 = vmatprep.subr.mxu0 0.0
    %2084 = vmatpush1.msra.mxu0 0.0
    %2085 = vmatprep.subr.mxu0 0.0
    %2086 = vmatpush1.msra.mxu0 0.0
    %2087 = vmatprep.subr.mxu0 0.0
    %2088 = vmatpush1.msra.mxu0 0.0
    %2089 = vmatprep.subr.mxu0 0.0
    %2090 = vmatpush1.msra.mxu0 0.0
    %2091 = vmatprep.subr.mxu0 0.0
    %2092 = vmatpush1.msra.mxu0 0.0
    %2093 = vmatprep.subr.mxu0 0.0
    %2094 = vmatpush1.msra.mxu0 0.0
    %2095 = vmatprep.subr.mxu0 0.0
    %2096 = vmatpush1.msra.mxu0 0.0
    %2097 = vmatprep.subr.mxu0 0.0
    %2098 = vmatpush1.msra.mxu0 0.0
    %2099 = vmatprep.subr.mxu0 0.0
    %2100 = vmatpush1.msra.mxu0 0.0
    %2101 = vmatprep.subr.mxu0 0.0
    %2102 = vmatpush1.msra.mxu0 0.0
    %2103 = vmatprep.subr.mxu0 0.0
    %2104 = vmatpush1.msra.mxu0 0.0
    %2105 = vmatprep.subr.mxu0 0.0
    %2106 = vmatpush1.msra.mxu0 0.0
    %2107 = vmatprep.subr.mxu0 0.0
    %2108 = vmatpush1.msra.mxu0 0.0
    %2109 = vmatprep.subr.mxu0 0.0
    %2110 = vmatpush1.msra.mxu0 0.0
    %2111 = vmatprep.subr.mxu0 0.0
    %2112 = vmatpush1.msra.mxu0 0.0
    %2113 = vmatprep.subr.mxu0 0.0
    %2114 = vmatpush1.msra.mxu0 0.0
    %2115 = vmatprep.subr.mxu0 0.0
    %2116 = vmatpush1.msra.mxu0 0.0
    %2117 = vmatprep.subr.mxu0 0.0
    %2118 = vmatpush1.msra.mxu0 0.0
    %2119 = vmatprep.subr.mxu0 0.0
    %2120 = vmatpush1.msra.mxu0 0.0
    %2121 = vmatprep.mubr.f32.mxu0 0.0
    %2122 = vmatmul.mubr.f32.gmra.mrb[0].mxu0 %v2043
    %v2123 = vpop.f32.mrb[0].mxu0
    %v2124 = vadd.f32 %v2024, %v2123
    %v2125 = vpop.f32.mrb[0].mxu0
    %2126 = vmatprep.mubr.f32.mxu0 0.0
    %2127 = vmatmul.mubr.f32.gmra.mrb[0].mxu0 %v2046
    %v2128 = vpop.f32.mrb[0].mxu0
    %v2129 = vadd.f32 %v2029, %v2128
    %v2130 = vpop.f32.mrb[0].mxu0
    %2131 = vmatprep.mubr.f32.mxu0 0.0
    %2132 = vmatmul.mubr.f32.gmra.mrb[0].mxu0 %v2049
    %v2133 = vpop.f32.mrb[0].mxu0
    %v2134 = vadd.f32 %v2034, %v2133
    %v2135 = vpop.f32.mrb[0].mxu0
    %2136 = vmatprep.mubr.f32.mxu0 0.0
    %2137 = vmatmul.mubr.f32.gmra.mrb[0].mxu0 %v2052
    %v2138 = vpop.f32.mrb[0].mxu0
    %v2139 = vadd.f32 %v2039, %v2138
    %v2140 = vpop.f32.mrb[0].mxu0
    %2141 = vdwg.mxu0
    %s2142 = scalar_lea.vmem [#allocation16], 64
    %v2143 = vld [vmem:[%s2142] sm:$0xff]
    %v2144 = vld [vmem:[%s2142 + $0x8] sm:$0xff]
    %v2145 = vld [vmem:[%s2142 + $0x10] sm:$0xff]
    %v2146 = vld [vmem:[%s2142 + $0x18] sm:$0xf]
    %s2147 = scalar_lea.vmem [#allocation17], 224
    %v2148 = vld [vmem:[%s2147] sm:$0xff]
    %v2149 = vld [vmem:[%s2147 + $0x8] sm:$0xff]
    %v2150 = vld [vmem:[%s2147 + $0x10] sm:$0xff]
    %v2151 = vld [vmem:[%s2147 + $0x18] sm:$0xff]
    %v2152 = vld [vmem:[%s2147 + $0x20] sm:$0xff]
    %v2153 = vld [vmem:[%s2147 + $0x28] sm:$0xff]
    %v2154 = vld [vmem:[%s2147 + $0x30] sm:$0xff]
    %v2155 = vld [vmem:[%s2147 + $0x38] sm:$0xff]
    %v2156 = vld [vmem:[%s2147 + $0x40] sm:$0xff]
    %v2157 = vld [vmem:[%s2147 + $0x48] sm:$0xff]
    %v2158 = vld [vmem:[%s2147 + $0x50] sm:$0xff]
    %v2159 = vld [vmem:[%s2147 + $0x58] sm:$0xff]
    %v2160 = vld [vmem:[%s2147 + $0x60] sm:$0xff]
    %v2161 = vld [vmem:[%s2147 + $0x68] sm:$0xff]
    %2162 = vmatprep.subr.mxu0 0.0
    %2163 = vmatpush1.msra.mxu0 %v2148
    %2164 = vmatprep.subr.mxu0 0.0
    %2165 = vmatpush1.msra.mxu0 %v2149
    %2166 = vmatprep.subr.mxu0 0.0
    %2167 = vmatpush1.msra.mxu0 %v2150
    %2168 = vmatprep.subr.mxu0 0.0
    %2169 = vmatpush1.msra.mxu0 %v2151
    %2170 = vmatprep.subr.mxu0 0.0
    %2171 = vmatpush1.msra.mxu0 %v2152
    %2172 = vmatprep.subr.mxu0 0.0
    %2173 = vmatpush1.msra.mxu0 %v2153
    %2174 = vmatprep.subr.mxu0 0.0
    %2175 = vmatpush1.msra.mxu0 %v2154
    %2176 = vmatprep.subr.mxu0 0.0
    %2177 = vmatpush1.msra.mxu0 %v2155
    %2178 = vmatprep.subr.mxu0 0.0
    %2179 = vmatpush1.msra.mxu0 %v2156
    %2180 = vmatprep.subr.mxu0 0.0
    %2181 = vmatpush1.msra.mxu0 %v2157
    %2182 = vmatprep.subr.mxu0 0.0
    %2183 = vmatpush1.msra.mxu0 %v2158
    %2184 = vmatprep.subr.mxu0 0.0
    %2185 = vmatpush1.msra.mxu0 %v2159
    %2186 = vmatprep.subr.mxu0 0.0
    %2187 = vmatpush1.msra.mxu0 %v2160
    %2188 = vmatprep.subr.mxu0 0.0
    %2189 = vmatpush1.msra.mxu0 %v2161
    %2190 = vmatprep.subr.mxu0 0.0
    %2191 = vmatpush1.msra.mxu0 0.0
    %2192 = vmatprep.subr.mxu0 0.0
    %2193 = vmatpush1.msra.mxu0 0.0
    %2194 = vmatprep.subr.mxu0 0.0
    %2195 = vmatpush1.msra.mxu0 0.0
    %2196 = vmatprep.subr.mxu0 0.0
    %2197 = vmatpush1.msra.mxu0 0.0
    %2198 = vmatprep.subr.mxu0 0.0
    %2199 = vmatpush1.msra.mxu0 0.0
    %2200 = vmatprep.subr.mxu0 0.0
    %2201 = vmatpush1.msra.mxu0 0.0
    %2202 = vmatprep.subr.mxu0 0.0
    %2203 = vmatpush1.msra.mxu0 0.0
    %2204 = vmatprep.subr.mxu0 0.0
    %2205 = vmatpush1.msra.mxu0 0.0
    %2206 = vmatprep.subr.mxu0 0.0
    %2207 = vmatpush1.msra.mxu0 0.0
    %2208 = vmatprep.subr.mxu0 0.0
    %2209 = vmatpush1.msra.mxu0 0.0
    %2210 = vmatprep.subr.mxu0 0.0
    %2211 = vmatpush1.msra.mxu0 0.0
    %2212 = vmatprep.subr.mxu0 0.0
    %2213 = vmatpush1.msra.mxu0 0.0
    %2214 = vmatprep.subr.mxu0 0.0
    %2215 = vmatpush1.msra.mxu0 0.0
    %2216 = vmatprep.subr.mxu0 0.0
    %2217 = vmatpush1.msra.mxu0 0.0
    %2218 = vmatprep.subr.mxu0 0.0
    %2219 = vmatpush1.msra.mxu0 0.0
    %2220 = vmatprep.subr.mxu0 0.0
    %2221 = vmatpush1.msra.mxu0 0.0
    %2222 = vmatprep.subr.mxu0 0.0
    %2223 = vmatpush1.msra.mxu0 0.0
    %2224 = vmatprep.subr.mxu0 0.0
    %2225 = vmatpush1.msra.mxu0 0.0
    %2226 = vmatprep.mubr.f32.mxu0 0.0
    %2227 = vmatmul.mubr.f32.gmra.mrb[0].mxu0 %v1766
    %v2228 = vpop.f32.mrb[0].mxu0
    %v2229 = vadd.f32 0.0, %v2228
    %v2230 = vpop.f32.mrb[0].mxu0
    %2231 = vmatprep.mubr.f32.mxu0 0.0
    %2232 = vmatmul.mubr.f32.gmra.mrb[0].mxu0 %v1769
    %v2233 = vpop.f32.mrb[0].mxu0
    %v2234 = vadd.f32 0.0, %v2233
    %v2235 = vpop.f32.mrb[0].mxu0
    %2236 = vdwg.mxu0
    %v2238 = vsel %vm1941, %v2143, 0
    %v2241 = vsel %vm1941, %v2144, 0
    %v2244 = vsel %vm1941, %v2145, 0
    %v2247 = vsel %vm1941, %v2146, 0
    %v2250 = vsel %vm1036, %v2234, 0
    %2252 = vmatprep.subr.mxu0 0.0
    %2253 = vmatpush1.msra.mxu0 %v2229
    %2254 = vmatprep.subr.mxu0 0.0
    %2255 = vmatpush1.msra.mxu0 %v2250
    %2256 = vmatprep.subr.mxu0 0.0
    %2257 = vmatpush1.msra.mxu0 0.0
    %2258 = vmatprep.subr.mxu0 0.0
    %2259 = vmatpush1.msra.mxu0 0.0
    %2260 = vmatprep.subr.mxu0 0.0
    %2261 = vmatpush1.msra.mxu0 0.0
    %2262 = vmatprep.subr.mxu0 0.0
    %2263 = vmatpush1.msra.mxu0 0.0
    %2264 = vmatprep.subr.mxu0 0.0
    %2265 = vmatpush1.msra.mxu0 0.0
    %2266 = vmatprep.subr.mxu0 0.0
    %2267 = vmatpush1.msra.mxu0 0.0
    %2268 = vmatprep.subr.mxu0 0.0
    %2269 = vmatpush1.msra.mxu0 0.0
    %2270 = vmatprep.subr.mxu0 0.0
    %2271 = vmatpush1.msra.mxu0 0.0
    %2272 = vmatprep.subr.mxu0 0.0
    %2273 = vmatpush1.msra.mxu0 0.0
    %2274 = vmatprep.subr.mxu0 0.0
    %2275 = vmatpush1.msra.mxu0 0.0
    %2276 = vmatprep.subr.mxu0 0.0
    %2277 = vmatpush1.msra.mxu0 0.0
    %2278 = vmatprep.subr.mxu0 0.0
    %2279 = vmatpush1.msra.mxu0 0.0
    %2280 = vmatprep.subr.mxu0 0.0
    %2281 = vmatpush1.msra.mxu0 0.0
    %2282 = vmatprep.subr.mxu0 0.0
    %2283 = vmatpush1.msra.mxu0 0.0
    %2284 = vmatprep.subr.mxu0 0.0
    %2285 = vmatpush1.msra.mxu0 0.0
    %2286 = vmatprep.subr.mxu0 0.0
    %2287 = vmatpush1.msra.mxu0 0.0
    %2288 = vmatprep.subr.mxu0 0.0
    %2289 = vmatpush1.msra.mxu0 0.0
    %2290 = vmatprep.subr.mxu0 0.0
    %2291 = vmatpush1.msra.mxu0 0.0
    %2292 = vmatprep.subr.mxu0 0.0
    %2293 = vmatpush1.msra.mxu0 0.0
    %2294 = vmatprep.subr.mxu0 0.0
    %2295 = vmatpush1.msra.mxu0 0.0
    %2296 = vmatprep.subr.mxu0 0.0
    %2297 = vmatpush1.msra.mxu0 0.0
    %2298 = vmatprep.subr.mxu0 0.0
    %2299 = vmatpush1.msra.mxu0 0.0
    %2300 = vmatprep.subr.mxu0 0.0
    %2301 = vmatpush1.msra.mxu0 0.0
    %2302 = vmatprep.subr.mxu0 0.0
    %2303 = vmatpush1.msra.mxu0 0.0
    %2304 = vmatprep.subr.mxu0 0.0
    %2305 = vmatpush1.msra.mxu0 0.0
    %2306 = vmatprep.subr.mxu0 0.0
    %2307 = vmatpush1.msra.mxu0 0.0
    %2308 = vmatprep.subr.mxu0 0.0
    %2309 = vmatpush1.msra.mxu0 0.0
    %2310 = vmatprep.subr.mxu0 0.0
    %2311 = vmatpush1.msra.mxu0 0.0
    %2312 = vmatprep.subr.mxu0 0.0
    %2313 = vmatpush1.msra.mxu0 0.0
    %2314 = vmatprep.subr.mxu0 0.0
    %2315 = vmatpush1.msra.mxu0 0.0
    %2316 = vmatprep.mubr.f32.mxu0 0.0
    %2317 = vmatmul.mubr.f32.gmra.mrb[0].mxu0 %v2238
    %v2318 = vpop.f32.mrb[0].mxu0
    %v2319 = vadd.f32 0.0, %v2318
    %v2320 = vpop.f32.mrb[0].mxu0
    %2321 = vmatprep.mubr.f32.mxu0 0.0
    %2322 = vmatmul.mubr.f32.gmra.mrb[0].mxu0 %v2241
    %v2323 = vpop.f32.mrb[0].mxu0
    %v2324 = vadd.f32 0.0, %v2323
    %v2325 = vpop.f32.mrb[0].mxu0
    %2326 = vmatprep.mubr.f32.mxu0 0.0
    %2327 = vmatmul.mubr.f32.gmra.mrb[0].mxu0 %v2244
    %v2328 = vpop.f32.mrb[0].mxu0
    %v2329 = vadd.f32 0.0, %v2328
    %v2330 = vpop.f32.mrb[0].mxu0
    %2331 = vmatprep.mubr.f32.mxu0 0.0
    %2332 = vmatmul.mubr.f32.gmra.mrb[0].mxu0 %v2247
    %v2333 = vpop.f32.mrb[0].mxu0
    %v2334 = vadd.f32 0.0, %v2333
    %v2335 = vpop.f32.mrb[0].mxu0
    %2336 = vdwg.mxu0
    %v2337 = vadd.f32 %v2124, %v2319
    %v2338 = vadd.f32 %v2129, %v2324
    %v2339 = vadd.f32 %v2134, %v2329
    %v2340 = vadd.f32 %v2139, %v2334
    %v2341 = vld [vmem:[%s15] sm:$0x1]
    %v2343 = vlaneseq
    %v2344 = vshrl.u32 %v2343, 7
    %v2345 = vsub.s32 0, %v2344
    %v2346 = vrot.slane %v2341, %v2345
    %v2348 = vadd.f32 %v2337, %v2346
    %v2349 = vadd.f32 %v2338, %v2346
    %v2350 = vadd.f32 %v2339, %v2346
    %v2351 = vadd.f32 %v2340, %v2346
    %v2352 = vsel %vm1380, %v2348, 0.0
    %v2353 = vsel %vm1380, %v2349, 0.0
    %v2354 = vadd.f32 %v2352, %v2353
    %v2355 = vsel %vm1380, %v2350, 0.0
    %v2356 = vadd.f32 %v2354, %v2355
    %vm2357 = vcmask 912384
    %v2358 = vsel %vm2357, %v2351, 0.0
    %v2359 = vadd.f32 %v2356, %v2358
    %v2360 = vrot.slane %v2359, 4
    %v2361 = vadd.f32 %v2359, %v2360
    %v2362 = vrot.slane %v2361, 2
    %v2363 = vadd.f32 %v2361, %v2362
    %v2364 = vrot.slane %v2363, 1
    %v2365 = vadd.f32 %v2363, %v2364
    %v2366 = vld [vmem:[#allocation19] sm:$0xff]
    %v2367 = vld [vmem:[#allocation19 + $0x8] sm:$0xff]
    %v2368 = vld [vmem:[#allocation19 + $0x10] sm:$0xff]
    %v2369 = vld [vmem:[#allocation19 + $0x18] sm:$0xff]
    %v2370 = vld [vmem:[#allocation19 + $0x20] sm:$0xff]
    %v2371 = vld [vmem:[#allocation19 + $0x28] sm:$0xff]
    %v2372 = vld [vmem:[#allocation19 + $0x30] sm:$0xff]
    %v2373 = vld [vmem:[#allocation19 + $0x38] sm:$0xff]
    %v2374 = vld [vmem:[#allocation19 + $0x40] sm:$0xff]
    %v2375 = vld [vmem:[#allocation19 + $0x48] sm:$0xff]
    %v2376 = vld [vmem:[#allocation19 + $0x50] sm:$0xff]
    %v2377 = vld [vmem:[#allocation19 + $0x58] sm:$0xff]
    %v2378 = vld [vmem:[#allocation19 + $0x60] sm:$0xff]
    %v2379 = vld [vmem:[#allocation19 + $0x68] sm:$0xff]
    %v2381 = vsel %vm1380, %v2365, 0
    %2383 = vmatprep.subr.mxu0 0.0
    %2384 = vmatpush1.msra.mxu0 %v2366
    %2385 = vmatprep.subr.mxu0 0.0
    %2386 = vmatpush1.msra.mxu0 %v2367
    %2387 = vmatprep.subr.mxu0 0.0
    %2388 = vmatpush1.msra.mxu0 %v2368
    %2389 = vmatprep.subr.mxu0 0.0
    %2390 = vmatpush1.msra.mxu0 %v2369
    %2391 = vmatprep.subr.mxu0 0.0
    %2392 = vmatpush1.msra.mxu0 %v2370
    %2393 = vmatprep.subr.mxu0 0.0
    %2394 = vmatpush1.msra.mxu0 %v2371
    %2395 = vmatprep.subr.mxu0 0.0
    %2396 = vmatpush1.msra.mxu0 %v2372
    %2397 = vmatprep.subr.mxu0 0.0
    %2398 = vmatpush1.msra.mxu0 %v2373
    %2399 = vmatprep.subr.mxu0 0.0
    %2400 = vmatpush1.msra.mxu0 %v2374
    %2401 = vmatprep.subr.mxu0 0.0
    %2402 = vmatpush1.msra.mxu0 %v2375
    %2403 = vmatprep.subr.mxu0 0.0
    %2404 = vmatpush1.msra.mxu0 %v2376
    %2405 = vmatprep.subr.mxu0 0.0
    %2406 = vmatpush1.msra.mxu0 %v2377
    %2407 = vmatprep.subr.mxu0 0.0
    %2408 = vmatpush1.msra.mxu0 %v2378
    %2409 = vmatprep.subr.mxu0 0.0
    %2410 = vmatpush1.msra.mxu0 %v2379
    %2411 = vmatprep.subr.mxu0 0.0
    %2412 = vmatpush1.msra.mxu0 0.0
    %2413 = vmatprep.subr.mxu0 0.0
    %2414 = vmatpush1.msra.mxu0 0.0
    %2415 = vmatprep.subr.mxu0 0.0
    %2416 = vmatpush1.msra.mxu0 0.0
    %2417 = vmatprep.subr.mxu0 0.0
    %2418 = vmatpush1.msra.mxu0 0.0
    %2419 = vmatprep.subr.mxu0 0.0
    %2420 = vmatpush1.msra.mxu0 0.0
    %2421 = vmatprep.subr.mxu0 0.0
    %2422 = vmatpush1.msra.mxu0 0.0
    %2423 = vmatprep.subr.mxu0 0.0
    %2424 = vmatpush1.msra.mxu0 0.0
    %2425 = vmatprep.subr.mxu0 0.0
    %2426 = vmatpush1.msra.mxu0 0.0
    %2427 = vmatprep.subr.mxu0 0.0
    %2428 = vmatpush1.msra.mxu0 0.0
    %2429 = vmatprep.subr.mxu0 0.0
    %2430 = vmatpush1.msra.mxu0 0.0
    %2431 = vmatprep.subr.mxu0 0.0
    %2432 = vmatpush1.msra.mxu0 0.0
    %2433 = vmatprep.subr.mxu0 0.0
    %2434 = vmatpush1.msra.mxu0 0.0
    %2435 = vmatprep.subr.mxu0 0.0
    %2436 = vmatpush1.msra.mxu0 0.0
    %2437 = vmatprep.subr.mxu0 0.0
    %2438 = vmatpush1.msra.mxu0 0.0
    %2439 = vmatprep.subr.mxu0 0.0
    %2440 = vmatpush1.msra.mxu0 0.0
    %2441 = vmatprep.subr.mxu0 0.0
    %2442 = vmatpush1.msra.mxu0 0.0
    %2443 = vmatprep.subr.mxu0 0.0
    %2444 = vmatpush1.msra.mxu0 0.0
    %2445 = vmatprep.subr.mxu0 0.0
    %2446 = vmatpush1.msra.mxu0 0.0
    %2447 = vmatprep.mubr.f32.mxu0 0.0
    %2448 = vmatmul.mubr.f32.gmra.mrb[0].mxu0 %v2381
    %v2449 = vpop.f32.mrb[0].mxu0
    %v2450 = vadd.f32 0.0, %v2449
    %v2451 = vpop.f32.mrb[0].mxu0
    %2452 = vdwg.mxu0
    %v2453 = vmul.f32 %v2450, 0.0025510204
    %v2454 = vld [vmem:[%s17] sm:$0xff]
    %vm2455 = vcmask 64512
    %v2457 = vsel %vm2455, %v2453, 0
    %2459 = vmatprep.subr.mxu0 0.0
    %2460 = vmatpush1.msra.mxu0 %v2454
    %2461 = vmatprep.subr.mxu0 0.0
    %2462 = vmatpush1.msra.mxu0 0.0
    %2463 = vmatprep.subr.mxu0 0.0
    %2464 = vmatpush1.msra.mxu0 0.0
    %2465 = vmatprep.subr.mxu0 0.0
    %2466 = vmatpush1.msra.mxu0 0.0
    %2467 = vmatprep.subr.mxu0 0.0
    %2468 = vmatpush1.msra.mxu0 0.0
    %2469 = vmatprep.subr.mxu0 0.0
    %2470 = vmatpush1.msra.mxu0 0.0
    %2471 = vmatprep.subr.mxu0 0.0
    %2472 = vmatpush1.msra.mxu0 0.0
    %2473 = vmatprep.subr.mxu0 0.0
    %2474 = vmatpush1.msra.mxu0 0.0
    %2475 = vmatprep.subr.mxu0 0.0
    %2476 = vmatpush1.msra.mxu0 0.0
    %2477 = vmatprep.subr.mxu0 0.0
    %2478 = vmatpush1.msra.mxu0 0.0
    %2479 = vmatprep.subr.mxu0 0.0
    %2480 = vmatpush1.msra.mxu0 0.0
    %2481 = vmatprep.subr.mxu0 0.0
    %2482 = vmatpush1.msra.mxu0 0.0
    %2483 = vmatprep.subr.mxu0 0.0
    %2484 = vmatpush1.msra.mxu0 0.0
    %2485 = vmatprep.subr.mxu0 0.0
    %2486 = vmatpush1.msra.mxu0 0.0
    %2487 = vmatprep.subr.mxu0 0.0
    %2488 = vmatpush1.msra.mxu0 0.0
    %2489 = vmatprep.subr.mxu0 0.0
    %2490 = vmatpush1.msra.mxu0 0.0
    %2491 = vmatprep.subr.mxu0 0.0
    %2492 = vmatpush1.msra.mxu0 0.0
    %2493 = vmatprep.subr.mxu0 0.0
    %2494 = vmatpush1.msra.mxu0 0.0
    %2495 = vmatprep.subr.mxu0 0.0
    %2496 = vmatpush1.msra.mxu0 0.0
    %2497 = vmatprep.subr.mxu0 0.0
    %2498 = vmatpush1.msra.mxu0 0.0
    %2499 = vmatprep.subr.mxu0 0.0
    %2500 = vmatpush1.msra.mxu0 0.0
    %2501 = vmatprep.subr.mxu0 0.0
    %2502 = vmatpush1.msra.mxu0 0.0
    %2503 = vmatprep.subr.mxu0 0.0
    %2504 = vmatpush1.msra.mxu0 0.0
    %2505 = vmatprep.subr.mxu0 0.0
    %2506 = vmatpush1.msra.mxu0 0.0
    %2507 = vmatprep.subr.mxu0 0.0
    %2508 = vmatpush1.msra.mxu0 0.0
    %2509 = vmatprep.subr.mxu0 0.0
    %2510 = vmatpush1.msra.mxu0 0.0
    %2511 = vmatprep.subr.mxu0 0.0
    %2512 = vmatpush1.msra.mxu0 0.0
    %2513 = vmatprep.subr.mxu0 0.0
    %2514 = vmatpush1.msra.mxu0 0.0
    %2515 = vmatprep.subr.mxu0 0.0
    %2516 = vmatpush1.msra.mxu0 0.0
    %2517 = vmatprep.subr.mxu0 0.0
    %2518 = vmatpush1.msra.mxu0 0.0
    %2519 = vmatprep.subr.mxu0 0.0
    %2520 = vmatpush1.msra.mxu0 0.0
    %2521 = vmatprep.subr.mxu0 0.0
    %2522 = vmatpush1.msra.mxu0 0.0
    %2523 = vmatprep.mubr.f32.mxu0 0.0
    %2524 = vmatmul.mubr.f32.gmra.mrb[0].mxu0 %v2457
    %v2525 = vpop.f32.mrb[0].mxu0
    %v2526 = vadd.f32 0.0, %v2525
    %v2527 = vpop.f32.mrb[0].mxu0
    %2528 = vdwg.mxu0
    %v2529 = vlaneseq
    %v2530 = vshrl.u32 %v2529, 7
    %v2531 = vsub.s32 0, %v2530
    %v2532 = vrot.slane %v2526, %v2531
    %v2533 = vsub.f32 %v2348, %v2532
    %v2534 = vsub.f32 %v2349, %v2532
    %v2535 = vsub.f32 %v2350, %v2532
    %v2536 = vsub.f32 %v2351, %v2532
    %v2537 = vmul.f32 %v2533, %v2533
    %v2538 = vmul.f32 %v2534, %v2534
    %v2539 = vmul.f32 %v2535, %v2535
    %v2540 = vmul.f32 %v2536, %v2536
    %v2541 = vsel %vm1380, %v2537, 0.0
    %v2542 = vsel %vm1380, %v2538, 0.0
    %v2543 = vadd.f32 %v2541, %v2542
    %v2544 = vsel %vm1380, %v2539, 0.0
    %v2545 = vadd.f32 %v2543, %v2544
    %v2546 = vsel %vm2357, %v2540, 0.0
    %v2547 = vadd.f32 %v2545, %v2546
    %v2548 = vrot.slane %v2547, 4
    %v2549 = vadd.f32 %v2547, %v2548
    %v2550 = vrot.slane %v2549, 2
    %v2551 = vadd.f32 %v2549, %v2550
    %v2552 = vrot.slane %v2551, 1
    %v2553 = vadd.f32 %v2551, %v2552
    %v2555 = vsel %vm1380, %v2553, 0
    %2557 = vmatprep.subr.mxu0 0.0
    %2558 = vmatpush1.msra.mxu0 %v2366
    %2559 = vmatprep.subr.mxu0 0.0
    %2560 = vmatpush1.msra.mxu0 %v2367
    %2561 = vmatprep.subr.mxu0 0.0
    %2562 = vmatpush1.msra.mxu0 %v2368
    %2563 = vmatprep.subr.mxu0 0.0
    %2564 = vmatpush1.msra.mxu0 %v2369
    %2565 = vmatprep.subr.mxu0 0.0
    %2566 = vmatpush1.msra.mxu0 %v2370
    %2567 = vmatprep.subr.mxu0 0.0
    %2568 = vmatpush1.msra.mxu0 %v2371
    %2569 = vmatprep.subr.mxu0 0.0
    %2570 = vmatpush1.msra.mxu0 %v2372
    %2571 = vmatprep.subr.mxu0 0.0
    %2572 = vmatpush1.msra.mxu0 %v2373
    %2573 = vmatprep.subr.mxu0 0.0
    %2574 = vmatpush1.msra.mxu0 %v2374
    %2575 = vmatprep.subr.mxu0 0.0
    %2576 = vmatpush1.msra.mxu0 %v2375
    %2577 = vmatprep.subr.mxu0 0.0
    %2578 = vmatpush1.msra.mxu0 %v2376
    %2579 = vmatprep.subr.mxu0 0.0
    %2580 = vmatpush1.msra.mxu0 %v2377
    %2581 = vmatprep.subr.mxu0 0.0
    %2582 = vmatpush1.msra.mxu0 %v2378
    %2583 = vmatprep.subr.mxu0 0.0
    %2584 = vmatpush1.msra.mxu0 %v2379
    %2585 = vmatprep.subr.mxu0 0.0
    %2586 = vmatpush1.msra.mxu0 0.0
    %2587 = vmatprep.subr.mxu0 0.0
    %2588 = vmatpush1.msra.mxu0 0.0
    %2589 = vmatprep.subr.mxu0 0.0
    %2590 = vmatpush1.msra.mxu0 0.0
    %2591 = vmatprep.subr.mxu0 0.0
    %2592 = vmatpush1.msra.mxu0 0.0
    %2593 = vmatprep.subr.mxu0 0.0
    %2594 = vmatpush1.msra.mxu0 0.0
    %2595 = vmatprep.subr.mxu0 0.0
    %2596 = vmatpush1.msra.mxu0 0.0
    %2597 = vmatprep.subr.mxu0 0.0
    %2598 = vmatpush1.msra.mxu0 0.0
    %2599 = vmatprep.subr.mxu0 0.0
    %2600 = vmatpush1.msra.mxu0 0.0
    %2601 = vmatprep.subr.mxu0 0.0
    %2602 = vmatpush1.msra.mxu0 0.0
    %2603 = vmatprep.subr.mxu0 0.0
    %2604 = vmatpush1.msra.mxu0 0.0
    %2605 = vmatprep.subr.mxu0 0.0
    %2606 = vmatpush1.msra.mxu0 0.0
    %2607 = vmatprep.subr.mxu0 0.0
    %2608 = vmatpush1.msra.mxu0 0.0
    %2609 = vmatprep.subr.mxu0 0.0
    %2610 = vmatpush1.msra.mxu0 0.0
    %2611 = vmatprep.subr.mxu0 0.0
    %2612 = vmatpush1.msra.mxu0 0.0
    %2613 = vmatprep.subr.mxu0 0.0
    %2614 = vmatpush1.msra.mxu0 0.0
    %2615 = vmatprep.subr.mxu0 0.0
    %2616 = vmatpush1.msra.mxu0 0.0
    %2617 = vmatprep.subr.mxu0 0.0
    %2618 = vmatpush1.msra.mxu0 0.0
    %2619 = vmatprep.subr.mxu0 0.0
    %2620 = vmatpush1.msra.mxu0 0.0
    %2621 = vmatprep.mubr.f32.mxu0 0.0
    %2622 = vmatmul.mubr.f32.gmra.mrb[0].mxu0 %v2555
    %v2623 = vpop.f32.mrb[0].mxu0
    %v2624 = vadd.f32 0.0, %v2623
    %v2625 = vpop.f32.mrb[0].mxu0
    %2626 = vdwg.mxu0
    %v2627 = vmul.f32 %v2624, 0.0025510204
    %v2628 = vadd.f32 %v2627, 1e-05
    %v2629 = vrsqrt.pop %v2628
    %v2631 = vsel %vm2455, %v2629, 0
    %2633 = vmatprep.subr.mxu0 0.0
    %2634 = vmatpush1.msra.mxu0 %v2454
    %2635 = vmatprep.subr.mxu0 0.0
    %2636 = vmatpush1.msra.mxu0 0.0
    %2637 = vmatprep.subr.mxu0 0.0
    %2638 = vmatpush1.msra.mxu0 0.0
    %2639 = vmatprep.subr.mxu0 0.0
    %2640 = vmatpush1.msra.mxu0 0.0
    %2641 = vmatprep.subr.mxu0 0.0
    %2642 = vmatpush1.msra.mxu0 0.0
    %2643 = vmatprep.subr.mxu0 0.0
    %2644 = vmatpush1.msra.mxu0 0.0
    %2645 = vmatprep.subr.mxu0 0.0
    %2646 = vmatpush1.msra.mxu0 0.0
    %2647 = vmatprep.subr.mxu0 0.0
    %2648 = vmatpush1.msra.mxu0 0.0
    %2649 = vmatprep.subr.mxu0 0.0
    %2650 = vmatpush1.msra.mxu0 0.0
    %2651 = vmatprep.subr.mxu0 0.0
    %2652 = vmatpush1.msra.mxu0 0.0
    %2653 = vmatprep.subr.mxu0 0.0
    %2654 = vmatpush1.msra.mxu0 0.0
    %2655 = vmatprep.subr.mxu0 0.0
    %2656 = vmatpush1.msra.mxu0 0.0
    %2657 = vmatprep.subr.mxu0 0.0
    %2658 = vmatpush1.msra.mxu0 0.0
    %2659 = vmatprep.subr.mxu0 0.0
    %2660 = vmatpush1.msra.mxu0 0.0
    %2661 = vmatprep.subr.mxu0 0.0
    %2662 = vmatpush1.msra.mxu0 0.0
    %2663 = vmatprep.subr.mxu0 0.0
    %2664 = vmatpush1.msra.mxu0 0.0
    %2665 = vmatprep.subr.mxu0 0.0
    %2666 = vmatpush1.msra.mxu0 0.0
    %2667 = vmatprep.subr.mxu0 0.0
    %2668 = vmatpush1.msra.mxu0 0.0
    %2669 = vmatprep.subr.mxu0 0.0
    %2670 = vmatpush1.msra.mxu0 0.0
    %2671 = vmatprep.subr.mxu0 0.0
    %2672 = vmatpush1.msra.mxu0 0.0
    %2673 = vmatprep.subr.mxu0 0.0
    %2674 = vmatpush1.msra.mxu0 0.0
    %2675 = vmatprep.subr.mxu0 0.0
    %2676 = vmatpush1.msra.mxu0 0.0
    %2677 = vmatprep.subr.mxu0 0.0
    %2678 = vmatpush1.msra.mxu0 0.0
    %2679 = vmatprep.subr.mxu0 0.0
    %2680 = vmatpush1.msra.mxu0 0.0
    %2681 = vmatprep.subr.mxu0 0.0
    %2682 = vmatpush1.msra.mxu0 0.0
    %2683 = vmatprep.subr.mxu0 0.0
    %2684 = vmatpush1.msra.mxu0 0.0
    %2685 = vmatprep.subr.mxu0 0.0
    %2686 = vmatpush1.msra.mxu0 0.0
    %2687 = vmatprep.subr.mxu0 0.0
    %2688 = vmatpush1.msra.mxu0 0.0
    %2689 = vmatprep.subr.mxu0 0.0
    %2690 = vmatpush1.msra.mxu0 0.0
    %2691 = vmatprep.subr.mxu0 0.0
    %2692 = vmatpush1.msra.mxu0 0.0
    %2693 = vmatprep.subr.mxu0 0.0
    %2694 = vmatpush1.msra.mxu0 0.0
    %2695 = vmatprep.subr.mxu0 0.0
    %2696 = vmatpush1.msra.mxu0 0.0
    %2697 = vmatprep.mubr.f32.mxu0 0.0
    %2698 = vmatmul.mubr.f32.gmra.mrb[0].mxu0 %v2631
    %v2699 = vpop.f32.mrb[0].mxu0
    %v2700 = vadd.f32 0.0, %v2699
    %v2701 = vpop.f32.mrb[0].mxu0
    %2702 = vdwg.mxu0
    %v2703 = vlaneseq
    %v2704 = vshrl.u32 %v2703, 7
    %v2705 = vsub.s32 0, %v2704
    %v2706 = vrot.slane %v2700, %v2705
    %v2707 = vmul.f32 %v2533, %v2706
    %v2708 = vmul.f32 %v2534, %v2706
    %v2709 = vmul.f32 %v2535, %v2706
    %v2710 = vmul.f32 %v2536, %v2706
    %v2711 = vld [vmem:[%s18] sm:$0x1]
    %v2713 = vlaneseq
    %v2714 = vshrl.u32 %v2713, 7
    %v2715 = vsub.s32 0, %v2714
    %v2716 = vrot.slane %v2711, %v2715
    %v2718 = vmul.f32 %v2707, %v2716
    %v2719 = vmul.f32 %v2708, %v2716
    %v2720 = vmul.f32 %v2709, %v2716
    %v2721 = vmul.f32 %v2710, %v2716
    %v2722 = vld [vmem:[%s19] sm:$0x1]
    %v2724 = vlaneseq
    %v2725 = vshrl.u32 %v2724, 7
    %v2726 = vsub.s32 0, %v2725
    %v2727 = vrot.slane %v2722, %v2726
    %v2729 = vadd.f32 %v2718, %v2727
    %v2730 = vadd.f32 %v2719, %v2727
    %v2731 = vadd.f32 %v2720, %v2727
    %v2732 = vadd.f32 %v2721, %v2727
    %v2733 = vmax.f32 %v2729, 0.0
    %v2734 = vmax.f32 %v2730, 0.0
    %v2735 = vmax.f32 %v2731, 0.0
    %v2736 = vmax.f32 %v2732, 0.0
    %v2737 = vld [vmem:[#allocation20] sm:$0xff]
    %v2738 = vld [vmem:[#allocation20 + $0x8] sm:$0xff]
    %v2739 = vld [vmem:[#allocation20 + $0x10] sm:$0xff]
    %v2740 = vld [vmem:[#allocation20 + $0x18] sm:$0xff]
    %v2741 = vld [vmem:[#allocation20 + $0x20] sm:$0xff]
    %v2742 = vld [vmem:[#allocation20 + $0x28] sm:$0xff]
    %v2743 = vld [vmem:[#allocation20 + $0x30] sm:$0xff]
    %v2744 = vld [vmem:[#allocation22] sm:$0xff]
    %v2745 = vld [vmem:[#allocation22 + $0x8] sm:$0xff]
    %v2746 = vld [vmem:[#allocation22 + $0x10] sm:$0xff]
    %v2747 = vld [vmem:[#allocation22 + $0x18] sm:$0xff]
    %v2748 = vld [vmem:[#allocation22 + $0x20] sm:$0xff]
    %v2749 = vld [vmem:[#allocation22 + $0x28] sm:$0xff]
    %v2750 = vld [vmem:[#allocation22 + $0x30] sm:$0xff]
    %v2751 = vld [vmem:[#allocation22 + $0x38] sm:$0xff]
    %v2752 = vld [vmem:[#allocation22 + $0x40] sm:$0xff]
    %v2753 = vld [vmem:[#allocation22 + $0x48] sm:$0xff]
    %v2754 = vld [vmem:[#allocation22 + $0x50] sm:$0xff]
    %v2755 = vld [vmem:[#allocation22 + $0x58] sm:$0xff]
    %v2756 = vld [vmem:[#allocation22 + $0x60] sm:$0xff]
    %v2757 = vld [vmem:[#allocation22 + $0x68] sm:$0xff]
    %v2759 = vsel %vm1380, %v2733, 0
    %v2762 = vsel %vm1380, %v2734, 0
    %v2765 = vsel %vm1380, %v2735, 0
    %v2768 = vsel %vm1380, %v2736, 0
    %2770 = vmatprep.subr.mxu0 0.0
    %2771 = vmatpush1.msra.mxu0 %v2744
    %2772 = vmatprep.subr.mxu0 0.0
    %2773 = vmatpush1.msra.mxu0 %v2745
    %2774 = vmatprep.subr.mxu0 0.0
    %2775 = vmatpush1.msra.mxu0 %v2746
    %2776 = vmatprep.subr.mxu0 0.0
    %2777 = vmatpush1.msra.mxu0 %v2747
    %2778 = vmatprep.subr.mxu0 0.0
    %2779 = vmatpush1.msra.mxu0 %v2748
    %2780 = vmatprep.subr.mxu0 0.0
    %2781 = vmatpush1.msra.mxu0 %v2749
    %2782 = vmatprep.subr.mxu0 0.0
    %2783 = vmatpush1.msra.mxu0 %v2750
    %2784 = vmatprep.subr.mxu0 0.0
    %2785 = vmatpush1.msra.mxu0 %v2751
    %2786 = vmatprep.subr.mxu0 0.0
    %2787 = vmatpush1.msra.mxu0 %v2752
    %2788 = vmatprep.subr.mxu0 0.0
    %2789 = vmatpush1.msra.mxu0 %v2753
    %2790 = vmatprep.subr.mxu0 0.0
    %2791 = vmatpush1.msra.mxu0 %v2754
    %2792 = vmatprep.subr.mxu0 0.0
    %2793 = vmatpush1.msra.mxu0 %v2755
    %2794 = vmatprep.subr.mxu0 0.0
    %2795 = vmatpush1.msra.mxu0 %v2756
    %2796 = vmatprep.subr.mxu0 0.0
    %2797 = vmatpush1.msra.mxu0 %v2757
    %2798 = vmatprep.subr.mxu0 0.0
    %2799 = vmatpush1.msra.mxu0 0.0
    %2800 = vmatprep.subr.mxu0 0.0
    %2801 = vmatpush1.msra.mxu0 0.0
    %2802 = vmatprep.subr.mxu0 0.0
    %2803 = vmatpush1.msra.mxu0 0.0
    %2804 = vmatprep.subr.mxu0 0.0
    %2805 = vmatpush1.msra.mxu0 0.0
    %2806 = vmatprep.subr.mxu0 0.0
    %2807 = vmatpush1.msra.mxu0 0.0
    %2808 = vmatprep.subr.mxu0 0.0
    %2809 = vmatpush1.msra.mxu0 0.0
    %2810 = vmatprep.subr.mxu0 0.0
    %2811 = vmatpush1.msra.mxu0 0.0
    %2812 = vmatprep.subr.mxu0 0.0
    %2813 = vmatpush1.msra.mxu0 0.0
    %2814 = vmatprep.subr.mxu0 0.0
    %2815 = vmatpush1.msra.mxu0 0.0
    %2816 = vmatprep.subr.mxu0 0.0
    %2817 = vmatpush1.msra.mxu0 0.0
    %2818 = vmatprep.subr.mxu0 0.0
    %2819 = vmatpush1.msra.mxu0 0.0
    %2820 = vmatprep.subr.mxu0 0.0
    %2821 = vmatpush1.msra.mxu0 0.0
    %2822 = vmatprep.subr.mxu0 0.0
    %2823 = vmatpush1.msra.mxu0 0.0
    %2824 = vmatprep.subr.mxu0 0.0
    %2825 = vmatpush1.msra.mxu0 0.0
    %2826 = vmatprep.subr.mxu0 0.0
    %2827 = vmatpush1.msra.mxu0 0.0
    %2828 = vmatprep.subr.mxu0 0.0
    %2829 = vmatpush1.msra.mxu0 0.0
    %2830 = vmatprep.subr.mxu0 0.0
    %2831 = vmatpush1.msra.mxu0 0.0
    %2832 = vmatprep.subr.mxu0 0.0
    %2833 = vmatpush1.msra.mxu0 0.0
    %2834 = vmatprep.mubr.f32.mxu0 0.0
    %2835 = vmatmul.mubr.f32.gmra.mrb[0].mxu0 %v2759
    %v2836 = vpop.f32.mrb[0].mxu0
    %v2837 = vadd.f32 0.0, %v2836
    %v2838 = vpop.f32.mrb[0].mxu0
    %2839 = vmatprep.mubr.f32.mxu0 0.0
    %2840 = vmatmul.mubr.f32.gmra.mrb[0].mxu0 %v2762
    %v2841 = vpop.f32.mrb[0].mxu0
    %v2842 = vadd.f32 0.0, %v2841
    %v2843 = vpop.f32.mrb[0].mxu0
    %2844 = vmatprep.mubr.f32.mxu0 0.0
    %2845 = vmatmul.mubr.f32.gmra.mrb[0].mxu0 %v2765
    %v2846 = vpop.f32.mrb[0].mxu0
    %v2847 = vadd.f32 0.0, %v2846
    %v2848 = vpop.f32.mrb[0].mxu0
    %2849 = vmatprep.mubr.f32.mxu0 0.0
    %2850 = vmatmul.mubr.f32.gmra.mrb[0].mxu0 %v2768
    %v2851 = vpop.f32.mrb[0].mxu0
    %v2852 = vadd.f32 0.0, %v2851
    %v2853 = vpop.f32.mrb[0].mxu0
    %2854 = vdwg.mxu0
    %s2855 = scalar_lea.vmem [#allocation20], 56
    %v2856 = vld [vmem:[%s2855] sm:$0xff]
    %v2857 = vld [vmem:[%s2855 + $0x8] sm:$0xff]
    %v2858 = vld [vmem:[%s2855 + $0x10] sm:$0xff]
    %v2859 = vld [vmem:[%s2855 + $0x18] sm:$0xff]
    %v2860 = vld [vmem:[%s2855 + $0x20] sm:$0xff]
    %v2861 = vld [vmem:[%s2855 + $0x28] sm:$0xff]
    %v2862 = vld [vmem:[%s2855 + $0x30] sm:$0xff]
    %s2863 = scalar_lea.vmem [#allocation22], 112
    %v2864 = vld [vmem:[%s2863] sm:$0xff]
    %v2865 = vld [vmem:[%s2863 + $0x8] sm:$0xff]
    %v2866 = vld [vmem:[%s2863 + $0x10] sm:$0xff]
    %v2867 = vld [vmem:[%s2863 + $0x18] sm:$0xff]
    %v2868 = vld [vmem:[%s2863 + $0x20] sm:$0xff]
    %v2869 = vld [vmem:[%s2863 + $0x28] sm:$0xff]
    %v2870 = vld [vmem:[%s2863 + $0x30] sm:$0xff]
    %v2871 = vld [vmem:[%s2863 + $0x38] sm:$0xff]
    %v2872 = vld [vmem:[%s2863 + $0x40] sm:$0xff]
    %v2873 = vld [vmem:[%s2863 + $0x48] sm:$0xff]
    %v2874 = vld [vmem:[%s2863 + $0x50] sm:$0xff]
    %v2875 = vld [vmem:[%s2863 + $0x58] sm:$0xff]
    %v2876 = vld [vmem:[%s2863 + $0x60] sm:$0xff]
    %v2877 = vld [vmem:[%s2863 + $0x68] sm:$0xff]
    %2878 = vmatprep.subr.mxu0 0.0
    %2879 = vmatpush1.msra.mxu0 %v2864
    %2880 = vmatprep.subr.mxu0 0.0
    %2881 = vmatpush1.msra.mxu0 %v2865
    %2882 = vmatprep.subr.mxu0 0.0
    %2883 = vmatpush1.msra.mxu0 %v2866
    %2884 = vmatprep.subr.mxu0 0.0
    %2885 = vmatpush1.msra.mxu0 %v2867
    %2886 = vmatprep.subr.mxu0 0.0
    %2887 = vmatpush1.msra.mxu0 %v2868
    %2888 = vmatprep.subr.mxu0 0.0
    %2889 = vmatpush1.msra.mxu0 %v2869
    %2890 = vmatprep.subr.mxu0 0.0
    %2891 = vmatpush1.msra.mxu0 %v2870
    %2892 = vmatprep.subr.mxu0 0.0
    %2893 = vmatpush1.msra.mxu0 %v2871
    %2894 = vmatprep.subr.mxu0 0.0
    %2895 = vmatpush1.msra.mxu0 %v2872
    %2896 = vmatprep.subr.mxu0 0.0
    %2897 = vmatpush1.msra.mxu0 %v2873
    %2898 = vmatprep.subr.mxu0 0.0
    %2899 = vmatpush1.msra.mxu0 %v2874
    %2900 = vmatprep.subr.mxu0 0.0
    %2901 = vmatpush1.msra.mxu0 %v2875
    %2902 = vmatprep.subr.mxu0 0.0
    %2903 = vmatpush1.msra.mxu0 %v2876
    %2904 = vmatprep.subr.mxu0 0.0
    %2905 = vmatpush1.msra.mxu0 %v2877
    %2906 = vmatprep.subr.mxu0 0.0
    %2907 = vmatpush1.msra.mxu0 0.0
    %2908 = vmatprep.subr.mxu0 0.0
    %2909 = vmatpush1.msra.mxu0 0.0
    %2910 = vmatprep.subr.mxu0 0.0
    %2911 = vmatpush1.msra.mxu0 0.0
    %2912 = vmatprep.subr.mxu0 0.0
    %2913 = vmatpush1.msra.mxu0 0.0
    %2914 = vmatprep.subr.mxu0 0.0
    %2915 = vmatpush1.msra.mxu0 0.0
    %2916 = vmatprep.subr.mxu0 0.0
    %2917 = vmatpush1.msra.mxu0 0.0
    %2918 = vmatprep.subr.mxu0 0.0
    %2919 = vmatpush1.msra.mxu0 0.0
    %2920 = vmatprep.subr.mxu0 0.0
    %2921 = vmatpush1.msra.mxu0 0.0
    %2922 = vmatprep.subr.mxu0 0.0
    %2923 = vmatpush1.msra.mxu0 0.0
    %2924 = vmatprep.subr.mxu0 0.0
    %2925 = vmatpush1.msra.mxu0 0.0
    %2926 = vmatprep.subr.mxu0 0.0
    %2927 = vmatpush1.msra.mxu0 0.0
    %2928 = vmatprep.subr.mxu0 0.0
    %2929 = vmatpush1.msra.mxu0 0.0
    %2930 = vmatprep.subr.mxu0 0.0
    %2931 = vmatpush1.msra.mxu0 0.0
    %2932 = vmatprep.subr.mxu0 0.0
    %2933 = vmatpush1.msra.mxu0 0.0
    %2934 = vmatprep.subr.mxu0 0.0
    %2935 = vmatpush1.msra.mxu0 0.0
    %2936 = vmatprep.subr.mxu0 0.0
    %2937 = vmatpush1.msra.mxu0 0.0
    %2938 = vmatprep.subr.mxu0 0.0
    %2939 = vmatpush1.msra.mxu0 0.0
    %2940 = vmatprep.subr.mxu0 0.0
    %2941 = vmatpush1.msra.mxu0 0.0
    %2942 = vmatprep.mubr.f32.mxu0 0.0
    %2943 = vmatmul.mubr.f32.gmra.mrb[0].mxu0 %v2759
    %v2944 = vpop.f32.mrb[0].mxu0
    %v2945 = vadd.f32 0.0, %v2944
    %v2946 = vpop.f32.mrb[0].mxu0
    %2947 = vmatprep.mubr.f32.mxu0 0.0
    %2948 = vmatmul.mubr.f32.gmra.mrb[0].mxu0 %v2762
    %v2949 = vpop.f32.mrb[0].mxu0
    %v2950 = vadd.f32 0.0, %v2949
    %v2951 = vpop.f32.mrb[0].mxu0
    %2952 = vmatprep.mubr.f32.mxu0 0.0
    %2953 = vmatmul.mubr.f32.gmra.mrb[0].mxu0 %v2765
    %v2954 = vpop.f32.mrb[0].mxu0
    %v2955 = vadd.f32 0.0, %v2954
    %v2956 = vpop.f32.mrb[0].mxu0
    %2957 = vmatprep.mubr.f32.mxu0 0.0
    %2958 = vmatmul.mubr.f32.gmra.mrb[0].mxu0 %v2768
    %v2959 = vpop.f32.mrb[0].mxu0
    %v2960 = vadd.f32 0.0, %v2959
    %v2961 = vpop.f32.mrb[0].mxu0
    %2962 = vdwg.mxu0
    %vm2963 = vcmask 228352
    %v2965 = vsel %vm2963, %v2856, 0
    %v2968 = vsel %vm2963, %v2857, 0
    %v2971 = vsel %vm2963, %v2858, 0
    %v2974 = vsel %vm2963, %v2859, 0
    %v2977 = vsel %vm2963, %v2860, 0
    %v2980 = vsel %vm2963, %v2861, 0
    %v2983 = vsel %vm2963, %v2862, 0
    %v2986 = vsel %vm258, %v2960, 0
    %2988 = vmatprep.subr.mxu0 0.0
    %2989 = vmatpush1.msra.mxu0 %v2945
    %2990 = vmatprep.subr.mxu0 0.0
    %2991 = vmatpush1.msra.mxu0 %v2950
    %2992 = vmatprep.subr.mxu0 0.0
    %2993 = vmatpush1.msra.mxu0 %v2955
    %2994 = vmatprep.subr.mxu0 0.0
    %2995 = vmatpush1.msra.mxu0 %v2986
    %2996 = vmatprep.subr.mxu0 0.0
    %2997 = vmatpush1.msra.mxu0 0.0
    %2998 = vmatprep.subr.mxu0 0.0
    %2999 = vmatpush1.msra.mxu0 0.0
    %3000 = vmatprep.subr.mxu0 0.0
    %3001 = vmatpush1.msra.mxu0 0.0
    %3002 = vmatprep.subr.mxu0 0.0
    %3003 = vmatpush1.msra.mxu0 0.0
    %3004 = vmatprep.subr.mxu0 0.0
    %3005 = vmatpush1.msra.mxu0 0.0
    %3006 = vmatprep.subr.mxu0 0.0
    %3007 = vmatpush1.msra.mxu0 0.0
    %3008 = vmatprep.subr.mxu0 0.0
    %3009 = vmatpush1.msra.mxu0 0.0
    %3010 = vmatprep.subr.mxu0 0.0
    %3011 = vmatpush1.msra.mxu0 0.0
    %3012 = vmatprep.subr.mxu0 0.0
    %3013 = vmatpush1.msra.mxu0 0.0
    %3014 = vmatprep.subr.mxu0 0.0
    %3015 = vmatpush1.msra.mxu0 0.0
    %3016 = vmatprep.subr.mxu0 0.0
    %3017 = vmatpush1.msra.mxu0 0.0
    %3018 = vmatprep.subr.mxu0 0.0
    %3019 = vmatpush1.msra.mxu0 0.0
    %3020 = vmatprep.subr.mxu0 0.0
    %3021 = vmatpush1.msra.mxu0 0.0
    %3022 = vmatprep.subr.mxu0 0.0
    %3023 = vmatpush1.msra.mxu0 0.0
    %3024 = vmatprep.subr.mxu0 0.0
    %3025 = vmatpush1.msra.mxu0 0.0
    %3026 = vmatprep.subr.mxu0 0.0
    %3027 = vmatpush1.msra.mxu0 0.0
    %3028 = vmatprep.subr.mxu0 0.0
    %3029 = vmatpush1.msra.mxu0 0.0
    %3030 = vmatprep.subr.mxu0 0.0
    %3031 = vmatpush1.msra.mxu0 0.0
    %3032 = vmatprep.subr.mxu0 0.0
    %3033 = vmatpush1.msra.mxu0 0.0
    %3034 = vmatprep.subr.mxu0 0.0
    %3035 = vmatpush1.msra.mxu0 0.0
    %3036 = vmatprep.subr.mxu0 0.0
    %3037 = vmatpush1.msra.mxu0 0.0
    %3038 = vmatprep.subr.mxu0 0.0
    %3039 = vmatpush1.msra.mxu0 0.0
    %3040 = vmatprep.subr.mxu0 0.0
    %3041 = vmatpush1.msra.mxu0 0.0
    %3042 = vmatprep.subr.mxu0 0.0
    %3043 = vmatpush1.msra.mxu0 0.0
    %3044 = vmatprep.subr.mxu0 0.0
    %3045 = vmatpush1.msra.mxu0 0.0
    %3046 = vmatprep.subr.mxu0 0.0
    %3047 = vmatpush1.msra.mxu0 0.0
    %3048 = vmatprep.subr.mxu0 0.0
    %3049 = vmatpush1.msra.mxu0 0.0
    %3050 = vmatprep.subr.mxu0 0.0
    %3051 = vmatpush1.msra.mxu0 0.0
    %3052 = vmatprep.mubr.f32.mxu0 0.0
    %3053 = vmatmul.mubr.f32.gmra.mrb[0].mxu0 %v2965
    %v3054 = vpop.f32.mrb[0].mxu0
    %v3055 = vadd.f32 0.0, %v3054
    %v3056 = vpop.f32.mrb[0].mxu0
    %3057 = vmatprep.mubr.f32.mxu0 0.0
    %3058 = vmatmul.mubr.f32.gmra.mrb[0].mxu0 %v2968
    %v3059 = vpop.f32.mrb[0].mxu0
    %v3060 = vadd.f32 0.0, %v3059
    %v3061 = vpop.f32.mrb[0].mxu0
    %3062 = vmatprep.mubr.f32.mxu0 0.0
    %3063 = vmatmul.mubr.f32.gmra.mrb[0].mxu0 %v2971
    %v3064 = vpop.f32.mrb[0].mxu0
    %v3065 = vadd.f32 0.0, %v3064
    %v3066 = vpop.f32.mrb[0].mxu0
    %3067 = vmatprep.mubr.f32.mxu0 0.0
    %3068 = vmatmul.mubr.f32.gmra.mrb[0].mxu0 %v2974
    %v3069 = vpop.f32.mrb[0].mxu0
    %v3070 = vadd.f32 0.0, %v3069
    %v3071 = vpop.f32.mrb[0].mxu0
    %3072 = vmatprep.mubr.f32.mxu0 0.0
    %3073 = vmatmul.mubr.f32.gmra.mrb[0].mxu0 %v2977
    %v3074 = vpop.f32.mrb[0].mxu0
    %v3075 = vadd.f32 0.0, %v3074
    %v3076 = vpop.f32.mrb[0].mxu0
    %3077 = vmatprep.mubr.f32.mxu0 0.0
    %3078 = vmatmul.mubr.f32.gmra.mrb[0].mxu0 %v2980
    %v3079 = vpop.f32.mrb[0].mxu0
    %v3080 = vadd.f32 0.0, %v3079
    %v3081 = vpop.f32.mrb[0].mxu0
    %3082 = vmatprep.mubr.f32.mxu0 0.0
    %3083 = vmatmul.mubr.f32.gmra.mrb[0].mxu0 %v2983
    %v3084 = vpop.f32.mrb[0].mxu0
    %v3085 = vadd.f32 0.0, %v3084
    %v3086 = vpop.f32.mrb[0].mxu0
    %3087 = vdwg.mxu0
    %v3089 = vsel %vm2963, %v2737, 0
    %v3092 = vsel %vm2963, %v2738, 0
    %v3095 = vsel %vm2963, %v2739, 0
    %v3098 = vsel %vm2963, %v2740, 0
    %v3101 = vsel %vm2963, %v2741, 0
    %v3104 = vsel %vm2963, %v2742, 0
    %v3107 = vsel %vm2963, %v2743, 0
    %v3110 = vsel %vm258, %v2852, 0
    %3112 = vmatprep.subr.mxu0 0.0
    %3113 = vmatpush1.msra.mxu0 %v2837
    %3114 = vmatprep.subr.mxu0 0.0
    %3115 = vmatpush1.msra.mxu0 %v2842
    %3116 = vmatprep.subr.mxu0 0.0
    %3117 = vmatpush1.msra.mxu0 %v2847
    %3118 = vmatprep.subr.mxu0 0.0
    %3119 = vmatpush1.msra.mxu0 %v3110
    %3120 = vmatprep.subr.mxu0 0.0
    %3121 = vmatpush1.msra.mxu0 0.0
    %3122 = vmatprep.subr.mxu0 0.0
    %3123 = vmatpush1.msra.mxu0 0.0
    %3124 = vmatprep.subr.mxu0 0.0
    %3125 = vmatpush1.msra.mxu0 0.0
    %3126 = vmatprep.subr.mxu0 0.0
    %3127 = vmatpush1.msra.mxu0 0.0
    %3128 = vmatprep.subr.mxu0 0.0
    %3129 = vmatpush1.msra.mxu0 0.0
    %3130 = vmatprep.subr.mxu0 0.0
    %3131 = vmatpush1.msra.mxu0 0.0
    %3132 = vmatprep.subr.mxu0 0.0
    %3133 = vmatpush1.msra.mxu0 0.0
    %3134 = vmatprep.subr.mxu0 0.0
    %3135 = vmatpush1.msra.mxu0 0.0
    %3136 = vmatprep.subr.mxu0 0.0
    %3137 = vmatpush1.msra.mxu0 0.0
    %3138 = vmatprep.subr.mxu0 0.0
    %3139 = vmatpush1.msra.mxu0 0.0
    %3140 = vmatprep.subr.mxu0 0.0
    %3141 = vmatpush1.msra.mxu0 0.0
    %3142 = vmatprep.subr.mxu0 0.0
    %3143 = vmatpush1.msra.mxu0 0.0
    %3144 = vmatprep.subr.mxu0 0.0
    %3145 = vmatpush1.msra.mxu0 0.0
    %3146 = vmatprep.subr.mxu0 0.0
    %3147 = vmatpush1.msra.mxu0 0.0
    %3148 = vmatprep.subr.mxu0 0.0
    %3149 = vmatpush1.msra.mxu0 0.0
    %3150 = vmatprep.subr.mxu0 0.0
    %3151 = vmatpush1.msra.mxu0 0.0
    %3152 = vmatprep.subr.mxu0 0.0
    %3153 = vmatpush1.msra.mxu0 0.0
    %3154 = vmatprep.subr.mxu0 0.0
    %3155 = vmatpush1.msra.mxu0 0.0
    %3156 = vmatprep.subr.mxu0 0.0
    %3157 = vmatpush1.msra.mxu0 0.0
    %3158 = vmatprep.subr.mxu0 0.0
    %3159 = vmatpush1.msra.mxu0 0.0
    %3160 = vmatprep.subr.mxu0 0.0
    %3161 = vmatpush1.msra.mxu0 0.0
    %3162 = vmatprep.subr.mxu0 0.0
    %3163 = vmatpush1.msra.mxu0 0.0
    %3164 = vmatprep.subr.mxu0 0.0
    %3165 = vmatpush1.msra.mxu0 0.0
    %3166 = vmatprep.subr.mxu0 0.0
    %3167 = vmatpush1.msra.mxu0 0.0
    %3168 = vmatprep.subr.mxu0 0.0
    %3169 = vmatpush1.msra.mxu0 0.0
    %3170 = vmatprep.subr.mxu0 0.0
    %3171 = vmatpush1.msra.mxu0 0.0
    %3172 = vmatprep.subr.mxu0 0.0
    %3173 = vmatpush1.msra.mxu0 0.0
    %3174 = vmatprep.subr.mxu0 0.0
    %3175 = vmatpush1.msra.mxu0 0.0
    %3176 = vmatprep.mubr.f32.mxu0 0.0
    %3177 = vmatmul.mubr.f32.gmra.mrb[0].mxu0 %v3089
    %v3178 = vpop.f32.mrb[0].mxu0
    %v3179 = vadd.f32 %v3055, %v3178
    %v3180 = vpop.f32.mrb[0].mxu0
    %3181 = vmatprep.mubr.f32.mxu0 0.0
    %3182 = vmatmul.mubr.f32.gmra.mrb[0].mxu0 %v3092
    %v3183 = vpop.f32.mrb[0].mxu0
    %v3184 = vadd.f32 %v3060, %v3183
    %v3185 = vpop.f32.mrb[0].mxu0
    %3186 = vmatprep.mubr.f32.mxu0 0.0
    %3187 = vmatmul.mubr.f32.gmra.mrb[0].mxu0 %v3095
    %v3188 = vpop.f32.mrb[0].mxu0
    %v3189 = vadd.f32 %v3065, %v3188
    %v3190 = vpop.f32.mrb[0].mxu0
    %3191 = vmatprep.mubr.f32.mxu0 0.0
    %3192 = vmatmul.mubr.f32.gmra.mrb[0].mxu0 %v3098
    %v3193 = vpop.f32.mrb[0].mxu0
    %v3194 = vadd.f32 %v3070, %v3193
    %v3195 = vpop.f32.mrb[0].mxu0
    %3196 = vmatprep.mubr.f32.mxu0 0.0
    %3197 = vmatmul.mubr.f32.gmra.mrb[0].mxu0 %v3101
    %v3198 = vpop.f32.mrb[0].mxu0
    %v3199 = vadd.f32 %v3075, %v3198
    %v3200 = vpop.f32.mrb[0].mxu0
    %3201 = vmatprep.mubr.f32.mxu0 0.0
    %3202 = vmatmul.mubr.f32.gmra.mrb[0].mxu0 %v3104
    %v3203 = vpop.f32.mrb[0].mxu0
    %v3204 = vadd.f32 %v3080, %v3203
    %v3205 = vpop.f32.mrb[0].mxu0
    %3206 = vmatprep.mubr.f32.mxu0 0.0
    %3207 = vmatmul.mubr.f32.gmra.mrb[0].mxu0 %v3107
    %v3208 = vpop.f32.mrb[0].mxu0
    %v3209 = vadd.f32 %v3085, %v3208
    %v3210 = vpop.f32.mrb[0].mxu0
    %3211 = vdwg.mxu0
    %s3212 = scalar_lea.vmem [#allocation20], 112
    %v3213 = vld [vmem:[%s3212] sm:$0xff]
    %v3214 = vld [vmem:[%s3212 + $0x8] sm:$0xff]
    %v3215 = vld [vmem:[%s3212 + $0x10] sm:$0xff]
    %v3216 = vld [vmem:[%s3212 + $0x18] sm:$0xff]
    %v3217 = vld [vmem:[%s3212 + $0x20] sm:$0xff]
    %v3218 = vld [vmem:[%s3212 + $0x28] sm:$0xff]
    %v3219 = vld [vmem:[%s3212 + $0x30] sm:$0xff]
    %s3220 = scalar_lea.vmem [#allocation22], 224
    %v3221 = vld [vmem:[%s3220] sm:$0xff]
    %v3222 = vld [vmem:[%s3220 + $0x8] sm:$0xff]
    %v3223 = vld [vmem:[%s3220 + $0x10] sm:$0xff]
    %v3224 = vld [vmem:[%s3220 + $0x18] sm:$0xff]
    %v3225 = vld [vmem:[%s3220 + $0x20] sm:$0xff]
    %v3226 = vld [vmem:[%s3220 + $0x28] sm:$0xff]
    %v3227 = vld [vmem:[%s3220 + $0x30] sm:$0xff]
    %v3228 = vld [vmem:[%s3220 + $0x38] sm:$0xff]
    %v3229 = vld [vmem:[%s3220 + $0x40] sm:$0xff]
    %v3230 = vld [vmem:[%s3220 + $0x48] sm:$0xff]
    %v3231 = vld [vmem:[%s3220 + $0x50] sm:$0xff]
    %v3232 = vld [vmem:[%s3220 + $0x58] sm:$0xff]
    %v3233 = vld [vmem:[%s3220 + $0x60] sm:$0xff]
    %v3234 = vld [vmem:[%s3220 + $0x68] sm:$0xff]
    %3235 = vmatprep.subr.mxu0 0.0
    %3236 = vmatpush1.msra.mxu0 %v3221
    %3237 = vmatprep.subr.mxu0 0.0
    %3238 = vmatpush1.msra.mxu0 %v3222
    %3239 = vmatprep.subr.mxu0 0.0
    %3240 = vmatpush1.msra.mxu0 %v3223
    %3241 = vmatprep.subr.mxu0 0.0
    %3242 = vmatpush1.msra.mxu0 %v3224
    %3243 = vmatprep.subr.mxu0 0.0
    %3244 = vmatpush1.msra.mxu0 %v3225
    %3245 = vmatprep.subr.mxu0 0.0
    %3246 = vmatpush1.msra.mxu0 %v3226
    %3247 = vmatprep.subr.mxu0 0.0
    %3248 = vmatpush1.msra.mxu0 %v3227
    %3249 = vmatprep.subr.mxu0 0.0
    %3250 = vmatpush1.msra.mxu0 %v3228
    %3251 = vmatprep.subr.mxu0 0.0
    %3252 = vmatpush1.msra.mxu0 %v3229
    %3253 = vmatprep.subr.mxu0 0.0
    %3254 = vmatpush1.msra.mxu0 %v3230
    %3255 = vmatprep.subr.mxu0 0.0
    %3256 = vmatpush1.msra.mxu0 %v3231
    %3257 = vmatprep.subr.mxu0 0.0
    %3258 = vmatpush1.msra.mxu0 %v3232
    %3259 = vmatprep.subr.mxu0 0.0
    %3260 = vmatpush1.msra.mxu0 %v3233
    %3261 = vmatprep.subr.mxu0 0.0
    %3262 = vmatpush1.msra.mxu0 %v3234
    %3263 = vmatprep.subr.mxu0 0.0
    %3264 = vmatpush1.msra.mxu0 0.0
    %3265 = vmatprep.subr.mxu0 0.0
    %3266 = vmatpush1.msra.mxu0 0.0
    %3267 = vmatprep.subr.mxu0 0.0
    %3268 = vmatpush1.msra.mxu0 0.0
    %3269 = vmatprep.subr.mxu0 0.0
    %3270 = vmatpush1.msra.mxu0 0.0
    %3271 = vmatprep.subr.mxu0 0.0
    %3272 = vmatpush1.msra.mxu0 0.0
    %3273 = vmatprep.subr.mxu0 0.0
    %3274 = vmatpush1.msra.mxu0 0.0
    %3275 = vmatprep.subr.mxu0 0.0
    %3276 = vmatpush1.msra.mxu0 0.0
    %3277 = vmatprep.subr.mxu0 0.0
    %3278 = vmatpush1.msra.mxu0 0.0
    %3279 = vmatprep.subr.mxu0 0.0
    %3280 = vmatpush1.msra.mxu0 0.0
    %3281 = vmatprep.subr.mxu0 0.0
    %3282 = vmatpush1.msra.mxu0 0.0
    %3283 = vmatprep.subr.mxu0 0.0
    %3284 = vmatpush1.msra.mxu0 0.0
    %3285 = vmatprep.subr.mxu0 0.0
    %3286 = vmatpush1.msra.mxu0 0.0
    %3287 = vmatprep.subr.mxu0 0.0
    %3288 = vmatpush1.msra.mxu0 0.0
    %3289 = vmatprep.subr.mxu0 0.0
    %3290 = vmatpush1.msra.mxu0 0.0
    %3291 = vmatprep.subr.mxu0 0.0
    %3292 = vmatpush1.msra.mxu0 0.0
    %3293 = vmatprep.subr.mxu0 0.0
    %3294 = vmatpush1.msra.mxu0 0.0
    %3295 = vmatprep.subr.mxu0 0.0
    %3296 = vmatpush1.msra.mxu0 0.0
    %3297 = vmatprep.subr.mxu0 0.0
    %3298 = vmatpush1.msra.mxu0 0.0
    %3299 = vmatprep.mubr.f32.mxu0 0.0
    %3300 = vmatmul.mubr.f32.gmra.mrb[0].mxu0 %v2759
    %v3301 = vpop.f32.mrb[0].mxu0
    %v3302 = vadd.f32 0.0, %v3301
    %v3303 = vpop.f32.mrb[0].mxu0
    %3304 = vmatprep.mubr.f32.mxu0 0.0
    %3305 = vmatmul.mubr.f32.gmra.mrb[0].mxu0 %v2762
    %v3306 = vpop.f32.mrb[0].mxu0
    %v3307 = vadd.f32 0.0, %v3306
    %v3308 = vpop.f32.mrb[0].mxu0
    %3309 = vmatprep.mubr.f32.mxu0 0.0
    %3310 = vmatmul.mubr.f32.gmra.mrb[0].mxu0 %v2765
    %v3311 = vpop.f32.mrb[0].mxu0
    %v3312 = vadd.f32 0.0, %v3311
    %v3313 = vpop.f32.mrb[0].mxu0
    %3314 = vmatprep.mubr.f32.mxu0 0.0
    %3315 = vmatmul.mubr.f32.gmra.mrb[0].mxu0 %v2768
    %v3316 = vpop.f32.mrb[0].mxu0
    %v3317 = vadd.f32 0.0, %v3316
    %v3318 = vpop.f32.mrb[0].mxu0
    %3319 = vdwg.mxu0
    %v3321 = vsel %vm2963, %v3213, 0
    %v3324 = vsel %vm2963, %v3214, 0
    %v3327 = vsel %vm2963, %v3215, 0
    %v3330 = vsel %vm2963, %v3216, 0
    %v3333 = vsel %vm2963, %v3217, 0
    %v3336 = vsel %vm2963, %v3218, 0
    %v3339 = vsel %vm2963, %v3219, 0
    %v3342 = vsel %vm258, %v3317, 0
    %3344 = vmatprep.subr.mxu0 0.0
    %3345 = vmatpush1.msra.mxu0 %v3302
    %3346 = vmatprep.subr.mxu0 0.0
    %3347 = vmatpush1.msra.mxu0 %v3307
    %3348 = vmatprep.subr.mxu0 0.0
    %3349 = vmatpush1.msra.mxu0 %v3312
    %3350 = vmatprep.subr.mxu0 0.0
    %3351 = vmatpush1.msra.mxu0 %v3342
    %3352 = vmatprep.subr.mxu0 0.0
    %3353 = vmatpush1.msra.mxu0 0.0
    %3354 = vmatprep.subr.mxu0 0.0
    %3355 = vmatpush1.msra.mxu0 0.0
    %3356 = vmatprep.subr.mxu0 0.0
    %3357 = vmatpush1.msra.mxu0 0.0
    %3358 = vmatprep.subr.mxu0 0.0
    %3359 = vmatpush1.msra.mxu0 0.0
    %3360 = vmatprep.subr.mxu0 0.0
    %3361 = vmatpush1.msra.mxu0 0.0
    %3362 = vmatprep.subr.mxu0 0.0
    %3363 = vmatpush1.msra.mxu0 0.0
    %3364 = vmatprep.subr.mxu0 0.0
    %3365 = vmatpush1.msra.mxu0 0.0
    %3366 = vmatprep.subr.mxu0 0.0
    %3367 = vmatpush1.msra.mxu0 0.0
    %3368 = vmatprep.subr.mxu0 0.0
    %3369 = vmatpush1.msra.mxu0 0.0
    %3370 = vmatprep.subr.mxu0 0.0
    %3371 = vmatpush1.msra.mxu0 0.0
    %3372 = vmatprep.subr.mxu0 0.0
    %3373 = vmatpush1.msra.mxu0 0.0
    %3374 = vmatprep.subr.mxu0 0.0
    %3375 = vmatpush1.msra.mxu0 0.0
    %3376 = vmatprep.subr.mxu0 0.0
    %3377 = vmatpush1.msra.mxu0 0.0
    %3378 = vmatprep.subr.mxu0 0.0
    %3379 = vmatpush1.msra.mxu0 0.0
    %3380 = vmatprep.subr.mxu0 0.0
    %3381 = vmatpush1.msra.mxu0 0.0
    %3382 = vmatprep.subr.mxu0 0.0
    %3383 = vmatpush1.msra.mxu0 0.0
    %3384 = vmatprep.subr.mxu0 0.0
    %3385 = vmatpush1.msra.mxu0 0.0
    %3386 = vmatprep.subr.mxu0 0.0
    %3387 = vmatpush1.msra.mxu0 0.0
    %3388 = vmatprep.subr.mxu0 0.0
    %3389 = vmatpush1.msra.mxu0 0.0
    %3390 = vmatprep.subr.mxu0 0.0
    %3391 = vmatpush1.msra.mxu0 0.0
    %3392 = vmatprep.subr.mxu0 0.0
    %3393 = vmatpush1.msra.mxu0 0.0
    %3394 = vmatprep.subr.mxu0 0.0
    %3395 = vmatpush1.msra.mxu0 0.0
    %3396 = vmatprep.subr.mxu0 0.0
    %3397 = vmatpush1.msra.mxu0 0.0
    %3398 = vmatprep.subr.mxu0 0.0
    %3399 = vmatpush1.msra.mxu0 0.0
    %3400 = vmatprep.subr.mxu0 0.0
    %3401 = vmatpush1.msra.mxu0 0.0
    %3402 = vmatprep.subr.mxu0 0.0
    %3403 = vmatpush1.msra.mxu0 0.0
    %3404 = vmatprep.subr.mxu0 0.0
    %3405 = vmatpush1.msra.mxu0 0.0
    %3406 = vmatprep.subr.mxu0 0.0
    %3407 = vmatpush1.msra.mxu0 0.0
    %3408 = vmatprep.mubr.f32.mxu0 0.0
    %3409 = vmatmul.mubr.f32.gmra.mrb[0].mxu0 %v3321
    %v3410 = vpop.f32.mrb[0].mxu0
    %v3411 = vadd.f32 0.0, %v3410
    %v3412 = vpop.f32.mrb[0].mxu0
    %3413 = vmatprep.mubr.f32.mxu0 0.0
    %3414 = vmatmul.mubr.f32.gmra.mrb[0].mxu0 %v3324
    %v3415 = vpop.f32.mrb[0].mxu0
    %v3416 = vadd.f32 0.0, %v3415
    %v3417 = vpop.f32.mrb[0].mxu0
    %3418 = vmatprep.mubr.f32.mxu0 0.0
    %3419 = vmatmul.mubr.f32.gmra.mrb[0].mxu0 %v3327
    %v3420 = vpop.f32.mrb[0].mxu0
    %v3421 = vadd.f32 0.0, %v3420
    %v3422 = vpop.f32.mrb[0].mxu0
    %3423 = vmatprep.mubr.f32.mxu0 0.0
    %3424 = vmatmul.mubr.f32.gmra.mrb[0].mxu0 %v3330
    %v3425 = vpop.f32.mrb[0].mxu0
    %v3426 = vadd.f32 0.0, %v3425
    %v3427 = vpop.f32.mrb[0].mxu0
    %3428 = vmatprep.mubr.f32.mxu0 0.0
    %3429 = vmatmul.mubr.f32.gmra.mrb[0].mxu0 %v3333
    %v3430 = vpop.f32.mrb[0].mxu0
    %v3431 = vadd.f32 0.0, %v3430
    %v3432 = vpop.f32.mrb[0].mxu0
    %3433 = vmatprep.mubr.f32.mxu0 0.0
    %3434 = vmatmul.mubr.f32.gmra.mrb[0].mxu0 %v3336
    %v3435 = vpop.f32.mrb[0].mxu0
    %v3436 = vadd.f32 0.0, %v3435
    %v3437 = vpop.f32.mrb[0].mxu0
    %3438 = vmatprep.mubr.f32.mxu0 0.0
    %3439 = vmatmul.mubr.f32.gmra.mrb[0].mxu0 %v3339
    %v3440 = vpop.f32.mrb[0].mxu0
    %v3441 = vadd.f32 0.0, %v3440
    %v3442 = vpop.f32.mrb[0].mxu0
    %3443 = vdwg.mxu0
    %v3444 = vadd.f32 %v3179, %v3411
    %v3445 = vadd.f32 %v3184, %v3416
    %v3446 = vadd.f32 %v3189, %v3421
    %v3447 = vadd.f32 %v3194, %v3426
    %v3448 = vadd.f32 %v3199, %v3431
    %v3449 = vadd.f32 %v3204, %v3436
    %v3450 = vadd.f32 %v3209, %v3441
    %v3451 = vld [vmem:[%s22] sm:$0x1]
    %v3453 = vlaneseq
    %v3454 = vshrl.u32 %v3453, 7
    %v3455 = vsub.s32 0, %v3454
    %v3456 = vrot.slane %v3451, %v3455
    %v3458 = vadd.f32 %v3444, %v3456
    %v3459 = vadd.f32 %v3445, %v3456
    %v3460 = vadd.f32 %v3446, %v3456
    %v3461 = vadd.f32 %v3447, %v3456
    %v3462 = vadd.f32 %v3448, %v3456
    %v3463 = vadd.f32 %v3449, %v3456
    %v3464 = vadd.f32 %v3450, %v3456
    %v3465 = vxor.u32 %v3458, 2147483648
    %v3466 = vxor.u32 %v3459, 2147483648
    %v3467 = vxor.u32 %v3460, 2147483648
    %v3468 = vxor.u32 %v3461, 2147483648
    %v3469 = vxor.u32 %v3462, 2147483648
    %v3470 = vxor.u32 %v3463, 2147483648
    %v3471 = vxor.u32 %v3464, 2147483648
    %v3472 = vmul.f32 %v3465, 1.442695
    %v3473 = vpow.pop %v3472
    %v3474 = vmul.f32 %v3466, 1.442695
    %v3475 = vpow.pop %v3474
    %v3476 = vmul.f32 %v3467, 1.442695
    %v3477 = vpow.pop %v3476
    %v3478 = vmul.f32 %v3468, 1.442695
    %v3479 = vpow.pop %v3478
    %v3480 = vmul.f32 %v3469, 1.442695
    %v3481 = vpow.pop %v3480
    %v3482 = vmul.f32 %v3470, 1.442695
    %v3483 = vpow.pop %v3482
    %v3484 = vmul.f32 %v3471, 1.442695
    %v3485 = vpow.pop %v3484
    %v3486 = vadd.f32 %v3473, 1.0
    %v3487 = vadd.f32 %v3475, 1.0
    %v3488 = vadd.f32 %v3477, 1.0
    %v3489 = vadd.f32 %v3479, 1.0
    %v3490 = vadd.f32 %v3481, 1.0
    %v3491 = vadd.f32 %v3483, 1.0
    %v3492 = vadd.f32 %v3485, 1.0
    %v3493 = vrcp.pop %v3486
    %v3494 = vmul.f32 1.0, %v3493
    %v3495 = vrcp.pop %v3487
    %v3496 = vmul.f32 1.0, %v3495
    %v3497 = vrcp.pop %v3488
    %v3498 = vmul.f32 1.0, %v3497
    %v3499 = vrcp.pop %v3489
    %v3500 = vmul.f32 1.0, %v3499
    %v3501 = vrcp.pop %v3490
    %v3502 = vmul.f32 1.0, %v3501
    %v3503 = vrcp.pop %v3491
    %v3504 = vmul.f32 1.0, %v3503
    %v3505 = vrcp.pop %v3492
    %v3506 = vmul.f32 1.0, %v3505
    %3507 = vst.msk [vmem:[#allocation23] sm:$0xff] %vm2963, %v3494
    %3508 = vst.msk [vmem:[#allocation23 + $0x8] sm:$0xff] %vm2963, %v3496
    %3509 = vst.msk [vmem:[#allocation23 + $0x10] sm:$0xff] %vm2963, %v3498
    %3510 = vst.msk [vmem:[#allocation23 + $0x18] sm:$0xff] %vm2963, %v3500
    %3511 = vst.msk [vmem:[#allocation23 + $0x20] sm:$0xff] %vm2963, %v3502
    %3512 = vst.msk [vmem:[#allocation23 + $0x28] sm:$0xff] %vm2963, %v3504
    %3513 = vst.msk [vmem:[#allocation23 + $0x30] sm:$0xff] %vm2963, %v3506
    // Predicated region
    $region146: #{_lambda_.1} parent=1 // pred_check
      _
    $region147: #{_lambda_.1} parent=1 // pred_check_branch
      %3515 = sbr.rel (0) target = $region149
    $region148: #{_lambda_.1} parent=1 // pred_region
      %s3517 = ssub.s32 896, 896
      %3518 = vsyncadd [#allocation4], %s3517
      %s3519 = sshll.u32 [#allocation23], 4
      %s3520 = int_to_ptr.vmem [resolvable:$true] %s3519
      %3525 = dma.vmem_to_hbm [thread:$0]  %s3520, 896, %s23, [#allocation4], 128, 128, 8
    $region149: #{_lambda_.1} parent=1 // pred_fallthru
      _
    // Predicated region
    $region150: #{_lambda_.1} parent=1 // pred_check
      _
    $region151: #{_lambda_.1} parent=1 // pred_check_branch
      %3527 = sbr.rel (0) target = $region153
    $region152: #{_lambda_.1} parent=1 // pred_region
      %3528 = dma.done [#allocation4], 896
    $region153: #{_lambda_.1} parent=1 // pred_fallthru
      _
    %3529 = vsyncpa [#allocation3], 1
    %3530 = vsyncpa [#allocation6], 1
    %3531 = vsyncpa [#allocation9], 1
    %3532 = vsyncpa [#allocation12], 1
    %3533 = vsyncpa [#allocation15], 1
    %3534 = vsyncpa [#allocation18], 1
    %3535 = vsyncpa [#allocation21], 1
    %3536 = vsyncpa [#allocation4], 1

</llo_original>
